<compile_context>
chip_gen: v7x
topology: tpu7x:2x2x1
jax: 0.10.0
libtpu: 0.0.40
codegen_flags: <defaults>
</compile_context>

<pallas_src>
import functools

import jax
import jax.numpy as jnp
from jax.experimental import pallas as pl
from jax.experimental.pallas import tpu as pltpu


# ----------------------------------------------------------------------------
# Fused Pallas kernel: the entire R_EFEM forward for one batch image
# ----------------------------------------------------------------------------
def _r_efem_kernel(x_ref, w1_ref, b1_ref, dw5_ref, db5_ref, dw3_ref, db3_ref,
                   w2_ref, b2_ref, o_ref, pad_ref, *, H, W, C, PT, PL):
    WC = W * C
    x = x_ref[0]                                   # (H, W*C) f32, lane-dense

    # ---- zero ONLY the halo strips of the shared depthwise scratch ---------
    # The interior is fully rewritten by every pass, the halo never is, so the
    # per-iteration cost is O(halo).  Re-zeroed every grid step => safe under
    # megacore "parallel" scheduling on v7x (no program_id==0 gating).
    zrow = jnp.zeros((2, WC + 4 * C), jnp.float32)
    zcol = jnp.zeros((H, 2 * C), jnp.float32)
    pad_ref[PT - 2:PT, PL - 2 * C:PL + WC + 2 * C] = zrow
    pad_ref[PT + H:PT + H + 2, PL - 2 * C:PL + WC + 2 * C] = zrow
    pad_ref[PT:PT + H, PL - 2 * C:PL] = zcol
    pad_ref[PT:PT + H, PL + WC:PL + WC + 2 * C] = zcol

    # ---- EFEM.conv1 (1x1 conv == per-pixel channel matmul).  In the (H, W*C)
    # layout it is one lane-dense MXU matmul against block-diagonal
    # kron(I_W, W1^T); operands bf16, accumulation f32.
    h = jnp.dot(x.astype(jnp.bfloat16), w1_ref[...],
                preferred_element_type=jnp.float32) + b1_ref[...]

    def dw_pass(img, w_ref_, b_ref_, kh, kw):
        # Depthwise conv, stride 1, zero 'same' padding, cross-correlation
        # (== nn.Conv2d), over all C channels, in (H, W*C) layout:
        #   * H-shifts  = row offsets into the zero-haloed scratch,
        #   * W-shifts  = C-lane offsets; ONE misaligned ref read per row
        #     offset, re-sliced per column tap (kh relayouts, not kh*kw).
        # Interior store is tile-aligned (PT % 8 == 0, PL % 128 == 0).
        rh, rw = (kh - 1) // 2, (kw - 1) // 2
        pad_ref[PT:PT + H, PL:PL + WC] = img
        acc = jnp.zeros((H, WC), jnp.float32)
        for i in range(kh):
            r0 = PT - rh + i
            row = pad_ref[r0:r0 + H, PL - rw * C:PL + WC + rw * C]
            for j in range(kw):
                t = i * kw + j
                acc = acc + row[:, j * C:j * C + WC] * w_ref_[t:t + 1, :]
        return acc + b_ref_[...]

    # ---- InceptionDWG: four depthwise branches fused into TWO passes -------
    #   pass 1 (5x5): conv2_1 (3x3), conv2_2 (5x3), conv2_3 (3x5), conv2_4[0]
    #                 (3x3), each zero-padded to a shared 5x5 footprint.
    #   pass 2 (3x3): identity (delta) taps for channels [0, 3C/4) and
    #                 conv2_4[1] for the last quarter.
    # TODO(synk): when C/4 is a multiple of 128 lanes, run pass 2 only on the
    # last-quarter channels instead of the fused identity-tap trick.
    d = dw_pass(h, dw5_ref, db5_ref, 5, 5)
    g = dw_pass(d, dw3_ref, db3_ref, 3, 3)

    # ---- exact GELU: 0.5*x*(1+erf(x/sqrt(2))); erf via the A&S 7.1.26
    # polynomial (|err| < 1.5e-7).  Divide goes to the EUP via approx recip.
    # TODO(synk): switch to lax.erf if/when Mosaic guarantees an erf lowering.
    z = g * 0.7071067811865476
    az = jnp.abs(z)
    t = pl.reciprocal(1.0 + 0.3275911 * az, approx=True)
    poly = t * (0.254829592 + t * (-0.284496736 + t * (1.421413741
               + t * (-1.453152027 + t * 1.061405429))))
    erf_az = 1.0 - poly * jnp.exp(-az * az)
    erf_z = jnp.where(z >= 0.0, erf_az, -erf_az)
    g = 0.5 * g * (1.0 + erf_z)

    # ---- EFEM.conv1x1_2 (block-diagonal bf16 MXU matmul) + residual skip ----
    out = jnp.dot(g.astype(jnp.bfloat16), w2_ref[...],
                  preferred_element_type=jnp.float32) + b2_ref[...]
    o_ref[0] = out + x                             # lane-dense (H, W*C) store


# ----------------------------------------------------------------------------
# Wrapper: pack weights into the fused, lane-dense layouts and launch
# ----------------------------------------------------------------------------
def pack_kernel_params(p, dim, W):
    C = dim
    d = C // 4
    WC = W * C
    # merged 5x5 depthwise pass: branches 1-3 and conv2_4[0], zero-padded
    k5 = jnp.zeros((C, 5, 5), jnp.float32)
    k5 = k5.at[0 * d:1 * d, 1:4, 1:4].set(p["c1_w"])     # 3x3 centered
    k5 = k5.at[1 * d:2 * d, :, 1:4].set(p["c2_w"])       # 5x3
    k5 = k5.at[2 * d:3 * d, 1:4, :].set(p["c3_w"])       # 3x5
    k5 = k5.at[3 * d:4 * d, 1:4, 1:4].set(p["c4a_w"])    # conv2_4[0] 3x3
    b5 = jnp.concatenate([p["c1_b"], p["c2_b"], p["c3_b"], p["c4a_b"]])
    # second 3x3 pass: identity taps for channels [0, 3d), conv2_4[1] for rest
    k3 = jnp.zeros((C, 3, 3), jnp.float32)
    k3 = k3.at[0:3 * d, 1, 1].set(1.0)
    k3 = k3.at[3 * d:, :, :].set(p["c4b_w"])
    b3 = jnp.concatenate([jnp.zeros((3 * d,), jnp.float32), p["c4b_b"]])

    def tile_w(m):                       # (taps, C) -> (taps, W*C)
        return jnp.tile(m, (1, W))

    def tile_b(v):                       # (C,) -> (1, W*C)
        return jnp.tile(v, (W,)).reshape(1, WC)

    eye_w = jnp.eye(W, dtype=jnp.float32)
    # 1x1 convs as block-diagonal kron(I_W, W^T) matmuls, packed in bf16.
    w1_bd = jnp.kron(eye_w, p["w1"].T).astype(jnp.bfloat16)   # (W*C, W*C)
    w2_bd = jnp.kron(eye_w, p["w2"].T).astype(jnp.bfloat16)
    return dict(
        w1=w1_bd, b1=tile_b(p["b1"]),
        dw5=tile_w(k5.reshape(C, 25).T), db5=tile_b(b5),      # (25, W*C)
        dw3=tile_w(k3.reshape(C, 9).T), db3=tile_b(b3),       # (9,  W*C)
        w2=w2_bd, b2=tile_b(p["b2"]),
    )


def r_efem_forward(params, x_nchw):
    B, C, H, W = x_nchw.shape
    WC = W * C
    kp = pack_kernel_params(params, C, W)
    # NCHW -> NHWC -> (B, H, W*C): channels land densely on the lane axis.
    # TODO(synk): drop these transposes if the surrounding model can stay NHWC.
    x2d = jnp.transpose(x_nchw, (0, 2, 3, 1)).astype(jnp.float32).reshape(B, H, WC)

    PT = 8                                   # sublane-aligned top halo (>= 2)
    PL = -(-2 * C // 128) * 128              # lane-aligned left halo (>= 2*C)
    pad_rows = -(-(PT + H + 2) // 8) * 8
    pad_cols = -(-(PL + WC + 2 * C) // 128) * 128

    # Explicit VMEM budget from the actual footprint (double-buffered in/out
    # blocks + weights + padded scratch + live full-image f32 intermediates).
    img = H * WC * 4
    wbytes = 2 * (WC * WC * 2) + (25 + 9 + 4) * WC * 4
    scratch = pad_rows * pad_cols * 4
    vmem_limit = int(min(64 * 1024 * 1024,
                         max(4 * 1024 * 1024,
                             2 * (4 * img + 2 * wbytes + scratch + 10 * img))))

    kern = functools.partial(_r_efem_kernel, H=H, W=W, C=C, PT=PT, PL=PL)
    full = lambda b: (0, 0)
    out = pl.pallas_call(
        kern,
        # One image per grid step; with "parallel" semantics v7x's second TC
        # picks up the other image.  TODO(synk): for large images add a
        # row-band grid axis (2-row halo) to stay within v7x's 64 MiB VMEM.
        grid=(B,),
        in_specs=[
            pl.BlockSpec((1, H, WC), lambda b: (b, 0, 0)),
            pl.BlockSpec((WC, WC), full),
            pl.BlockSpec((1, WC), full),
            pl.BlockSpec((25, WC), full),
            pl.BlockSpec((1, WC), full),
            pl.BlockSpec((9, WC), full),
            pl.BlockSpec((1, WC), full),
            pl.BlockSpec((WC, WC), full),
            pl.BlockSpec((1, WC), full),
        ],
        out_specs=pl.BlockSpec((1, H, WC), lambda b: (b, 0, 0)),
        out_shape=jax.ShapeDtypeStruct((B, H, WC), jnp.float32),
        scratch_shapes=[pltpu.VMEM((pad_rows, pad_cols), jnp.float32)],
        compiler_params=pltpu.CompilerParams(
            dimension_semantics=("parallel",),
            vmem_limit_bytes=vmem_limit),
    )(x2d, kp["w1"], kp["b1"], kp["dw5"], kp["db5"], kp["dw3"], kp["db3"],
      kp["w2"], kp["b2"])
    return jnp.transpose(out.reshape(B, H, W, C), (0, 3, 1, 2))   # back to NCHW


# ----------------------------------------------------------------------------
# Pure-JAX reference (mirrors the PyTorch module, NCHW) for a correctness check
# ----------------------------------------------------------------------------
_HI = jax.lax.Precision.HIGHEST


def _conv1x1_ref(x, w, b):
    return jnp.einsum("oi,bihw->bohw", w, x, precision=_HI) + b[None, :, None, None]


def _dw_ref(x, w, b, ph, pw):
    out = jax.lax.conv_general_dilated(
        x, w[:, None, :, :], (1, 1), ((ph, ph), (pw, pw)),
        dimension_numbers=("NCHW", "OIHW", "NCHW"),
        feature_group_count=x.shape[1], precision=_HI)
    return out + b[None, :, None, None]


def r_efem_reference(p, x):
    dim = x.shape[1]
    d = dim // 4
    h = _conv1x1_ref(x, p["w1"], p["b1"])
    o1 = _dw_ref(h[:, 0 * d:1 * d], p["c1_w"], p["c1_b"], 1, 1)
    o2 = _dw_ref(h[:, 1 * d:2 * d], p["c2_w"], p["c2_b"], 2, 1)
    o3 = _dw_ref(h[:, 2 * d:3 * d], p["c3_w"], p["c3_b"], 1, 2)
    o4 = _dw_ref(_dw_ref(h[:, 3 * d:], p["c4a_w"], p["c4a_b"], 1, 1),
                 p["c4b_w"], p["c4b_b"], 1, 1)
    g = jax.nn.gelu(jnp.concatenate([o1, o2, o3, o4], axis=1), approximate=False)
    return _conv1x1_ref(g, p["w2"], p["b2"]) + x


# ----------------------------------------------------------------------------
# Deterministic synthetic parameters (PyTorch-native layouts)
# ----------------------------------------------------------------------------
def init_params(key, dim):
    d = dim // 4
    ks = jax.random.split(key, 14)

    def rnd(k, shape, scale=0.1):
        return scale * jax.random.normal(k, shape, jnp.float32)

    return dict(
        # EFEM.conv1 / conv1x1_2 : Conv2d 1x1 weights stored as (C_out, C_in)
        w1=rnd(ks[0], (dim, dim)), b1=rnd(ks[1], (dim,)),
        w2=rnd(ks[2], (dim, dim)), b2=rnd(ks[3], (dim,)),
        # InceptionDWG depthwise weights, torch layout (C_out, 1, kh, kw) -> (C_out, kh, kw)
        c1_w=rnd(ks[4], (d, 3, 3)), c1_b=rnd(ks[5], (d,)),
        c2_w=rnd(ks[6], (d, 5, 3)), c2_b=rnd(ks[7], (d,)),
        c3_w=rnd(ks[8], (d, 3, 5)), c3_b=rnd(ks[9], (d,)),
        c4a_w=rnd(ks[10], (d, 3, 3)), c4a_b=rnd(ks[11], (d,)),
        c4b_w=rnd(ks[12], (d, 3, 3)), c4b_b=rnd(ks[13], (d,)),
    )


if __name__ == "__main__":
    key = jax.random.PRNGKey(0)
    kparam, kx = jax.random.split(key)
    B, dim, H, W = 2, 16, 16, 16
    params = init_params(kparam, dim)
    x = jax.random.normal(kx, (B, dim, H, W), jnp.float32)

    out = jax.jit(r_efem_forward)(params, x)
    out = jax.block_until_ready(out)
    assert out.shape == (B, dim, H, W)
    assert bool(jnp.all(jnp.isfinite(out)))

    ref = r_efem_reference(params, x)
    err = float(jnp.max(jnp.abs(out - ref)))
    assert err < 5e-3, f"max abs error vs reference: {err}"

    print("KERNEL_OK")
</pallas_src>

<mosaic_0001>
module attributes {stable_mosaic.version = 11 : i64} {
  func.func @_r_efem_kernel(%arg0: i32, %arg1: memref<1x16x256xf32, #tpu.memory_space<vmem>>, %arg2: memref<256x256xbf16, #tpu.memory_space<vmem>>, %arg3: memref<1x256xf32, #tpu.memory_space<vmem>>, %arg4: memref<25x256xf32, #tpu.memory_space<vmem>>, %arg5: memref<1x256xf32, #tpu.memory_space<vmem>>, %arg6: memref<9x256xf32, #tpu.memory_space<vmem>>, %arg7: memref<1x256xf32, #tpu.memory_space<vmem>>, %arg8: memref<256x256xbf16, #tpu.memory_space<vmem>>, %arg9: memref<1x256xf32, #tpu.memory_space<vmem>>, %arg10: memref<1x16x256xf32, #tpu.memory_space<vmem>>, %arg11: memref<32x512xf32, #tpu.memory_space<vmem>>) attributes {dimension_semantics = [#tpu.dimension_semantics<parallel>], iteration_bounds = array<i64: 2>, scalar_prefetch = 0 : i64, scratch_operands = 1 : i64, tpu.core_type = #tpu.core_type<tc>, window_params = [{transform_indices = @transform_0, window_bounds = array<i64: 1, 16, 256>}, {pipeline_mode = #tpu.pipeline_mode<synchronous>, transform_indices = @transform_1, window_bounds = array<i64: 256, 256>}, {pipeline_mode = #tpu.pipeline_mode<synchronous>, transform_indices = @transform_2, window_bounds = array<i64: 1, 256>}, {pipeline_mode = #tpu.pipeline_mode<synchronous>, transform_indices = @transform_3, window_bounds = array<i64: 25, 256>}, {pipeline_mode = #tpu.pipeline_mode<synchronous>, transform_indices = @transform_4, window_bounds = array<i64: 1, 256>}, {pipeline_mode = #tpu.pipeline_mode<synchronous>, transform_indices = @transform_5, window_bounds = array<i64: 9, 256>}, {pipeline_mode = #tpu.pipeline_mode<synchronous>, transform_indices = @transform_6, window_bounds = array<i64: 1, 256>}, {pipeline_mode = #tpu.pipeline_mode<synchronous>, transform_indices = @transform_7, window_bounds = array<i64: 256, 256>}, {pipeline_mode = #tpu.pipeline_mode<synchronous>, transform_indices = @transform_8, window_bounds = array<i64: 1, 256>}, {transform_indices = @transform_9, window_bounds = array<i64: 1, 16, 256>}]} {
    %c0 = arith.constant 0 : index
    %c0_0 = arith.constant 0 : index
    %c0_1 = arith.constant 0 : index
    %0 = vector.load %arg1[%c0, %c0_0, %c0_1] : memref<1x16x256xf32, #tpu.memory_space<vmem>>, vector<1x16x256xf32>
    %1 = vector.shape_cast %0 : vector<1x16x256xf32> to vector<16x256xf32>
    %cst = arith.constant 0.000000e+00 : f32
    %2 = vector.broadcast %cst : f32 to vector<2x320xf32>
    %cst_2 = arith.constant 0.000000e+00 : f32
    %3 = vector.broadcast %cst_2 : f32 to vector<16x32xf32>
    %c6 = arith.constant 6 : index
    %c96 = arith.constant 96 : index
    %4 = vector.load %arg11[%c6, %c96] : memref<32x512xf32, #tpu.memory_space<vmem>>, vector<2x320xf32>
    tpu.vector_store %arg11[%c6, %c96], %2 {strides = array<i32>} : memref<32x512xf32, #tpu.memory_space<vmem>>, vector<2x320xf32>,
    %c24 = arith.constant 24 : index
    %c96_3 = arith.constant 96 : index
    %5 = vector.load %arg11[%c24, %c96_3] : memref<32x512xf32, #tpu.memory_space<vmem>>, vector<2x320xf32>
    tpu.vector_store %arg11[%c24, %c96_3], %2 {strides = array<i32>} : memref<32x512xf32, #tpu.memory_space<vmem>>, vector<2x320xf32>,
    %c8 = arith.constant 8 : index
    %c96_4 = arith.constant 96 : index
    %6 = vector.load %arg11[%c8, %c96_4] : memref<32x512xf32, #tpu.memory_space<vmem>>, vector<16x32xf32>
    tpu.vector_store %arg11[%c8, %c96_4], %3 {strides = array<i32>} : memref<32x512xf32, #tpu.memory_space<vmem>>, vector<16x32xf32>,
    %c8_5 = arith.constant 8 : index
    %c384 = arith.constant 384 : index
    %7 = vector.load %arg11[%c8_5, %c384] : memref<32x512xf32, #tpu.memory_space<vmem>>, vector<16x32xf32>
    tpu.vector_store %arg11[%c8_5, %c384], %3 {strides = array<i32>} : memref<32x512xf32, #tpu.memory_space<vmem>>, vector<16x32xf32>,
    %8 = arith.truncf %1 : vector<16x256xf32> to vector<16x256xbf16>
    %c0_6 = arith.constant 0 : index
    %c0_7 = arith.constant 0 : index
    %9 = vector.load %arg2[%c0_6, %c0_7] : memref<256x256xbf16, #tpu.memory_space<vmem>>, vector<256x256xbf16>
    %cst_8 = arith.constant dense<0.000000e+00> : vector<16x256xf32>
    %10 = tpu.matmul %8, %9, %cst_8 {dimension_numbers = #tpu.dot_dimension_numbers<[1], [0], [0], [1], [0, 0, 1, 1], [], []>} : vector<16x256xbf16>, vector<256x256xbf16>, vector<16x256xf32> -> vector<16x256xf32>
    %c0_9 = arith.constant 0 : index
    %c0_10 = arith.constant 0 : index
    %11 = vector.load %arg3[%c0_9, %c0_10] : memref<1x256xf32, #tpu.memory_space<vmem>>, vector<1x256xf32>
    %12 = vector.broadcast %11 : vector<1x256xf32> to vector<16x256xf32>
    %13 = arith.addf %10, %12 : vector<16x256xf32>
    %c8_11 = arith.constant 8 : index
    %c128 = arith.constant 128 : index
    %14 = vector.load %arg11[%c8_11, %c128] : memref<32x512xf32, #tpu.memory_space<vmem>>, vector<16x256xf32>
    tpu.vector_store %arg11[%c8_11, %c128], %13 {strides = array<i32>} : memref<32x512xf32, #tpu.memory_space<vmem>>, vector<16x256xf32>,
    %cst_12 = arith.constant 0.000000e+00 : f32
    %15 = vector.broadcast %cst_12 : f32 to vector<16x256xf32>
    %c6_13 = arith.constant 6 : index
    %c96_14 = arith.constant 96 : index
    %16 = vector.load %arg11[%c6_13, %c96_14] : memref<32x512xf32, #tpu.memory_space<vmem>>, vector<16x320xf32>
    %17 = vector.extract_strided_slice %16 {offsets = [0, 0], sizes = [16, 256], strides = [1, 1]} : vector<16x320xf32> to vector<16x256xf32>
    %c0_15 = arith.constant 0 : index
    %c0_16 = arith.constant 0 : index
    %18 = vector.load %arg4[%c0_15, %c0_16] : memref<25x256xf32, #tpu.memory_space<vmem>>, vector<1x256xf32>
    %19 = vector.broadcast %18 : vector<1x256xf32> to vector<16x256xf32>
    %20 = arith.mulf %17, %19 : vector<16x256xf32>
    %21 = arith.addf %15, %20 : vector<16x256xf32>
    %22 = vector.extract_strided_slice %16 {offsets = [0, 16], sizes = [16, 256], strides = [1, 1]} : vector<16x320xf32> to vector<16x256xf32>
    %c1 = arith.constant 1 : index
    %c0_17 = arith.constant 0 : index
    %23 = vector.load %arg4[%c1, %c0_17] : memref<25x256xf32, #tpu.memory_space<vmem>>, vector<1x256xf32>
    %24 = vector.broadcast %23 : vector<1x256xf32> to vector<16x256xf32>
    %25 = arith.mulf %22, %24 : vector<16x256xf32>
    %26 = arith.addf %21, %25 : vector<16x256xf32>
    %27 = vector.extract_strided_slice %16 {offsets = [0, 32], sizes = [16, 256], strides = [1, 1]} : vector<16x320xf32> to vector<16x256xf32>
    %c2 = arith.constant 2 : index
    %c0_18 = arith.constant 0 : index
    %28 = vector.load %arg4[%c2, %c0_18] : memref<25x256xf32, #tpu.memory_space<vmem>>, vector<1x256xf32>
    %29 = vector.broadcast %28 : vector<1x256xf32> to vector<16x256xf32>
    %30 = arith.mulf %27, %29 : vector<16x256xf32>
    %31 = arith.addf %26, %30 : vector<16x256xf32>
    %32 = vector.extract_strided_slice %16 {offsets = [0, 48], sizes = [16, 256], strides = [1, 1]} : vector<16x320xf32> to vector<16x256xf32>
    %c3 = arith.constant 3 : index
    %c0_19 = arith.constant 0 : index
    %33 = vector.load %arg4[%c3, %c0_19] : memref<25x256xf32, #tpu.memory_space<vmem>>, vector<1x256xf32>
    %34 = vector.broadcast %33 : vector<1x256xf32> to vector<16x256xf32>
    %35 = arith.mulf %32, %34 : vector<16x256xf32>
    %36 = arith.addf %31, %35 : vector<16x256xf32>
    %37 = vector.extract_strided_slice %16 {offsets = [0, 64], sizes = [16, 256], strides = [1, 1]} : vector<16x320xf32> to vector<16x256xf32>
    %c4 = arith.constant 4 : index
    %c0_20 = arith.constant 0 : index
    %38 = vector.load %arg4[%c4, %c0_20] : memref<25x256xf32, #tpu.memory_space<vmem>>, vector<1x256xf32>
    %39 = vector.broadcast %38 : vector<1x256xf32> to vector<16x256xf32>
    %40 = arith.mulf %37, %39 : vector<16x256xf32>
    %41 = arith.addf %36, %40 : vector<16x256xf32>
    %c7 = arith.constant 7 : index
    %c96_21 = arith.constant 96 : index
    %42 = vector.load %arg11[%c7, %c96_21] : memref<32x512xf32, #tpu.memory_space<vmem>>, vector<16x320xf32>
    %43 = vector.extract_strided_slice %42 {offsets = [0, 0], sizes = [16, 256], strides = [1, 1]} : vector<16x320xf32> to vector<16x256xf32>
    %c5 = arith.constant 5 : index
    %c0_22 = arith.constant 0 : index
    %44 = vector.load %arg4[%c5, %c0_22] : memref<25x256xf32, #tpu.memory_space<vmem>>, vector<1x256xf32>
    %45 = vector.broadcast %44 : vector<1x256xf32> to vector<16x256xf32>
    %46 = arith.mulf %43, %45 : vector<16x256xf32>
    %47 = arith.addf %41, %46 : vector<16x256xf32>
    %48 = vector.extract_strided_slice %42 {offsets = [0, 16], sizes = [16, 256], strides = [1, 1]} : vector<16x320xf32> to vector<16x256xf32>
    %c6_23 = arith.constant 6 : index
    %c0_24 = arith.constant 0 : index
    %49 = vector.load %arg4[%c6_23, %c0_24] : memref<25x256xf32, #tpu.memory_space<vmem>>, vector<1x256xf32>
    %50 = vector.broadcast %49 : vector<1x256xf32> to vector<16x256xf32>
    %51 = arith.mulf %48, %50 : vector<16x256xf32>
    %52 = arith.addf %47, %51 : vector<16x256xf32>
    %53 = vector.extract_strided_slice %42 {offsets = [0, 32], sizes = [16, 256], strides = [1, 1]} : vector<16x320xf32> to vector<16x256xf32>
    %c7_25 = arith.constant 7 : index
    %c0_26 = arith.constant 0 : index
    %54 = vector.load %arg4[%c7_25, %c0_26] : memref<25x256xf32, #tpu.memory_space<vmem>>, vector<1x256xf32>
    %55 = vector.broadcast %54 : vector<1x256xf32> to vector<16x256xf32>
    %56 = arith.mulf %53, %55 : vector<16x256xf32>
    %57 = arith.addf %52, %56 : vector<16x256xf32>
    %58 = vector.extract_strided_slice %42 {offsets = [0, 48], sizes = [16, 256], strides = [1, 1]} : vector<16x320xf32> to vector<16x256xf32>
    %c8_27 = arith.constant 8 : index
    %c0_28 = arith.constant 0 : index
    %59 = vector.load %arg4[%c8_27, %c0_28] : memref<25x256xf32, #tpu.memory_space<vmem>>, vector<1x256xf32>
    %60 = vector.broadcast %59 : vector<1x256xf32> to vector<16x256xf32>
    %61 = arith.mulf %58, %60 : vector<16x256xf32>
    %62 = arith.addf %57, %61 : vector<16x256xf32>
    %63 = vector.extract_strided_slice %42 {offsets = [0, 64], sizes = [16, 256], strides = [1, 1]} : vector<16x320xf32> to vector<16x256xf32>
    %c9 = arith.constant 9 : index
    %c0_29 = arith.constant 0 : index
    %64 = vector.load %arg4[%c9, %c0_29] : memref<25x256xf32, #tpu.memory_space<vmem>>, vector<1x256xf32>
    %65 = vector.broadcast %64 : vector<1x256xf32> to vector<16x256xf32>
    %66 = arith.mulf %63, %65 : vector<16x256xf32>
    %67 = arith.addf %62, %66 : vector<16x256xf32>
    %c8_30 = arith.constant 8 : index
    %c96_31 = arith.constant 96 : index
    %68 = vector.load %arg11[%c8_30, %c96_31] : memref<32x512xf32, #tpu.memory_space<vmem>>, vector<16x320xf32>
    %69 = vector.extract_strided_slice %68 {offsets = [0, 0], sizes = [16, 256], strides = [1, 1]} : vector<16x320xf32> to vector<16x256xf32>
    %c10 = arith.constant 10 : index
    %c0_32 = arith.constant 0 : index
    %70 = vector.load %arg4[%c10, %c0_32] : memref<25x256xf32, #tpu.memory_space<vmem>>, vector<1x256xf32>
    %71 = vector.broadcast %70 : vector<1x256xf32> to vector<16x256xf32>
    %72 = arith.mulf %69, %71 : vector<16x256xf32>
    %73 = arith.addf %67, %72 : vector<16x256xf32>
    %74 = vector.extract_strided_slice %68 {offsets = [0, 16], sizes = [16, 256], strides = [1, 1]} : vector<16x320xf32> to vector<16x256xf32>
    %c11 = arith.constant 11 : index
    %c0_33 = arith.constant 0 : index
    %75 = vector.load %arg4[%c11, %c0_33] : memref<25x256xf32, #tpu.memory_space<vmem>>, vector<1x256xf32>
    %76 = vector.broadcast %75 : vector<1x256xf32> to vector<16x256xf32>
    %77 = arith.mulf %74, %76 : vector<16x256xf32>
    %78 = arith.addf %73, %77 : vector<16x256xf32>
    %79 = vector.extract_strided_slice %68 {offsets = [0, 32], sizes = [16, 256], strides = [1, 1]} : vector<16x320xf32> to vector<16x256xf32>
    %c12 = arith.constant 12 : index
    %c0_34 = arith.constant 0 : index
    %80 = vector.load %arg4[%c12, %c0_34] : memref<25x256xf32, #tpu.memory_space<vmem>>, vector<1x256xf32>
    %81 = vector.broadcast %80 : vector<1x256xf32> to vector<16x256xf32>
    %82 = arith.mulf %79, %81 : vector<16x256xf32>
    %83 = arith.addf %78, %82 : vector<16x256xf32>
    %84 = vector.extract_strided_slice %68 {offsets = [0, 48], sizes = [16, 256], strides = [1, 1]} : vector<16x320xf32> to vector<16x256xf32>
    %c13 = arith.constant 13 : index
    %c0_35 = arith.constant 0 : index
    %85 = vector.load %arg4[%c13, %c0_35] : memref<25x256xf32, #tpu.memory_space<vmem>>, vector<1x256xf32>
    %86 = vector.broadcast %85 : vector<1x256xf32> to vector<16x256xf32>
    %87 = arith.mulf %84, %86 : vector<16x256xf32>
    %88 = arith.addf %83, %87 : vector<16x256xf32>
    %89 = vector.extract_strided_slice %68 {offsets = [0, 64], sizes = [16, 256], strides = [1, 1]} : vector<16x320xf32> to vector<16x256xf32>
    %c14 = arith.constant 14 : index
    %c0_36 = arith.constant 0 : index
    %90 = vector.load %arg4[%c14, %c0_36] : memref<25x256xf32, #tpu.memory_space<vmem>>, vector<1x256xf32>
    %91 = vector.broadcast %90 : vector<1x256xf32> to vector<16x256xf32>
    %92 = arith.mulf %89, %91 : vector<16x256xf32>
    %93 = arith.addf %88, %92 : vector<16x256xf32>
    %c9_37 = arith.constant 9 : index
    %c96_38 = arith.constant 96 : index
    %94 = vector.load %arg11[%c9_37, %c96_38] : memref<32x512xf32, #tpu.memory_space<vmem>>, vector<16x320xf32>
    %95 = vector.extract_strided_slice %94 {offsets = [0, 0], sizes = [16, 256], strides = [1, 1]} : vector<16x320xf32> to vector<16x256xf32>
    %c15 = arith.constant 15 : index
    %c0_39 = arith.constant 0 : index
    %96 = vector.load %arg4[%c15, %c0_39] : memref<25x256xf32, #tpu.memory_space<vmem>>, vector<1x256xf32>
    %97 = vector.broadcast %96 : vector<1x256xf32> to vector<16x256xf32>
    %98 = arith.mulf %95, %97 : vector<16x256xf32>
    %99 = arith.addf %93, %98 : vector<16x256xf32>
    %100 = vector.extract_strided_slice %94 {offsets = [0, 16], sizes = [16, 256], strides = [1, 1]} : vector<16x320xf32> to vector<16x256xf32>
    %c16 = arith.constant 16 : index
    %c0_40 = arith.constant 0 : index
    %101 = vector.load %arg4[%c16, %c0_40] : memref<25x256xf32, #tpu.memory_space<vmem>>, vector<1x256xf32>
    %102 = vector.broadcast %101 : vector<1x256xf32> to vector<16x256xf32>
    %103 = arith.mulf %100, %102 : vector<16x256xf32>
    %104 = arith.addf %99, %103 : vector<16x256xf32>
    %105 = vector.extract_strided_slice %94 {offsets = [0, 32], sizes = [16, 256], strides = [1, 1]} : vector<16x320xf32> to vector<16x256xf32>
    %c17 = arith.constant 17 : index
    %c0_41 = arith.constant 0 : index
    %106 = vector.load %arg4[%c17, %c0_41] : memref<25x256xf32, #tpu.memory_space<vmem>>, vector<1x256xf32>
    %107 = vector.broadcast %106 : vector<1x256xf32> to vector<16x256xf32>
    %108 = arith.mulf %105, %107 : vector<16x256xf32>
    %109 = arith.addf %104, %108 : vector<16x256xf32>
    %110 = vector.extract_strided_slice %94 {offsets = [0, 48], sizes = [16, 256], strides = [1, 1]} : vector<16x320xf32> to vector<16x256xf32>
    %c18 = arith.constant 18 : index
    %c0_42 = arith.constant 0 : index
    %111 = vector.load %arg4[%c18, %c0_42] : memref<25x256xf32, #tpu.memory_space<vmem>>, vector<1x256xf32>
    %112 = vector.broadcast %111 : vector<1x256xf32> to vector<16x256xf32>
    %113 = arith.mulf %110, %112 : vector<16x256xf32>
    %114 = arith.addf %109, %113 : vector<16x256xf32>
    %115 = vector.extract_strided_slice %94 {offsets = [0, 64], sizes = [16, 256], strides = [1, 1]} : vector<16x320xf32> to vector<16x256xf32>
    %c19 = arith.constant 19 : index
    %c0_43 = arith.constant 0 : index
    %116 = vector.load %arg4[%c19, %c0_43] : memref<25x256xf32, #tpu.memory_space<vmem>>, vector<1x256xf32>
    %117 = vector.broadcast %116 : vector<1x256xf32> to vector<16x256xf32>
    %118 = arith.mulf %115, %117 : vector<16x256xf32>
    %119 = arith.addf %114, %118 : vector<16x256xf32>
    %c10_44 = arith.constant 10 : index
    %c96_45 = arith.constant 96 : index
    %120 = vector.load %arg11[%c10_44, %c96_45] : memref<32x512xf32, #tpu.memory_space<vmem>>, vector<16x320xf32>
    %121 = vector.extract_strided_slice %120 {offsets = [0, 0], sizes = [16, 256], strides = [1, 1]} : vector<16x320xf32> to vector<16x256xf32>
    %c20 = arith.constant 20 : index
    %c0_46 = arith.constant 0 : index
    %122 = vector.load %arg4[%c20, %c0_46] : memref<25x256xf32, #tpu.memory_space<vmem>>, vector<1x256xf32>
    %123 = vector.broadcast %122 : vector<1x256xf32> to vector<16x256xf32>
    %124 = arith.mulf %121, %123 : vector<16x256xf32>
    %125 = arith.addf %119, %124 : vector<16x256xf32>
    %126 = vector.extract_strided_slice %120 {offsets = [0, 16], sizes = [16, 256], strides = [1, 1]} : vector<16x320xf32> to vector<16x256xf32>
    %c21 = arith.constant 21 : index
    %c0_47 = arith.constant 0 : index
    %127 = vector.load %arg4[%c21, %c0_47] : memref<25x256xf32, #tpu.memory_space<vmem>>, vector<1x256xf32>
    %128 = vector.broadcast %127 : vector<1x256xf32> to vector<16x256xf32>
    %129 = arith.mulf %126, %128 : vector<16x256xf32>
    %130 = arith.addf %125, %129 : vector<16x256xf32>
    %131 = vector.extract_strided_slice %120 {offsets = [0, 32], sizes = [16, 256], strides = [1, 1]} : vector<16x320xf32> to vector<16x256xf32>
    %c22 = arith.constant 22 : index
    %c0_48 = arith.constant 0 : index
    %132 = vector.load %arg4[%c22, %c0_48] : memref<25x256xf32, #tpu.memory_space<vmem>>, vector<1x256xf32>
    %133 = vector.broadcast %132 : vector<1x256xf32> to vector<16x256xf32>
    %134 = arith.mulf %131, %133 : vector<16x256xf32>
    %135 = arith.addf %130, %134 : vector<16x256xf32>
    %136 = vector.extract_strided_slice %120 {offsets = [0, 48], sizes = [16, 256], strides = [1, 1]} : vector<16x320xf32> to vector<16x256xf32>
    %c23 = arith.constant 23 : index
    %c0_49 = arith.constant 0 : index
    %137 = vector.load %arg4[%c23, %c0_49] : memref<25x256xf32, #tpu.memory_space<vmem>>, vector<1x256xf32>
    %138 = vector.broadcast %137 : vector<1x256xf32> to vector<16x256xf32>
    %139 = arith.mulf %136, %138 : vector<16x256xf32>
    %140 = arith.addf %135, %139 : vector<16x256xf32>
    %141 = vector.extract_strided_slice %120 {offsets = [0, 64], sizes = [16, 256], strides = [1, 1]} : vector<16x320xf32> to vector<16x256xf32>
    %c24_50 = arith.constant 24 : index
    %c0_51 = arith.constant 0 : index
    %142 = vector.load %arg4[%c24_50, %c0_51] : memref<25x256xf32, #tpu.memory_space<vmem>>, vector<1x256xf32>
    %143 = vector.broadcast %142 : vector<1x256xf32> to vector<16x256xf32>
    %144 = arith.mulf %141, %143 : vector<16x256xf32>
    %145 = arith.addf %140, %144 : vector<16x256xf32>
    %c0_52 = arith.constant 0 : index
    %c0_53 = arith.constant 0 : index
    %146 = vector.load %arg5[%c0_52, %c0_53] : memref<1x256xf32, #tpu.memory_space<vmem>>, vector<1x256xf32>
    %147 = vector.broadcast %146 : vector<1x256xf32> to vector<16x256xf32>
    %148 = arith.addf %145, %147 : vector<16x256xf32>
    %c8_54 = arith.constant 8 : index
    %c128_55 = arith.constant 128 : index
    %149 = vector.load %arg11[%c8_54, %c128_55] : memref<32x512xf32, #tpu.memory_space<vmem>>, vector<16x256xf32>
    tpu.vector_store %arg11[%c8_54, %c128_55], %148 {strides = array<i32>} : memref<32x512xf32, #tpu.memory_space<vmem>>, vector<16x256xf32>,
    %cst_56 = arith.constant 0.000000e+00 : f32
    %150 = vector.broadcast %cst_56 : f32 to vector<16x256xf32>
    %c7_57 = arith.constant 7 : index
    %c112 = arith.constant 112 : index
    %151 = vector.load %arg11[%c7_57, %c112] : memref<32x512xf32, #tpu.memory_space<vmem>>, vector<16x288xf32>
    %152 = vector.extract_strided_slice %151 {offsets = [0, 0], sizes = [16, 256], strides = [1, 1]} : vector<16x288xf32> to vector<16x256xf32>
    %c0_58 = arith.constant 0 : index
    %c0_59 = arith.constant 0 : index
    %153 = vector.load %arg6[%c0_58, %c0_59] : memref<9x256xf32, #tpu.memory_space<vmem>>, vector<1x256xf32>
    %154 = vector.broadcast %153 : vector<1x256xf32> to vector<16x256xf32>
    %155 = arith.mulf %152, %154 : vector<16x256xf32>
    %156 = arith.addf %150, %155 : vector<16x256xf32>
    %157 = vector.extract_strided_slice %151 {offsets = [0, 16], sizes = [16, 256], strides = [1, 1]} : vector<16x288xf32> to vector<16x256xf32>
    %c1_60 = arith.constant 1 : index
    %c0_61 = arith.constant 0 : index
    %158 = vector.load %arg6[%c1_60, %c0_61] : memref<9x256xf32, #tpu.memory_space<vmem>>, vector<1x256xf32>
    %159 = vector.broadcast %158 : vector<1x256xf32> to vector<16x256xf32>
    %160 = arith.mulf %157, %159 : vector<16x256xf32>
    %161 = arith.addf %156, %160 : vector<16x256xf32>
    %162 = vector.extract_strided_slice %151 {offsets = [0, 32], sizes = [16, 256], strides = [1, 1]} : vector<16x288xf32> to vector<16x256xf32>
    %c2_62 = arith.constant 2 : index
    %c0_63 = arith.constant 0 : index
    %163 = vector.load %arg6[%c2_62, %c0_63] : memref<9x256xf32, #tpu.memory_space<vmem>>, vector<1x256xf32>
    %164 = vector.broadcast %163 : vector<1x256xf32> to vector<16x256xf32>
    %165 = arith.mulf %162, %164 : vector<16x256xf32>
    %166 = arith.addf %161, %165 : vector<16x256xf32>
    %c8_64 = arith.constant 8 : index
    %c112_65 = arith.constant 112 : index
    %167 = vector.load %arg11[%c8_64, %c112_65] : memref<32x512xf32, #tpu.memory_space<vmem>>, vector<16x288xf32>
    %168 = vector.extract_strided_slice %167 {offsets = [0, 0], sizes = [16, 256], strides = [1, 1]} : vector<16x288xf32> to vector<16x256xf32>
    %c3_66 = arith.constant 3 : index
    %c0_67 = arith.constant 0 : index
    %169 = vector.load %arg6[%c3_66, %c0_67] : memref<9x256xf32, #tpu.memory_space<vmem>>, vector<1x256xf32>
    %170 = vector.broadcast %169 : vector<1x256xf32> to vector<16x256xf32>
    %171 = arith.mulf %168, %170 : vector<16x256xf32>
    %172 = arith.addf %166, %171 : vector<16x256xf32>
    %173 = vector.extract_strided_slice %167 {offsets = [0, 16], sizes = [16, 256], strides = [1, 1]} : vector<16x288xf32> to vector<16x256xf32>
    %c4_68 = arith.constant 4 : index
    %c0_69 = arith.constant 0 : index
    %174 = vector.load %arg6[%c4_68, %c0_69] : memref<9x256xf32, #tpu.memory_space<vmem>>, vector<1x256xf32>
    %175 = vector.broadcast %174 : vector<1x256xf32> to vector<16x256xf32>
    %176 = arith.mulf %173, %175 : vector<16x256xf32>
    %177 = arith.addf %172, %176 : vector<16x256xf32>
    %178 = vector.extract_strided_slice %167 {offsets = [0, 32], sizes = [16, 256], strides = [1, 1]} : vector<16x288xf32> to vector<16x256xf32>
    %c5_70 = arith.constant 5 : index
    %c0_71 = arith.constant 0 : index
    %179 = vector.load %arg6[%c5_70, %c0_71] : memref<9x256xf32, #tpu.memory_space<vmem>>, vector<1x256xf32>
    %180 = vector.broadcast %179 : vector<1x256xf32> to vector<16x256xf32>
    %181 = arith.mulf %178, %180 : vector<16x256xf32>
    %182 = arith.addf %177, %181 : vector<16x256xf32>
    %c9_72 = arith.constant 9 : index
    %c112_73 = arith.constant 112 : index
    %183 = vector.load %arg11[%c9_72, %c112_73] : memref<32x512xf32, #tpu.memory_space<vmem>>, vector<16x288xf32>
    %184 = vector.extract_strided_slice %183 {offsets = [0, 0], sizes = [16, 256], strides = [1, 1]} : vector<16x288xf32> to vector<16x256xf32>
    %c6_74 = arith.constant 6 : index
    %c0_75 = arith.constant 0 : index
    %185 = vector.load %arg6[%c6_74, %c0_75] : memref<9x256xf32, #tpu.memory_space<vmem>>, vector<1x256xf32>
    %186 = vector.broadcast %185 : vector<1x256xf32> to vector<16x256xf32>
    %187 = arith.mulf %184, %186 : vector<16x256xf32>
    %188 = arith.addf %182, %187 : vector<16x256xf32>
    %189 = vector.extract_strided_slice %183 {offsets = [0, 16], sizes = [16, 256], strides = [1, 1]} : vector<16x288xf32> to vector<16x256xf32>
    %c7_76 = arith.constant 7 : index
    %c0_77 = arith.constant 0 : index
    %190 = vector.load %arg6[%c7_76, %c0_77] : memref<9x256xf32, #tpu.memory_space<vmem>>, vector<1x256xf32>
    %191 = vector.broadcast %190 : vector<1x256xf32> to vector<16x256xf32>
    %192 = arith.mulf %189, %191 : vector<16x256xf32>
    %193 = arith.addf %188, %192 : vector<16x256xf32>
    %194 = vector.extract_strided_slice %183 {offsets = [0, 32], sizes = [16, 256], strides = [1, 1]} : vector<16x288xf32> to vector<16x256xf32>
    %c8_78 = arith.constant 8 : index
    %c0_79 = arith.constant 0 : index
    %195 = vector.load %arg6[%c8_78, %c0_79] : memref<9x256xf32, #tpu.memory_space<vmem>>, vector<1x256xf32>
    %196 = vector.broadcast %195 : vector<1x256xf32> to vector<16x256xf32>
    %197 = arith.mulf %194, %196 : vector<16x256xf32>
    %198 = arith.addf %193, %197 : vector<16x256xf32>
    %c0_80 = arith.constant 0 : index
    %c0_81 = arith.constant 0 : index
    %199 = vector.load %arg7[%c0_80, %c0_81] : memref<1x256xf32, #tpu.memory_space<vmem>>, vector<1x256xf32>
    %200 = vector.broadcast %199 : vector<1x256xf32> to vector<16x256xf32>
    %201 = arith.addf %198, %200 : vector<16x256xf32>
    %cst_82 = arith.constant 0.707106769 : f32
    %202 = vector.broadcast %cst_82 : f32 to vector<16x256xf32>
    %203 = arith.mulf %201, %202 : vector<16x256xf32>
    %204 = math.absf %203 : vector<16x256xf32>
    %cst_83 = arith.constant 0.327591091 : f32
    %205 = vector.broadcast %cst_83 : f32 to vector<16x256xf32>
    %206 = arith.mulf %205, %204 : vector<16x256xf32>
    %cst_84 = arith.constant 1.000000e+00 : f32
    %207 = vector.broadcast %cst_84 : f32 to vector<16x256xf32>
    %208 = arith.addf %207, %206 : vector<16x256xf32>
    %209 = tpu.reciprocal %208 {approx = true} : vector<16x256xf32> -> vector<16x256xf32>
    %cst_85 = arith.constant 1.06140542 : f32
    %210 = vector.broadcast %cst_85 : f32 to vector<16x256xf32>
    %211 = arith.mulf %209, %210 : vector<16x256xf32>
    %cst_86 = arith.constant -1.45315206 : f32
    %212 = vector.broadcast %cst_86 : f32 to vector<16x256xf32>
    %213 = arith.addf %212, %211 : vector<16x256xf32>
    %214 = arith.mulf %209, %213 : vector<16x256xf32>
    %cst_87 = arith.constant 1.42141378 : f32
    %215 = vector.broadcast %cst_87 : f32 to vector<16x256xf32>
    %216 = arith.addf %215, %214 : vector<16x256xf32>
    %217 = arith.mulf %209, %216 : vector<16x256xf32>
    %cst_88 = arith.constant -0.284496725 : f32
    %218 = vector.broadcast %cst_88 : f32 to vector<16x256xf32>
    %219 = arith.addf %218, %217 : vector<16x256xf32>
    %220 = arith.mulf %209, %219 : vector<16x256xf32>
    %cst_89 = arith.constant 0.254829586 : f32
    %221 = vector.broadcast %cst_89 : f32 to vector<16x256xf32>
    %222 = arith.addf %221, %220 : vector<16x256xf32>
    %223 = arith.mulf %209, %222 : vector<16x256xf32>
    %cst_90 = arith.constant 0.000000e+00 : f32
    %224 = vector.broadcast %cst_90 : f32 to vector<16x256xf32>
    %225 = arith.subf %224, %204 : vector<16x256xf32>
    %226 = arith.mulf %225, %204 : vector<16x256xf32>
    %227 = math.exp %226 : vector<16x256xf32>
    %228 = arith.mulf %223, %227 : vector<16x256xf32>
    %cst_91 = arith.constant 1.000000e+00 : f32
    %229 = vector.broadcast %cst_91 : f32 to vector<16x256xf32>
    %230 = arith.subf %229, %228 : vector<16x256xf32>
    %cst_92 = arith.constant 0.000000e+00 : f32
    %231 = vector.broadcast %cst_92 : f32 to vector<16x256xf32>
    %232 = arith.cmpf oge, %203, %231 : vector<16x256xf32>
    %cst_93 = arith.constant 0.000000e+00 : f32
    %233 = vector.broadcast %cst_93 : f32 to vector<16x256xf32>
    %234 = arith.subf %233, %230 : vector<16x256xf32>
    %235 = arith.select %232, %230, %234 : vector<16x256xi1>, vector<16x256xf32>
    %cst_94 = arith.constant 5.000000e-01 : f32
    %236 = vector.broadcast %cst_94 : f32 to vector<16x256xf32>
    %237 = arith.mulf %236, %201 : vector<16x256xf32>
    %cst_95 = arith.constant 1.000000e+00 : f32
    %238 = vector.broadcast %cst_95 : f32 to vector<16x256xf32>
    %239 = arith.addf %238, %235 : vector<16x256xf32>
    %240 = arith.mulf %237, %239 : vector<16x256xf32>
    %241 = arith.truncf %240 : vector<16x256xf32> to vector<16x256xbf16>
    %c0_96 = arith.constant 0 : index
    %c0_97 = arith.constant 0 : index
    %242 = vector.load %arg8[%c0_96, %c0_97] : memref<256x256xbf16, #tpu.memory_space<vmem>>, vector<256x256xbf16>
    %cst_98 = arith.constant dense<0.000000e+00> : vector<16x256xf32>
    %243 = tpu.matmul %241, %242, %cst_98 {dimension_numbers = #tpu.dot_dimension_numbers<[1], [0], [0], [1], [0, 0, 1, 1], [], []>} : vector<16x256xbf16>, vector<256x256xbf16>, vector<16x256xf32> -> vector<16x256xf32>
    %c0_99 = arith.constant 0 : index
    %c0_100 = arith.constant 0 : index
    %244 = vector.load %arg9[%c0_99, %c0_100] : memref<1x256xf32, #tpu.memory_space<vmem>>, vector<1x256xf32>
    %245 = vector.broadcast %244 : vector<1x256xf32> to vector<16x256xf32>
    %246 = arith.addf %243, %245 : vector<16x256xf32>
    %247 = arith.addf %246, %1 : vector<16x256xf32>
    %c0_101 = arith.constant 0 : index
    %c0_102 = arith.constant 0 : index
    %c0_103 = arith.constant 0 : index
    %248 = vector.load %arg10[%c0_101, %c0_102, %c0_103] : memref<1x16x256xf32, #tpu.memory_space<vmem>>, vector<1x16x256xf32>
    %249 = vector.shape_cast %248 : vector<1x16x256xf32> to vector<16x256xf32>
    %250 = vector.shape_cast %247 : vector<16x256xf32> to vector<1x16x256xf32>
    tpu.vector_store %arg10[%c0_101, %c0_102, %c0_103], %250 {strides = array<i32>} : memref<1x16x256xf32, #tpu.memory_space<vmem>>, vector<1x16x256xf32>,
    return
  }
  func.func @transform_0(%arg0: i32) -> (i32, i32, i32) {
    %c0_i32 = arith.constant 0 : i32
    %c0_i32_0 = arith.constant 0 : i32
    %c0_i32_1 = arith.constant 0 : i32
    return %arg0, %c0_i32, %c0_i32_0 : i32, i32, i32
  }
  func.func @transform_1(%arg0: i32) -> (i32, i32) {
    %c0_i32 = arith.constant 0 : i32
    %c0_i32_0 = arith.constant 0 : i32
    %c0_i32_1 = arith.constant 0 : i32
    return %c0_i32, %c0_i32_0 : i32, i32
  }
  func.func @transform_2(%arg0: i32) -> (i32, i32) {
    %c0_i32 = arith.constant 0 : i32
    %c0_i32_0 = arith.constant 0 : i32
    %c0_i32_1 = arith.constant 0 : i32
    return %c0_i32, %c0_i32_0 : i32, i32
  }
  func.func @transform_3(%arg0: i32) -> (i32, i32) {
    %c0_i32 = arith.constant 0 : i32
    %c0_i32_0 = arith.constant 0 : i32
    %c0_i32_1 = arith.constant 0 : i32
    return %c0_i32, %c0_i32_0 : i32, i32
  }
  func.func @transform_4(%arg0: i32) -> (i32, i32) {
    %c0_i32 = arith.constant 0 : i32
    %c0_i32_0 = arith.constant 0 : i32
    %c0_i32_1 = arith.constant 0 : i32
    return %c0_i32, %c0_i32_0 : i32, i32
  }
  func.func @transform_5(%arg0: i32) -> (i32, i32) {
    %c0_i32 = arith.constant 0 : i32
    %c0_i32_0 = arith.constant 0 : i32
    %c0_i32_1 = arith.constant 0 : i32
    return %c0_i32, %c0_i32_0 : i32, i32
  }
  func.func @transform_6(%arg0: i32) -> (i32, i32) {
    %c0_i32 = arith.constant 0 : i32
    %c0_i32_0 = arith.constant 0 : i32
    %c0_i32_1 = arith.constant 0 : i32
    return %c0_i32, %c0_i32_0 : i32, i32
  }
  func.func @transform_7(%arg0: i32) -> (i32, i32) {
    %c0_i32 = arith.constant 0 : i32
    %c0_i32_0 = arith.constant 0 : i32
    %c0_i32_1 = arith.constant 0 : i32
    return %c0_i32, %c0_i32_0 : i32, i32
  }
  func.func @transform_8(%arg0: i32) -> (i32, i32) {
    %c0_i32 = arith.constant 0 : i32
    %c0_i32_0 = arith.constant 0 : i32
    %c0_i32_1 = arith.constant 0 : i32
    return %c0_i32, %c0_i32_0 : i32, i32
  }
  func.func @transform_9(%arg0: i32) -> (i32, i32, i32) {
    %c0_i32 = arith.constant 0 : i32
    %c0_i32_0 = arith.constant 0 : i32
    %c0_i32_1 = arith.constant 0 : i32
    return %arg0, %c0_i32, %c0_i32_0 : i32, i32, i32
  }
}

</mosaic_0001>

<llo_original>
// kernel: tile.39
$region0: #{tile.39}
  %s0 = inlined_call_operand.vmem [shape: f32[25,16,16], index: 0, kind: input, shape index: {}]
  %s1 = inlined_call_operand.vmem [shape: f32[25,256], index: 1, kind: output, shape index: {}]
  %v2 = vld [vmem:[%s0] ss:$8 sm:$0xf]
  %v3 = vld [vmem:[%s0] ss:$8 sm:$0xf0]
  %vm4 = vcmask 1047556
  %v5 = vsel %vm4, %v3, %v2
  %vm6 = vcmask 130048
  %7 = vst.msk [vmem:[%s1] ss:$8 sm:$0x3] %vm6, %v5
  %s8 = scalar_lea.vmem %s1, 4294967281
  %9 = vst.msk [vmem:[%s8] ss:$8 sm:$0xc] %vm6, %v5
  %s10 = scalar_lea.vmem %s1, 4294967266
  %11 = vst.msk [vmem:[%s10] ss:$8 sm:$0x30] %vm6, %v5
  %s12 = scalar_lea.vmem %s1, 4294967251
  %13 = vst.msk [vmem:[%s12] ss:$8 sm:$0xc0] %vm6, %v5
  %s14 = scalar_lea.vmem %s0, 64
  %v15 = vld [vmem:[%s14] ss:$8 sm:$0xf]
  %s16 = scalar_lea.vmem %s0, 64
  %v17 = vld [vmem:[%s16] ss:$8 sm:$0xf0]
  %vm18 = vcmask 1047556
  %v19 = vsel %vm18, %v17, %v15
  %vm20 = vcmask 130048
  %s21 = scalar_lea.vmem %s1, 4
  %22 = vst.msk [vmem:[%s21] ss:$8 sm:$0x3] %vm20, %v19
  %s23 = scalar_lea.vmem %s1, 4294967285
  %24 = vst.msk [vmem:[%s23] ss:$8 sm:$0xc] %vm20, %v19
  %s25 = scalar_lea.vmem %s1, 4294967270
  %26 = vst.msk [vmem:[%s25] ss:$8 sm:$0x30] %vm20, %v19
  %s27 = scalar_lea.vmem %s1, 4294967255
  %28 = vst.msk [vmem:[%s27] ss:$8 sm:$0xc0] %vm20, %v19
  %s29 = scalar_lea.vmem %s0, 128
  %v30 = vld [vmem:[%s29] ss:$8 sm:$0xf]
  %s31 = scalar_lea.vmem %s0, 128
  %v32 = vld [vmem:[%s31] ss:$8 sm:$0xf0]
  %vm33 = vcmask 1047556
  %v34 = vsel %vm33, %v32, %v30
  %vm35 = vcmask 130048
  %s36 = scalar_lea.vmem %s1, 16
  %37 = vst.msk [vmem:[%s36] ss:$8 sm:$0x3] %vm35, %v34
  %s38 = scalar_lea.vmem %s1, 1
  %39 = vst.msk [vmem:[%s38] ss:$8 sm:$0xc] %vm35, %v34
  %s40 = scalar_lea.vmem %s1, 4294967282
  %41 = vst.msk [vmem:[%s40] ss:$8 sm:$0x30] %vm35, %v34
  %s42 = scalar_lea.vmem %s1, 4294967267
  %43 = vst.msk [vmem:[%s42] ss:$8 sm:$0xc0] %vm35, %v34
  %s44 = scalar_lea.vmem %s0, 192
  %v45 = vld [vmem:[%s44] ss:$8 sm:$0xf]
  %s46 = scalar_lea.vmem %s0, 192
  %v47 = vld [vmem:[%s46] ss:$8 sm:$0xf0]
  %vm48 = vcmask 1047556
  %v49 = vsel %vm48, %v47, %v45
  %vm50 = vcmask 130048
  %s51 = scalar_lea.vmem %s1, 20
  %52 = vst.msk [vmem:[%s51] ss:$8 sm:$0x3] %vm50, %v49
  %s53 = scalar_lea.vmem %s1, 5
  %54 = vst.msk [vmem:[%s53] ss:$8 sm:$0xc] %vm50, %v49
  %s55 = scalar_lea.vmem %s1, 4294967286
  %56 = vst.msk [vmem:[%s55] ss:$8 sm:$0x30] %vm50, %v49
  %s57 = scalar_lea.vmem %s1, 4294967271
  %58 = vst.msk [vmem:[%s57] ss:$8 sm:$0xc0] %vm50, %v49
  %s59 = scalar_lea.vmem %s0, 256
  %v60 = vld [vmem:[%s59] ss:$8 sm:$0xf]
  %s61 = scalar_lea.vmem %s0, 256
  %v62 = vld [vmem:[%s61] ss:$8 sm:$0xf0]
  %vm63 = vcmask 1047556
  %v64 = vsel %vm63, %v62, %v60
  %vm65 = vcmask 130048
  %s66 = scalar_lea.vmem %s1, 32
  %67 = vst.msk [vmem:[%s66] ss:$8 sm:$0x3] %vm65, %v64
  %s68 = scalar_lea.vmem %s1, 17
  %69 = vst.msk [vmem:[%s68] ss:$8 sm:$0xc] %vm65, %v64
  %s70 = scalar_lea.vmem %s1, 2
  %71 = vst.msk [vmem:[%s70] ss:$8 sm:$0x30] %vm65, %v64
  %s72 = scalar_lea.vmem %s1, 4294967283
  %73 = vst.msk [vmem:[%s72] ss:$8 sm:$0xc0] %vm65, %v64
  %s74 = scalar_lea.vmem %s0, 320
  %v75 = vld [vmem:[%s74] ss:$8 sm:$0xf]
  %s76 = scalar_lea.vmem %s0, 320
  %v77 = vld [vmem:[%s76] ss:$8 sm:$0xf0]
  %vm78 = vcmask 1047556
  %v79 = vsel %vm78, %v77, %v75
  %vm80 = vcmask 130048
  %s81 = scalar_lea.vmem %s1, 36
  %82 = vst.msk [vmem:[%s81] ss:$8 sm:$0x3] %vm80, %v79
  %s83 = scalar_lea.vmem %s1, 21
  %84 = vst.msk [vmem:[%s83] ss:$8 sm:$0xc] %vm80, %v79
  %s85 = scalar_lea.vmem %s1, 6
  %86 = vst.msk [vmem:[%s85] ss:$8 sm:$0x30] %vm80, %v79
  %s87 = scalar_lea.vmem %s1, 4294967287
  %88 = vst.msk [vmem:[%s87] ss:$8 sm:$0xc0] %vm80, %v79
  %s89 = scalar_lea.vmem %s0, 384
  %s90 = smov 3
  %v91 = vld [vmem:[%s89] ss:$8 sm:%s90]
  %vm92 = vcmask 130048
  %s93 = scalar_lea.vmem %s1, 48
  %94 = vst.msk [vmem:[%s93] ss:$8 sm:$0x3] %vm92, %v91
  %s95 = scalar_lea.vmem %s0, 7
  %s96 = smov 3
  %v97 = vld [vmem:[%s95] ss:$16 sm:%s96]
  %s98 = scalar_lea.vmem %s0, 7
  %s99 = smov 12
  %v100 = vld [vmem:[%s98] ss:$16 sm:%s99]
  %vm101 = vcmask 1043458
  %v102 = vsel %vm101, %v100, %v97
  %s103 = scalar_lea.vmem %s0, 7
  %s104 = smov 48
  %v105 = vld [vmem:[%s103] ss:$16 sm:%s104]
  %vm106 = vcmask 1045508
  %v107 = vsel %vm106, %v105, %v102
  %s108 = scalar_lea.vmem %s0, 7
  %s109 = smov 192
  %v110 = vld [vmem:[%s108] ss:$16 sm:%s109]
  %vm111 = vcmask 1047558
  %v112 = vsel %vm111, %v110, %v107
  %113 = vrot.lane.b32.xlu0 %v112, 112
  %v114 = vpop.permute.xlu0 %113
  %vm115 = vcmask 1048448
  %116 = vst.msk [vmem:[%s1] sm:$0xff] %vm115, %v114
  %s117 = scalar_lea.vmem %s0, 263
  %s118 = smov 3
  %v119 = vld [vmem:[%s117] ss:$16 sm:%s118]
  %s120 = scalar_lea.vmem %s0, 263
  %s121 = smov 12
  %v122 = vld [vmem:[%s120] ss:$16 sm:%s121]
  %vm123 = vcmask 1043458
  %v124 = vsel %vm123, %v122, %v119
  %s125 = scalar_lea.vmem %s0, 263
  %s126 = smov 48
  %v127 = vld [vmem:[%s125] ss:$16 sm:%s126]
  %vm128 = vcmask 1045508
  %v129 = vsel %vm128, %v127, %v124
  %s130 = scalar_lea.vmem %s0, 263
  %s131 = smov 192
  %v132 = vld [vmem:[%s130] ss:$16 sm:%s131]
  %vm133 = vcmask 1047558
  %v134 = vsel %vm133, %v132, %v129
  %135 = vrot.lane.b32.xlu0 %v134, 112
  %v136 = vpop.permute.xlu0 %135
  %vm137 = vcmask 1048448
  %s138 = scalar_lea.vmem %s1, 32
  %139 = vst.msk [vmem:[%s138] sm:$0xff] %vm137, %v136
  %s140 = scalar_lea.vmem %s0, 15
  %s141 = smov 3
  %v142 = vld [vmem:[%s140] ss:$16 sm:%s141]
  %s143 = scalar_lea.vmem %s0, 15
  %s144 = smov 12
  %v145 = vld [vmem:[%s143] ss:$16 sm:%s144]
  %vm146 = vcmask 1043458
  %v147 = vsel %vm146, %v145, %v142
  %s148 = scalar_lea.vmem %s0, 15
  %s149 = smov 48
  %v150 = vld [vmem:[%s148] ss:$16 sm:%s149]
  %vm151 = vcmask 1045508
  %v152 = vsel %vm151, %v150, %v147
  %s153 = scalar_lea.vmem %s0, 15
  %s154 = smov 192
  %v155 = vld [vmem:[%s153] ss:$16 sm:%s154]
  %vm156 = vcmask 1047558
  %v157 = vsel %vm156, %v155, %v152
  %158 = vrot.lane.b32.xlu0 %v157, 112
  %v159 = vpop.permute.xlu0 %158
  %vm160 = vcmask 1048448
  %s161 = scalar_lea.vmem %s1, 8
  %162 = vst.msk [vmem:[%s161] sm:$0xff] %vm160, %v159
  %s163 = scalar_lea.vmem %s0, 271
  %s164 = smov 3
  %v165 = vld [vmem:[%s163] ss:$16 sm:%s164]
  %s166 = scalar_lea.vmem %s0, 271
  %s167 = smov 12
  %v168 = vld [vmem:[%s166] ss:$16 sm:%s167]
  %vm169 = vcmask 1043458
  %v170 = vsel %vm169, %v168, %v165
  %s171 = scalar_lea.vmem %s0, 271
  %s172 = smov 48
  %v173 = vld [vmem:[%s171] ss:$16 sm:%s172]
  %vm174 = vcmask 1045508
  %v175 = vsel %vm174, %v173, %v170
  %s176 = scalar_lea.vmem %s0, 271
  %s177 = smov 192
  %v178 = vld [vmem:[%s176] ss:$16 sm:%s177]
  %vm179 = vcmask 1047558
  %v180 = vsel %vm179, %v178, %v175
  %181 = vrot.lane.b32.xlu0 %v180, 112
  %v182 = vpop.permute.xlu0 %181
  %vm183 = vcmask 1048448
  %s184 = scalar_lea.vmem %s1, 40
  %185 = vst.msk [vmem:[%s184] sm:$0xff] %vm183, %v182
  %s186 = scalar_lea.vmem %s0, 135
  %s187 = smov 3
  %v188 = vld [vmem:[%s186] ss:$16 sm:%s187]
  %s189 = scalar_lea.vmem %s0, 135
  %s190 = smov 12
  %v191 = vld [vmem:[%s189] ss:$16 sm:%s190]
  %vm192 = vcmask 1043458
  %v193 = vsel %vm192, %v191, %v188
  %s194 = scalar_lea.vmem %s0, 135
  %s195 = smov 48
  %v196 = vld [vmem:[%s194] ss:$16 sm:%s195]
  %vm197 = vcmask 1045508
  %v198 = vsel %vm197, %v196, %v193
  %s199 = scalar_lea.vmem %s0, 135
  %s200 = smov 192
  %v201 = vld [vmem:[%s199] ss:$16 sm:%s200]
  %vm202 = vcmask 1047558
  %v203 = vsel %vm202, %v201, %v198
  %204 = vrot.lane.b32.xlu0 %v203, 112
  %v205 = vpop.permute.xlu0 %204
  %vm206 = vcmask 1048448
  %s207 = scalar_lea.vmem %s1, 16
  %208 = vst.msk [vmem:[%s207] sm:$0xff] %vm206, %v205
  %s209 = scalar_lea.vmem %s0, 391
  %s210 = smov 3
  %v211 = vld [vmem:[%s209] ss:$-248 sm:%s210]
  %s212 = scalar_lea.vmem %s0, 127
  %s213 = smov 12
  %v214 = vld [vmem:[%s212] ss:$16 sm:%s213]
  %vm215 = vcmask 1043458
  %v216 = vsel %vm215, %v214, %v211
  %s217 = scalar_lea.vmem %s0, 127
  %s218 = smov 48
  %v219 = vld [vmem:[%s217] ss:$16 sm:%s218]
  %vm220 = vcmask 1045508
  %v221 = vsel %vm220, %v219, %v216
  %s222 = scalar_lea.vmem %s0, 127
  %s223 = smov 192
  %v224 = vld [vmem:[%s222] ss:$16 sm:%s223]
  %vm225 = vcmask 1047558
  %v226 = vsel %vm225, %v224, %v221
  %227 = vrot.lane.b32.xlu0 %v226, 112
  %v228 = vpop.permute.xlu0 %227
  %vm229 = vcmask 1048448
  %s230 = scalar_lea.vmem %s1, 48
  %231 = vst.msk [vmem:[%s230] ss:$-24 sm:$0x3] %vm229, %v228
  %s232 = scalar_lea.vmem %s1, 23
  %233 = vst.msk [vmem:[%s232] sm:$0xfc] %vm229, %v228
  %s234 = scalar_lea.vmem %s0, 399
  %s235 = smov 3
  %v236 = vld [vmem:[%s234] ss:$-144 sm:%s235]
  %237 = vrot.lane.b32.xlu0 %v236, 112
  %v238 = vpop.permute.xlu0 %237
  %vm239 = vcmask 1048448
  %s240 = scalar_lea.vmem %s1, 56
  %241 = vst.msk [vmem:[%s240] ss:$-25 sm:$0x3] %vm239, %v238
  %s242 = scalar_lea.vmem %s0, 6
  %s243 = smov 3
  %v244 = vld [vmem:[%s242] ss:$16 sm:%s243]
  %s245 = scalar_lea.vmem %s0, 6
  %s246 = smov 12
  %v247 = vld [vmem:[%s245] ss:$16 sm:%s246]
  %vm248 = vcmask 1043458
  %v249 = vsel %vm248, %v247, %v244
  %s250 = scalar_lea.vmem %s0, 6
  %s251 = smov 48
  %v252 = vld [vmem:[%s250] ss:$16 sm:%s251]
  %vm253 = vcmask 1045508
  %v254 = vsel %vm253, %v252, %v249
  %s255 = scalar_lea.vmem %s0, 6
  %s256 = smov 192
  %v257 = vld [vmem:[%s255] ss:$16 sm:%s256]
  %vm258 = vcmask 1047558
  %v259 = vsel %vm258, %v257, %v254
  %260 = vrot.lane.b32.xlu0 %v259, 96
  %v261 = vpop.permute.xlu0 %260
  %vm262 = vcmask 917248
  %263 = vst.msk [vmem:[%s1] sm:$0xff] %vm262, %v261
  %s264 = scalar_lea.vmem %s0, 262
  %s265 = smov 3
  %v266 = vld [vmem:[%s264] ss:$16 sm:%s265]
  %s267 = scalar_lea.vmem %s0, 262
  %s268 = smov 12
  %v269 = vld [vmem:[%s267] ss:$16 sm:%s268]
  %vm270 = vcmask 1043458
  %v271 = vsel %vm270, %v269, %v266
  %s272 = scalar_lea.vmem %s0, 262
  %s273 = smov 48
  %v274 = vld [vmem:[%s272] ss:$16 sm:%s273]
  %vm275 = vcmask 1045508
  %v276 = vsel %vm275, %v274, %v271
  %s277 = scalar_lea.vmem %s0, 262
  %s278 = smov 192
  %v279 = vld [vmem:[%s277] ss:$16 sm:%s278]
  %vm280 = vcmask 1047558
  %v281 = vsel %vm280, %v279, %v276
  %282 = vrot.lane.b32.xlu0 %v281, 96
  %v283 = vpop.permute.xlu0 %282
  %vm284 = vcmask 917248
  %s285 = scalar_lea.vmem %s1, 32
  %286 = vst.msk [vmem:[%s285] sm:$0xff] %vm284, %v283
  %s287 = scalar_lea.vmem %s0, 14
  %s288 = smov 3
  %v289 = vld [vmem:[%s287] ss:$16 sm:%s288]
  %s290 = scalar_lea.vmem %s0, 14
  %s291 = smov 12
  %v292 = vld [vmem:[%s290] ss:$16 sm:%s291]
  %vm293 = vcmask 1043458
  %v294 = vsel %vm293, %v292, %v289
  %s295 = scalar_lea.vmem %s0, 14
  %s296 = smov 48
  %v297 = vld [vmem:[%s295] ss:$16 sm:%s296]
  %vm298 = vcmask 1045508
  %v299 = vsel %vm298, %v297, %v294
  %s300 = scalar_lea.vmem %s0, 14
  %s301 = smov 192
  %v302 = vld [vmem:[%s300] ss:$16 sm:%s301]
  %vm303 = vcmask 1047558
  %v304 = vsel %vm303, %v302, %v299
  %305 = vrot.lane.b32.xlu0 %v304, 96
  %v306 = vpop.permute.xlu0 %305
  %vm307 = vcmask 917248
  %s308 = scalar_lea.vmem %s1, 8
  %309 = vst.msk [vmem:[%s308] sm:$0xff] %vm307, %v306
  %s310 = scalar_lea.vmem %s0, 270
  %s311 = smov 3
  %v312 = vld [vmem:[%s310] ss:$16 sm:%s311]
  %s313 = scalar_lea.vmem %s0, 270
  %s314 = smov 12
  %v315 = vld [vmem:[%s313] ss:$16 sm:%s314]
  %vm316 = vcmask 1043458
  %v317 = vsel %vm316, %v315, %v312
  %s318 = scalar_lea.vmem %s0, 270
  %s319 = smov 48
  %v320 = vld [vmem:[%s318] ss:$16 sm:%s319]
  %vm321 = vcmask 1045508
  %v322 = vsel %vm321, %v320, %v317
  %s323 = scalar_lea.vmem %s0, 270
  %s324 = smov 192
  %v325 = vld [vmem:[%s323] ss:$16 sm:%s324]
  %vm326 = vcmask 1047558
  %v327 = vsel %vm326, %v325, %v322
  %328 = vrot.lane.b32.xlu0 %v327, 96
  %v329 = vpop.permute.xlu0 %328
  %vm330 = vcmask 917248
  %s331 = scalar_lea.vmem %s1, 40
  %332 = vst.msk [vmem:[%s331] sm:$0xff] %vm330, %v329
  %s333 = scalar_lea.vmem %s0, 134
  %s334 = smov 3
  %v335 = vld [vmem:[%s333] ss:$16 sm:%s334]
  %s336 = scalar_lea.vmem %s0, 134
  %s337 = smov 12
  %v338 = vld [vmem:[%s336] ss:$16 sm:%s337]
  %vm339 = vcmask 1043458
  %v340 = vsel %vm339, %v338, %v335
  %s341 = scalar_lea.vmem %s0, 134
  %s342 = smov 48
  %v343 = vld [vmem:[%s341] ss:$16 sm:%s342]
  %vm344 = vcmask 1045508
  %v345 = vsel %vm344, %v343, %v340
  %s346 = scalar_lea.vmem %s0, 134
  %s347 = smov 192
  %v348 = vld [vmem:[%s346] ss:$16 sm:%s347]
  %vm349 = vcmask 1047558
  %v350 = vsel %vm349, %v348, %v345
  %351 = vrot.lane.b32.xlu0 %v350, 96
  %v352 = vpop.permute.xlu0 %351
  %vm353 = vcmask 917248
  %s354 = scalar_lea.vmem %s1, 16
  %355 = vst.msk [vmem:[%s354] sm:$0xff] %vm353, %v352
  %s356 = scalar_lea.vmem %s0, 390
  %s357 = smov 3
  %v358 = vld [vmem:[%s356] ss:$-248 sm:%s357]
  %s359 = scalar_lea.vmem %s0, 126
  %s360 = smov 12
  %v361 = vld [vmem:[%s359] ss:$16 sm:%s360]
  %vm362 = vcmask 1043458
  %v363 = vsel %vm362, %v361, %v358
  %s364 = scalar_lea.vmem %s0, 126
  %s365 = smov 48
  %v366 = vld [vmem:[%s364] ss:$16 sm:%s365]
  %vm367 = vcmask 1045508
  %v368 = vsel %vm367, %v366, %v363
  %s369 = scalar_lea.vmem %s0, 126
  %s370 = smov 192
  %v371 = vld [vmem:[%s369] ss:$16 sm:%s370]
  %vm372 = vcmask 1047558
  %v373 = vsel %vm372, %v371, %v368
  %374 = vrot.lane.b32.xlu0 %v373, 96
  %v375 = vpop.permute.xlu0 %374
  %vm376 = vcmask 917248
  %s377 = scalar_lea.vmem %s1, 48
  %378 = vst.msk [vmem:[%s377] ss:$-24 sm:$0x3] %vm376, %v375
  %s379 = scalar_lea.vmem %s1, 23
  %380 = vst.msk [vmem:[%s379] sm:$0xfc] %vm376, %v375
  %s381 = scalar_lea.vmem %s0, 398
  %s382 = smov 3
  %v383 = vld [vmem:[%s381] ss:$-144 sm:%s382]
  %384 = vrot.lane.b32.xlu0 %v383, 96
  %v385 = vpop.permute.xlu0 %384
  %vm386 = vcmask 917248
  %s387 = scalar_lea.vmem %s1, 56
  %388 = vst.msk [vmem:[%s387] ss:$-25 sm:$0x3] %vm386, %v385
  %s389 = scalar_lea.vmem %s0, 5
  %s390 = smov 3
  %v391 = vld [vmem:[%s389] ss:$16 sm:%s390]
  %s392 = scalar_lea.vmem %s0, 5
  %s393 = smov 12
  %v394 = vld [vmem:[%s392] ss:$16 sm:%s393]
  %vm395 = vcmask 1043458
  %v396 = vsel %vm395, %v394, %v391
  %s397 = scalar_lea.vmem %s0, 5
  %s398 = smov 48
  %v399 = vld [vmem:[%s397] ss:$16 sm:%s398]
  %vm400 = vcmask 1045508
  %v401 = vsel %vm400, %v399, %v396
  %s402 = scalar_lea.vmem %s0, 5
  %s403 = smov 192
  %v404 = vld [vmem:[%s402] ss:$16 sm:%s403]
  %vm405 = vcmask 1047558
  %v406 = vsel %vm405, %v404, %v401
  %407 = vrot.lane.b32.xlu0 %v406, 80
  %v408 = vpop.permute.xlu0 %407
  %vm409 = vcmask 786048
  %410 = vst.msk [vmem:[%s1] sm:$0xff] %vm409, %v408
  %s411 = scalar_lea.vmem %s0, 261
  %s412 = smov 3
  %v413 = vld [vmem:[%s411] ss:$16 sm:%s412]
  %s414 = scalar_lea.vmem %s0, 261
  %s415 = smov 12
  %v416 = vld [vmem:[%s414] ss:$16 sm:%s415]
  %vm417 = vcmask 1043458
  %v418 = vsel %vm417, %v416, %v413
  %s419 = scalar_lea.vmem %s0, 261
  %s420 = smov 48
  %v421 = vld [vmem:[%s419] ss:$16 sm:%s420]
  %vm422 = vcmask 1045508
  %v423 = vsel %vm422, %v421, %v418
  %s424 = scalar_lea.vmem %s0, 261
  %s425 = smov 192
  %v426 = vld [vmem:[%s424] ss:$16 sm:%s425]
  %vm427 = vcmask 1047558
  %v428 = vsel %vm427, %v426, %v423
  %429 = vrot.lane.b32.xlu0 %v428, 80
  %v430 = vpop.permute.xlu0 %429
  %vm431 = vcmask 786048
  %s432 = scalar_lea.vmem %s1, 32
  %433 = vst.msk [vmem:[%s432] sm:$0xff] %vm431, %v430
  %s434 = scalar_lea.vmem %s0, 13
  %s435 = smov 3
  %v436 = vld [vmem:[%s434] ss:$16 sm:%s435]
  %s437 = scalar_lea.vmem %s0, 13
  %s438 = smov 12
  %v439 = vld [vmem:[%s437] ss:$16 sm:%s438]
  %vm440 = vcmask 1043458
  %v441 = vsel %vm440, %v439, %v436
  %s442 = scalar_lea.vmem %s0, 13
  %s443 = smov 48
  %v444 = vld [vmem:[%s442] ss:$16 sm:%s443]
  %vm445 = vcmask 1045508
  %v446 = vsel %vm445, %v444, %v441
  %s447 = scalar_lea.vmem %s0, 13
  %s448 = smov 192
  %v449 = vld [vmem:[%s447] ss:$16 sm:%s448]
  %vm450 = vcmask 1047558
  %v451 = vsel %vm450, %v449, %v446
  %452 = vrot.lane.b32.xlu0 %v451, 80
  %v453 = vpop.permute.xlu0 %452
  %vm454 = vcmask 786048
  %s455 = scalar_lea.vmem %s1, 8
  %456 = vst.msk [vmem:[%s455] sm:$0xff] %vm454, %v453
  %s457 = scalar_lea.vmem %s0, 269
  %s458 = smov 3
  %v459 = vld [vmem:[%s457] ss:$16 sm:%s458]
  %s460 = scalar_lea.vmem %s0, 269
  %s461 = smov 12
  %v462 = vld [vmem:[%s460] ss:$16 sm:%s461]
  %vm463 = vcmask 1043458
  %v464 = vsel %vm463, %v462, %v459
  %s465 = scalar_lea.vmem %s0, 269
  %s466 = smov 48
  %v467 = vld [vmem:[%s465] ss:$16 sm:%s466]
  %vm468 = vcmask 1045508
  %v469 = vsel %vm468, %v467, %v464
  %s470 = scalar_lea.vmem %s0, 269
  %s471 = smov 192
  %v472 = vld [vmem:[%s470] ss:$16 sm:%s471]
  %vm473 = vcmask 1047558
  %v474 = vsel %vm473, %v472, %v469
  %475 = vrot.lane.b32.xlu0 %v474, 80
  %v476 = vpop.permute.xlu0 %475
  %vm477 = vcmask 786048
  %s478 = scalar_lea.vmem %s1, 40
  %479 = vst.msk [vmem:[%s478] sm:$0xff] %vm477, %v476
  %s480 = scalar_lea.vmem %s0, 133
  %s481 = smov 3
  %v482 = vld [vmem:[%s480] ss:$16 sm:%s481]
  %s483 = scalar_lea.vmem %s0, 133
  %s484 = smov 12
  %v485 = vld [vmem:[%s483] ss:$16 sm:%s484]
  %vm486 = vcmask 1043458
  %v487 = vsel %vm486, %v485, %v482
  %s488 = scalar_lea.vmem %s0, 133
  %s489 = smov 48
  %v490 = vld [vmem:[%s488] ss:$16 sm:%s489]
  %vm491 = vcmask 1045508
  %v492 = vsel %vm491, %v490, %v487
  %s493 = scalar_lea.vmem %s0, 133
  %s494 = smov 192
  %v495 = vld [vmem:[%s493] ss:$16 sm:%s494]
  %vm496 = vcmask 1047558
  %v497 = vsel %vm496, %v495, %v492
  %498 = vrot.lane.b32.xlu0 %v497, 80
  %v499 = vpop.permute.xlu0 %498
  %vm500 = vcmask 786048
  %s501 = scalar_lea.vmem %s1, 16
  %502 = vst.msk [vmem:[%s501] sm:$0xff] %vm500, %v499
  %s503 = scalar_lea.vmem %s0, 389
  %s504 = smov 3
  %v505 = vld [vmem:[%s503] ss:$-248 sm:%s504]
  %s506 = scalar_lea.vmem %s0, 125
  %s507 = smov 12
  %v508 = vld [vmem:[%s506] ss:$16 sm:%s507]
  %vm509 = vcmask 1043458
  %v510 = vsel %vm509, %v508, %v505
  %s511 = scalar_lea.vmem %s0, 125
  %s512 = smov 48
  %v513 = vld [vmem:[%s511] ss:$16 sm:%s512]
  %vm514 = vcmask 1045508
  %v515 = vsel %vm514, %v513, %v510
  %s516 = scalar_lea.vmem %s0, 125
  %s517 = smov 192
  %v518 = vld [vmem:[%s516] ss:$16 sm:%s517]
  %vm519 = vcmask 1047558
  %v520 = vsel %vm519, %v518, %v515
  %521 = vrot.lane.b32.xlu0 %v520, 80
  %v522 = vpop.permute.xlu0 %521
  %vm523 = vcmask 786048
  %s524 = scalar_lea.vmem %s1, 48
  %525 = vst.msk [vmem:[%s524] ss:$-24 sm:$0x3] %vm523, %v522
  %s526 = scalar_lea.vmem %s1, 23
  %527 = vst.msk [vmem:[%s526] sm:$0xfc] %vm523, %v522
  %s528 = scalar_lea.vmem %s0, 397
  %s529 = smov 3
  %v530 = vld [vmem:[%s528] ss:$-144 sm:%s529]
  %531 = vrot.lane.b32.xlu0 %v530, 80
  %v532 = vpop.permute.xlu0 %531
  %vm533 = vcmask 786048
  %s534 = scalar_lea.vmem %s1, 56
  %535 = vst.msk [vmem:[%s534] ss:$-25 sm:$0x3] %vm533, %v532
  %s536 = scalar_lea.vmem %s0, 4
  %s537 = smov 3
  %v538 = vld [vmem:[%s536] ss:$16 sm:%s537]
  %s539 = scalar_lea.vmem %s0, 4
  %s540 = smov 12
  %v541 = vld [vmem:[%s539] ss:$16 sm:%s540]
  %vm542 = vcmask 1043458
  %v543 = vsel %vm542, %v541, %v538
  %s544 = scalar_lea.vmem %s0, 4
  %s545 = smov 48
  %v546 = vld [vmem:[%s544] ss:$16 sm:%s545]
  %vm547 = vcmask 1045508
  %v548 = vsel %vm547, %v546, %v543
  %s549 = scalar_lea.vmem %s0, 4
  %s550 = smov 192
  %v551 = vld [vmem:[%s549] ss:$16 sm:%s550]
  %vm552 = vcmask 1047558
  %v553 = vsel %vm552, %v551, %v548
  %554 = vrot.lane.b32.xlu0 %v553, 64
  %v555 = vpop.permute.xlu0 %554
  %vm556 = vcmask 654848
  %557 = vst.msk [vmem:[%s1] sm:$0xff] %vm556, %v555
  %s558 = scalar_lea.vmem %s0, 260
  %s559 = smov 3
  %v560 = vld [vmem:[%s558] ss:$16 sm:%s559]
  %s561 = scalar_lea.vmem %s0, 260
  %s562 = smov 12
  %v563 = vld [vmem:[%s561] ss:$16 sm:%s562]
  %vm564 = vcmask 1043458
  %v565 = vsel %vm564, %v563, %v560
  %s566 = scalar_lea.vmem %s0, 260
  %s567 = smov 48
  %v568 = vld [vmem:[%s566] ss:$16 sm:%s567]
  %vm569 = vcmask 1045508
  %v570 = vsel %vm569, %v568, %v565
  %s571 = scalar_lea.vmem %s0, 260
  %s572 = smov 192
  %v573 = vld [vmem:[%s571] ss:$16 sm:%s572]
  %vm574 = vcmask 1047558
  %v575 = vsel %vm574, %v573, %v570
  %576 = vrot.lane.b32.xlu0 %v575, 64
  %v577 = vpop.permute.xlu0 %576
  %vm578 = vcmask 654848
  %s579 = scalar_lea.vmem %s1, 32
  %580 = vst.msk [vmem:[%s579] sm:$0xff] %vm578, %v577
  %s581 = scalar_lea.vmem %s0, 12
  %s582 = smov 3
  %v583 = vld [vmem:[%s581] ss:$16 sm:%s582]
  %s584 = scalar_lea.vmem %s0, 12
  %s585 = smov 12
  %v586 = vld [vmem:[%s584] ss:$16 sm:%s585]
  %vm587 = vcmask 1043458
  %v588 = vsel %vm587, %v586, %v583
  %s589 = scalar_lea.vmem %s0, 12
  %s590 = smov 48
  %v591 = vld [vmem:[%s589] ss:$16 sm:%s590]
  %vm592 = vcmask 1045508
  %v593 = vsel %vm592, %v591, %v588
  %s594 = scalar_lea.vmem %s0, 12
  %s595 = smov 192
  %v596 = vld [vmem:[%s594] ss:$16 sm:%s595]
  %vm597 = vcmask 1047558
  %v598 = vsel %vm597, %v596, %v593
  %599 = vrot.lane.b32.xlu0 %v598, 64
  %v600 = vpop.permute.xlu0 %599
  %vm601 = vcmask 654848
  %s602 = scalar_lea.vmem %s1, 8
  %603 = vst.msk [vmem:[%s602] sm:$0xff] %vm601, %v600
  %s604 = scalar_lea.vmem %s0, 268
  %s605 = smov 3
  %v606 = vld [vmem:[%s604] ss:$16 sm:%s605]
  %s607 = scalar_lea.vmem %s0, 268
  %s608 = smov 12
  %v609 = vld [vmem:[%s607] ss:$16 sm:%s608]
  %vm610 = vcmask 1043458
  %v611 = vsel %vm610, %v609, %v606
  %s612 = scalar_lea.vmem %s0, 268
  %s613 = smov 48
  %v614 = vld [vmem:[%s612] ss:$16 sm:%s613]
  %vm615 = vcmask 1045508
  %v616 = vsel %vm615, %v614, %v611
  %s617 = scalar_lea.vmem %s0, 268
  %s618 = smov 192
  %v619 = vld [vmem:[%s617] ss:$16 sm:%s618]
  %vm620 = vcmask 1047558
  %v621 = vsel %vm620, %v619, %v616
  %622 = vrot.lane.b32.xlu0 %v621, 64
  %v623 = vpop.permute.xlu0 %622
  %vm624 = vcmask 654848
  %s625 = scalar_lea.vmem %s1, 40
  %626 = vst.msk [vmem:[%s625] sm:$0xff] %vm624, %v623
  %s627 = scalar_lea.vmem %s0, 132
  %s628 = smov 3
  %v629 = vld [vmem:[%s627] ss:$16 sm:%s628]
  %s630 = scalar_lea.vmem %s0, 132
  %s631 = smov 12
  %v632 = vld [vmem:[%s630] ss:$16 sm:%s631]
  %vm633 = vcmask 1043458
  %v634 = vsel %vm633, %v632, %v629
  %s635 = scalar_lea.vmem %s0, 132
  %s636 = smov 48
  %v637 = vld [vmem:[%s635] ss:$16 sm:%s636]
  %vm638 = vcmask 1045508
  %v639 = vsel %vm638, %v637, %v634
  %s640 = scalar_lea.vmem %s0, 132
  %s641 = smov 192
  %v642 = vld [vmem:[%s640] ss:$16 sm:%s641]
  %vm643 = vcmask 1047558
  %v644 = vsel %vm643, %v642, %v639
  %645 = vrot.lane.b32.xlu0 %v644, 64
  %v646 = vpop.permute.xlu0 %645
  %vm647 = vcmask 654848
  %s648 = scalar_lea.vmem %s1, 16
  %649 = vst.msk [vmem:[%s648] sm:$0xff] %vm647, %v646
  %s650 = scalar_lea.vmem %s0, 388
  %s651 = smov 3
  %v652 = vld [vmem:[%s650] ss:$-248 sm:%s651]
  %s653 = scalar_lea.vmem %s0, 124
  %s654 = smov 12
  %v655 = vld [vmem:[%s653] ss:$16 sm:%s654]
  %vm656 = vcmask 1043458
  %v657 = vsel %vm656, %v655, %v652
  %s658 = scalar_lea.vmem %s0, 124
  %s659 = smov 48
  %v660 = vld [vmem:[%s658] ss:$16 sm:%s659]
  %vm661 = vcmask 1045508
  %v662 = vsel %vm661, %v660, %v657
  %s663 = scalar_lea.vmem %s0, 124
  %s664 = smov 192
  %v665 = vld [vmem:[%s663] ss:$16 sm:%s664]
  %vm666 = vcmask 1047558
  %v667 = vsel %vm666, %v665, %v662
  %668 = vrot.lane.b32.xlu0 %v667, 64
  %v669 = vpop.permute.xlu0 %668
  %vm670 = vcmask 654848
  %s671 = scalar_lea.vmem %s1, 48
  %672 = vst.msk [vmem:[%s671] ss:$-24 sm:$0x3] %vm670, %v669
  %s673 = scalar_lea.vmem %s1, 23
  %674 = vst.msk [vmem:[%s673] sm:$0xfc] %vm670, %v669
  %s675 = scalar_lea.vmem %s0, 396
  %s676 = smov 3
  %v677 = vld [vmem:[%s675] ss:$-144 sm:%s676]
  %678 = vrot.lane.b32.xlu0 %v677, 64
  %v679 = vpop.permute.xlu0 %678
  %vm680 = vcmask 654848
  %s681 = scalar_lea.vmem %s1, 56
  %682 = vst.msk [vmem:[%s681] ss:$-25 sm:$0x3] %vm680, %v679
  %s683 = scalar_lea.vmem %s0, 3
  %s684 = smov 3
  %v685 = vld [vmem:[%s683] ss:$16 sm:%s684]
  %s686 = scalar_lea.vmem %s0, 3
  %s687 = smov 12
  %v688 = vld [vmem:[%s686] ss:$16 sm:%s687]
  %vm689 = vcmask 1043458
  %v690 = vsel %vm689, %v688, %v685
  %s691 = scalar_lea.vmem %s0, 3
  %s692 = smov 48
  %v693 = vld [vmem:[%s691] ss:$16 sm:%s692]
  %vm694 = vcmask 1045508
  %v695 = vsel %vm694, %v693, %v690
  %s696 = scalar_lea.vmem %s0, 3
  %s697 = smov 192
  %v698 = vld [vmem:[%s696] ss:$16 sm:%s697]
  %vm699 = vcmask 1047558
  %v700 = vsel %vm699, %v698, %v695
  %701 = vrot.lane.b32.xlu0 %v700, 48
  %v702 = vpop.permute.xlu0 %701
  %vm703 = vcmask 523648
  %704 = vst.msk [vmem:[%s1] sm:$0xff] %vm703, %v702
  %s705 = scalar_lea.vmem %s0, 259
  %s706 = smov 3
  %v707 = vld [vmem:[%s705] ss:$16 sm:%s706]
  %s708 = scalar_lea.vmem %s0, 259
  %s709 = smov 12
  %v710 = vld [vmem:[%s708] ss:$16 sm:%s709]
  %vm711 = vcmask 1043458
  %v712 = vsel %vm711, %v710, %v707
  %s713 = scalar_lea.vmem %s0, 259
  %s714 = smov 48
  %v715 = vld [vmem:[%s713] ss:$16 sm:%s714]
  %vm716 = vcmask 1045508
  %v717 = vsel %vm716, %v715, %v712
  %s718 = scalar_lea.vmem %s0, 259
  %s719 = smov 192
  %v720 = vld [vmem:[%s718] ss:$16 sm:%s719]
  %vm721 = vcmask 1047558
  %v722 = vsel %vm721, %v720, %v717
  %723 = vrot.lane.b32.xlu0 %v722, 48
  %v724 = vpop.permute.xlu0 %723
  %vm725 = vcmask 523648
  %s726 = scalar_lea.vmem %s1, 32
  %727 = vst.msk [vmem:[%s726] sm:$0xff] %vm725, %v724
  %s728 = scalar_lea.vmem %s0, 11
  %s729 = smov 3
  %v730 = vld [vmem:[%s728] ss:$16 sm:%s729]
  %s731 = scalar_lea.vmem %s0, 11
  %s732 = smov 12
  %v733 = vld [vmem:[%s731] ss:$16 sm:%s732]
  %vm734 = vcmask 1043458
  %v735 = vsel %vm734, %v733, %v730
  %s736 = scalar_lea.vmem %s0, 11
  %s737 = smov 48
  %v738 = vld [vmem:[%s736] ss:$16 sm:%s737]
  %vm739 = vcmask 1045508
  %v740 = vsel %vm739, %v738, %v735
  %s741 = scalar_lea.vmem %s0, 11
  %s742 = smov 192
  %v743 = vld [vmem:[%s741] ss:$16 sm:%s742]
  %vm744 = vcmask 1047558
  %v745 = vsel %vm744, %v743, %v740
  %746 = vrot.lane.b32.xlu0 %v745, 48
  %v747 = vpop.permute.xlu0 %746
  %vm748 = vcmask 523648
  %s749 = scalar_lea.vmem %s1, 8
  %750 = vst.msk [vmem:[%s749] sm:$0xff] %vm748, %v747
  %s751 = scalar_lea.vmem %s0, 267
  %s752 = smov 3
  %v753 = vld [vmem:[%s751] ss:$16 sm:%s752]
  %s754 = scalar_lea.vmem %s0, 267
  %s755 = smov 12
  %v756 = vld [vmem:[%s754] ss:$16 sm:%s755]
  %vm757 = vcmask 1043458
  %v758 = vsel %vm757, %v756, %v753
  %s759 = scalar_lea.vmem %s0, 267
  %s760 = smov 48
  %v761 = vld [vmem:[%s759] ss:$16 sm:%s760]
  %vm762 = vcmask 1045508
  %v763 = vsel %vm762, %v761, %v758
  %s764 = scalar_lea.vmem %s0, 267
  %s765 = smov 192
  %v766 = vld [vmem:[%s764] ss:$16 sm:%s765]
  %vm767 = vcmask 1047558
  %v768 = vsel %vm767, %v766, %v763
  %769 = vrot.lane.b32.xlu0 %v768, 48
  %v770 = vpop.permute.xlu0 %769
  %vm771 = vcmask 523648
  %s772 = scalar_lea.vmem %s1, 40
  %773 = vst.msk [vmem:[%s772] sm:$0xff] %vm771, %v770
  %s774 = scalar_lea.vmem %s0, 131
  %s775 = smov 3
  %v776 = vld [vmem:[%s774] ss:$16 sm:%s775]
  %s777 = scalar_lea.vmem %s0, 131
  %s778 = smov 12
  %v779 = vld [vmem:[%s777] ss:$16 sm:%s778]
  %vm780 = vcmask 1043458
  %v781 = vsel %vm780, %v779, %v776
  %s782 = scalar_lea.vmem %s0, 131
  %s783 = smov 48
  %v784 = vld [vmem:[%s782] ss:$16 sm:%s783]
  %vm785 = vcmask 1045508
  %v786 = vsel %vm785, %v784, %v781
  %s787 = scalar_lea.vmem %s0, 131
  %s788 = smov 192
  %v789 = vld [vmem:[%s787] ss:$16 sm:%s788]
  %vm790 = vcmask 1047558
  %v791 = vsel %vm790, %v789, %v786
  %792 = vrot.lane.b32.xlu0 %v791, 48
  %v793 = vpop.permute.xlu0 %792
  %vm794 = vcmask 523648
  %s795 = scalar_lea.vmem %s1, 16
  %796 = vst.msk [vmem:[%s795] sm:$0xff] %vm794, %v793
  %s797 = scalar_lea.vmem %s0, 387
  %s798 = smov 3
  %v799 = vld [vmem:[%s797] ss:$-248 sm:%s798]
  %s800 = scalar_lea.vmem %s0, 123
  %s801 = smov 12
  %v802 = vld [vmem:[%s800] ss:$16 sm:%s801]
  %vm803 = vcmask 1043458
  %v804 = vsel %vm803, %v802, %v799
  %s805 = scalar_lea.vmem %s0, 123
  %s806 = smov 48
  %v807 = vld [vmem:[%s805] ss:$16 sm:%s806]
  %vm808 = vcmask 1045508
  %v809 = vsel %vm808, %v807, %v804
  %s810 = scalar_lea.vmem %s0, 123
  %s811 = smov 192
  %v812 = vld [vmem:[%s810] ss:$16 sm:%s811]
  %vm813 = vcmask 1047558
  %v814 = vsel %vm813, %v812, %v809
  %815 = vrot.lane.b32.xlu0 %v814, 48
  %v816 = vpop.permute.xlu0 %815
  %vm817 = vcmask 523648
  %s818 = scalar_lea.vmem %s1, 48
  %819 = vst.msk [vmem:[%s818] ss:$-24 sm:$0x3] %vm817, %v816
  %s820 = scalar_lea.vmem %s1, 23
  %821 = vst.msk [vmem:[%s820] sm:$0xfc] %vm817, %v816
  %s822 = scalar_lea.vmem %s0, 395
  %s823 = smov 3
  %v824 = vld [vmem:[%s822] ss:$-144 sm:%s823]
  %825 = vrot.lane.b32.xlu0 %v824, 48
  %v826 = vpop.permute.xlu0 %825
  %vm827 = vcmask 523648
  %s828 = scalar_lea.vmem %s1, 56
  %829 = vst.msk [vmem:[%s828] ss:$-25 sm:$0x3] %vm827, %v826
  %s830 = scalar_lea.vmem %s0, 2
  %s831 = smov 3
  %v832 = vld [vmem:[%s830] ss:$16 sm:%s831]
  %s833 = scalar_lea.vmem %s0, 2
  %s834 = smov 12
  %v835 = vld [vmem:[%s833] ss:$16 sm:%s834]
  %vm836 = vcmask 1043458
  %v837 = vsel %vm836, %v835, %v832
  %s838 = scalar_lea.vmem %s0, 2
  %s839 = smov 48
  %v840 = vld [vmem:[%s838] ss:$16 sm:%s839]
  %vm841 = vcmask 1045508
  %v842 = vsel %vm841, %v840, %v837
  %s843 = scalar_lea.vmem %s0, 2
  %s844 = smov 192
  %v845 = vld [vmem:[%s843] ss:$16 sm:%s844]
  %vm846 = vcmask 1047558
  %v847 = vsel %vm846, %v845, %v842
  %848 = vrot.lane.b32.xlu0 %v847, 32
  %v849 = vpop.permute.xlu0 %848
  %vm850 = vcmask 392448
  %851 = vst.msk [vmem:[%s1] sm:$0xff] %vm850, %v849
  %s852 = scalar_lea.vmem %s0, 258
  %s853 = smov 3
  %v854 = vld [vmem:[%s852] ss:$16 sm:%s853]
  %s855 = scalar_lea.vmem %s0, 258
  %s856 = smov 12
  %v857 = vld [vmem:[%s855] ss:$16 sm:%s856]
  %vm858 = vcmask 1043458
  %v859 = vsel %vm858, %v857, %v854
  %s860 = scalar_lea.vmem %s0, 258
  %s861 = smov 48
  %v862 = vld [vmem:[%s860] ss:$16 sm:%s861]
  %vm863 = vcmask 1045508
  %v864 = vsel %vm863, %v862, %v859
  %s865 = scalar_lea.vmem %s0, 258
  %s866 = smov 192
  %v867 = vld [vmem:[%s865] ss:$16 sm:%s866]
  %vm868 = vcmask 1047558
  %v869 = vsel %vm868, %v867, %v864
  %870 = vrot.lane.b32.xlu0 %v869, 32
  %v871 = vpop.permute.xlu0 %870
  %vm872 = vcmask 392448
  %s873 = scalar_lea.vmem %s1, 32
  %874 = vst.msk [vmem:[%s873] sm:$0xff] %vm872, %v871
  %s875 = scalar_lea.vmem %s0, 10
  %s876 = smov 3
  %v877 = vld [vmem:[%s875] ss:$16 sm:%s876]
  %s878 = scalar_lea.vmem %s0, 10
  %s879 = smov 12
  %v880 = vld [vmem:[%s878] ss:$16 sm:%s879]
  %vm881 = vcmask 1043458
  %v882 = vsel %vm881, %v880, %v877
  %s883 = scalar_lea.vmem %s0, 10
  %s884 = smov 48
  %v885 = vld [vmem:[%s883] ss:$16 sm:%s884]
  %vm886 = vcmask 1045508
  %v887 = vsel %vm886, %v885, %v882
  %s888 = scalar_lea.vmem %s0, 10
  %s889 = smov 192
  %v890 = vld [vmem:[%s888] ss:$16 sm:%s889]
  %vm891 = vcmask 1047558
  %v892 = vsel %vm891, %v890, %v887
  %893 = vrot.lane.b32.xlu0 %v892, 32
  %v894 = vpop.permute.xlu0 %893
  %vm895 = vcmask 392448
  %s896 = scalar_lea.vmem %s1, 8
  %897 = vst.msk [vmem:[%s896] sm:$0xff] %vm895, %v894
  %s898 = scalar_lea.vmem %s0, 266
  %s899 = smov 3
  %v900 = vld [vmem:[%s898] ss:$16 sm:%s899]
  %s901 = scalar_lea.vmem %s0, 266
  %s902 = smov 12
  %v903 = vld [vmem:[%s901] ss:$16 sm:%s902]
  %vm904 = vcmask 1043458
  %v905 = vsel %vm904, %v903, %v900
  %s906 = scalar_lea.vmem %s0, 266
  %s907 = smov 48
  %v908 = vld [vmem:[%s906] ss:$16 sm:%s907]
  %vm909 = vcmask 1045508
  %v910 = vsel %vm909, %v908, %v905
  %s911 = scalar_lea.vmem %s0, 266
  %s912 = smov 192
  %v913 = vld [vmem:[%s911] ss:$16 sm:%s912]
  %vm914 = vcmask 1047558
  %v915 = vsel %vm914, %v913, %v910
  %916 = vrot.lane.b32.xlu0 %v915, 32
  %v917 = vpop.permute.xlu0 %916
  %vm918 = vcmask 392448
  %s919 = scalar_lea.vmem %s1, 40
  %920 = vst.msk [vmem:[%s919] sm:$0xff] %vm918, %v917
  %s921 = scalar_lea.vmem %s0, 130
  %s922 = smov 3
  %v923 = vld [vmem:[%s921] ss:$16 sm:%s922]
  %s924 = scalar_lea.vmem %s0, 130
  %s925 = smov 12
  %v926 = vld [vmem:[%s924] ss:$16 sm:%s925]
  %vm927 = vcmask 1043458
  %v928 = vsel %vm927, %v926, %v923
  %s929 = scalar_lea.vmem %s0, 130
  %s930 = smov 48
  %v931 = vld [vmem:[%s929] ss:$16 sm:%s930]
  %vm932 = vcmask 1045508
  %v933 = vsel %vm932, %v931, %v928
  %s934 = scalar_lea.vmem %s0, 130
  %s935 = smov 192
  %v936 = vld [vmem:[%s934] ss:$16 sm:%s935]
  %vm937 = vcmask 1047558
  %v938 = vsel %vm937, %v936, %v933
  %939 = vrot.lane.b32.xlu0 %v938, 32
  %v940 = vpop.permute.xlu0 %939
  %vm941 = vcmask 392448
  %s942 = scalar_lea.vmem %s1, 16
  %943 = vst.msk [vmem:[%s942] sm:$0xff] %vm941, %v940
  %s944 = scalar_lea.vmem %s0, 386
  %s945 = smov 3
  %v946 = vld [vmem:[%s944] ss:$-248 sm:%s945]
  %s947 = scalar_lea.vmem %s0, 122
  %s948 = smov 12
  %v949 = vld [vmem:[%s947] ss:$16 sm:%s948]
  %vm950 = vcmask 1043458
  %v951 = vsel %vm950, %v949, %v946
  %s952 = scalar_lea.vmem %s0, 122
  %s953 = smov 48
  %v954 = vld [vmem:[%s952] ss:$16 sm:%s953]
  %vm955 = vcmask 1045508
  %v956 = vsel %vm955, %v954, %v951
  %s957 = scalar_lea.vmem %s0, 122
  %s958 = smov 192
  %v959 = vld [vmem:[%s957] ss:$16 sm:%s958]
  %vm960 = vcmask 1047558
  %v961 = vsel %vm960, %v959, %v956
  %962 = vrot.lane.b32.xlu0 %v961, 32
  %v963 = vpop.permute.xlu0 %962
  %vm964 = vcmask 392448
  %s965 = scalar_lea.vmem %s1, 48
  %966 = vst.msk [vmem:[%s965] ss:$-24 sm:$0x3] %vm964, %v963
  %s967 = scalar_lea.vmem %s1, 23
  %968 = vst.msk [vmem:[%s967] sm:$0xfc] %vm964, %v963
  %s969 = scalar_lea.vmem %s0, 394
  %s970 = smov 3
  %v971 = vld [vmem:[%s969] ss:$-144 sm:%s970]
  %972 = vrot.lane.b32.xlu0 %v971, 32
  %v973 = vpop.permute.xlu0 %972
  %vm974 = vcmask 392448
  %s975 = scalar_lea.vmem %s1, 56
  %976 = vst.msk [vmem:[%s975] ss:$-25 sm:$0x3] %vm974, %v973
  %s977 = scalar_lea.vmem %s0, 1
  %s978 = smov 3
  %v979 = vld [vmem:[%s977] ss:$16 sm:%s978]
  %s980 = scalar_lea.vmem %s0, 1
  %s981 = smov 12
  %v982 = vld [vmem:[%s980] ss:$16 sm:%s981]
  %vm983 = vcmask 1043458
  %v984 = vsel %vm983, %v982, %v979
  %s985 = scalar_lea.vmem %s0, 1
  %s986 = smov 48
  %v987 = vld [vmem:[%s985] ss:$16 sm:%s986]
  %vm988 = vcmask 1045508
  %v989 = vsel %vm988, %v987, %v984
  %s990 = scalar_lea.vmem %s0, 1
  %s991 = smov 192
  %v992 = vld [vmem:[%s990] ss:$16 sm:%s991]
  %vm993 = vcmask 1047558
  %v994 = vsel %vm993, %v992, %v989
  %995 = vrot.lane.b32.xlu0 %v994, 16
  %v996 = vpop.permute.xlu0 %995
  %vm997 = vcmask 261248
  %998 = vst.msk [vmem:[%s1] sm:$0xff] %vm997, %v996
  %s999 = scalar_lea.vmem %s0, 257
  %s1000 = smov 3
  %v1001 = vld [vmem:[%s999] ss:$16 sm:%s1000]
  %s1002 = scalar_lea.vmem %s0, 257
  %s1003 = smov 12
  %v1004 = vld [vmem:[%s1002] ss:$16 sm:%s1003]
  %vm1005 = vcmask 1043458
  %v1006 = vsel %vm1005, %v1004, %v1001
  %s1007 = scalar_lea.vmem %s0, 257
  %s1008 = smov 48
  %v1009 = vld [vmem:[%s1007] ss:$16 sm:%s1008]
  %vm1010 = vcmask 1045508
  %v1011 = vsel %vm1010, %v1009, %v1006
  %s1012 = scalar_lea.vmem %s0, 257
  %s1013 = smov 192
  %v1014 = vld [vmem:[%s1012] ss:$16 sm:%s1013]
  %vm1015 = vcmask 1047558
  %v1016 = vsel %vm1015, %v1014, %v1011
  %1017 = vrot.lane.b32.xlu0 %v1016, 16
  %v1018 = vpop.permute.xlu0 %1017
  %vm1019 = vcmask 261248
  %s1020 = scalar_lea.vmem %s1, 32
  %1021 = vst.msk [vmem:[%s1020] sm:$0xff] %vm1019, %v1018
  %s1022 = scalar_lea.vmem %s0, 9
  %s1023 = smov 3
  %v1024 = vld [vmem:[%s1022] ss:$16 sm:%s1023]
  %s1025 = scalar_lea.vmem %s0, 9
  %s1026 = smov 12
  %v1027 = vld [vmem:[%s1025] ss:$16 sm:%s1026]
  %vm1028 = vcmask 1043458
  %v1029 = vsel %vm1028, %v1027, %v1024
  %s1030 = scalar_lea.vmem %s0, 9
  %s1031 = smov 48
  %v1032 = vld [vmem:[%s1030] ss:$16 sm:%s1031]
  %vm1033 = vcmask 1045508
  %v1034 = vsel %vm1033, %v1032, %v1029
  %s1035 = scalar_lea.vmem %s0, 9
  %s1036 = smov 192
  %v1037 = vld [vmem:[%s1035] ss:$16 sm:%s1036]
  %vm1038 = vcmask 1047558
  %v1039 = vsel %vm1038, %v1037, %v1034
  %1040 = vrot.lane.b32.xlu0 %v1039, 16
  %v1041 = vpop.permute.xlu0 %1040
  %vm1042 = vcmask 261248
  %s1043 = scalar_lea.vmem %s1, 8
  %1044 = vst.msk [vmem:[%s1043] sm:$0xff] %vm1042, %v1041
  %s1045 = scalar_lea.vmem %s0, 265
  %s1046 = smov 3
  %v1047 = vld [vmem:[%s1045] ss:$16 sm:%s1046]
  %s1048 = scalar_lea.vmem %s0, 265
  %s1049 = smov 12
  %v1050 = vld [vmem:[%s1048] ss:$16 sm:%s1049]
  %vm1051 = vcmask 1043458
  %v1052 = vsel %vm1051, %v1050, %v1047
  %s1053 = scalar_lea.vmem %s0, 265
  %s1054 = smov 48
  %v1055 = vld [vmem:[%s1053] ss:$16 sm:%s1054]
  %vm1056 = vcmask 1045508
  %v1057 = vsel %vm1056, %v1055, %v1052
  %s1058 = scalar_lea.vmem %s0, 265
  %s1059 = smov 192
  %v1060 = vld [vmem:[%s1058] ss:$16 sm:%s1059]
  %vm1061 = vcmask 1047558
  %v1062 = vsel %vm1061, %v1060, %v1057
  %1063 = vrot.lane.b32.xlu0 %v1062, 16
  %v1064 = vpop.permute.xlu0 %1063
  %vm1065 = vcmask 261248
  %s1066 = scalar_lea.vmem %s1, 40
  %1067 = vst.msk [vmem:[%s1066] sm:$0xff] %vm1065, %v1064
  %s1068 = scalar_lea.vmem %s0, 129
  %s1069 = smov 3
  %v1070 = vld [vmem:[%s1068] ss:$16 sm:%s1069]
  %s1071 = scalar_lea.vmem %s0, 129
  %s1072 = smov 12
  %v1073 = vld [vmem:[%s1071] ss:$16 sm:%s1072]
  %vm1074 = vcmask 1043458
  %v1075 = vsel %vm1074, %v1073, %v1070
  %s1076 = scalar_lea.vmem %s0, 129
  %s1077 = smov 48
  %v1078 = vld [vmem:[%s1076] ss:$16 sm:%s1077]
  %vm1079 = vcmask 1045508
  %v1080 = vsel %vm1079, %v1078, %v1075
  %s1081 = scalar_lea.vmem %s0, 129
  %s1082 = smov 192
  %v1083 = vld [vmem:[%s1081] ss:$16 sm:%s1082]
  %vm1084 = vcmask 1047558
  %v1085 = vsel %vm1084, %v1083, %v1080
  %1086 = vrot.lane.b32.xlu0 %v1085, 16
  %v1087 = vpop.permute.xlu0 %1086
  %vm1088 = vcmask 261248
  %s1089 = scalar_lea.vmem %s1, 16
  %1090 = vst.msk [vmem:[%s1089] sm:$0xff] %vm1088, %v1087
  %s1091 = scalar_lea.vmem %s0, 385
  %s1092 = smov 3
  %v1093 = vld [vmem:[%s1091] ss:$-248 sm:%s1092]
  %s1094 = scalar_lea.vmem %s0, 121
  %s1095 = smov 12
  %v1096 = vld [vmem:[%s1094] ss:$16 sm:%s1095]
  %vm1097 = vcmask 1043458
  %v1098 = vsel %vm1097, %v1096, %v1093
  %s1099 = scalar_lea.vmem %s0, 121
  %s1100 = smov 48
  %v1101 = vld [vmem:[%s1099] ss:$16 sm:%s1100]
  %vm1102 = vcmask 1045508
  %v1103 = vsel %vm1102, %v1101, %v1098
  %s1104 = scalar_lea.vmem %s0, 121
  %s1105 = smov 192
  %v1106 = vld [vmem:[%s1104] ss:$16 sm:%s1105]
  %vm1107 = vcmask 1047558
  %v1108 = vsel %vm1107, %v1106, %v1103
  %1109 = vrot.lane.b32.xlu0 %v1108, 16
  %v1110 = vpop.permute.xlu0 %1109
  %vm1111 = vcmask 261248
  %s1112 = scalar_lea.vmem %s1, 48
  %1113 = vst.msk [vmem:[%s1112] ss:$-24 sm:$0x3] %vm1111, %v1110
  %s1114 = scalar_lea.vmem %s1, 23
  %1115 = vst.msk [vmem:[%s1114] sm:$0xfc] %vm1111, %v1110
  %s1116 = scalar_lea.vmem %s0, 393
  %s1117 = smov 3
  %v1118 = vld [vmem:[%s1116] ss:$-144 sm:%s1117]
  %1119 = vrot.lane.b32.xlu0 %v1118, 16
  %v1120 = vpop.permute.xlu0 %1119
  %vm1121 = vcmask 261248
  %s1122 = scalar_lea.vmem %s1, 56
  %1123 = vst.msk [vmem:[%s1122] ss:$-25 sm:$0x3] %vm1121, %v1120

// kernel: tile.49
$region0: #{tile.49}
  %s0 = inlined_call_operand.vmem [shape: f32[9,16,16], index: 0, kind: input, shape index: {}]
  %s1 = inlined_call_operand.vmem [shape: f32[9,256], index: 1, kind: output, shape index: {}]
  %v2 = vld [vmem:[%s0] ss:$8 sm:$0xf]
  %v3 = vld [vmem:[%s0] ss:$8 sm:$0xf0]
  %vm4 = vcmask 1047556
  %v5 = vsel %vm4, %v3, %v2
  %vm6 = vcmask 130048
  %7 = vst.msk [vmem:[%s1] ss:$8 sm:$0x3] %vm6, %v5
  %s8 = scalar_lea.vmem %s1, 4294967281
  %9 = vst.msk [vmem:[%s8] ss:$8 sm:$0xc] %vm6, %v5
  %s10 = scalar_lea.vmem %s1, 4294967266
  %11 = vst.msk [vmem:[%s10] ss:$8 sm:$0x30] %vm6, %v5
  %s12 = scalar_lea.vmem %s1, 4294967251
  %13 = vst.msk [vmem:[%s12] ss:$8 sm:$0xc0] %vm6, %v5
  %s14 = scalar_lea.vmem %s0, 64
  %v15 = vld [vmem:[%s14] ss:$8 sm:$0xf]
  %s16 = scalar_lea.vmem %s0, 64
  %v17 = vld [vmem:[%s16] ss:$8 sm:$0xf0]
  %vm18 = vcmask 1047556
  %v19 = vsel %vm18, %v17, %v15
  %vm20 = vcmask 130048
  %s21 = scalar_lea.vmem %s1, 4
  %22 = vst.msk [vmem:[%s21] ss:$8 sm:$0x3] %vm20, %v19
  %s23 = scalar_lea.vmem %s1, 4294967285
  %24 = vst.msk [vmem:[%s23] ss:$8 sm:$0xc] %vm20, %v19
  %s25 = scalar_lea.vmem %s1, 4294967270
  %26 = vst.msk [vmem:[%s25] ss:$8 sm:$0x30] %vm20, %v19
  %s27 = scalar_lea.vmem %s1, 4294967255
  %28 = vst.msk [vmem:[%s27] ss:$8 sm:$0xc0] %vm20, %v19
  %s29 = scalar_lea.vmem %s0, 128
  %s30 = smov 3
  %v31 = vld [vmem:[%s29] ss:$8 sm:%s30]
  %vm32 = vcmask 130048
  %s33 = scalar_lea.vmem %s1, 16
  %34 = vst.msk [vmem:[%s33] ss:$8 sm:$0x3] %vm32, %v31
  %s35 = scalar_lea.vmem %s0, 7
  %s36 = smov 3
  %v37 = vld [vmem:[%s35] ss:$16 sm:%s36]
  %s38 = scalar_lea.vmem %s0, 7
  %s39 = smov 12
  %v40 = vld [vmem:[%s38] ss:$16 sm:%s39]
  %vm41 = vcmask 1043458
  %v42 = vsel %vm41, %v40, %v37
  %s43 = scalar_lea.vmem %s0, 7
  %s44 = smov 48
  %v45 = vld [vmem:[%s43] ss:$16 sm:%s44]
  %vm46 = vcmask 1045508
  %v47 = vsel %vm46, %v45, %v42
  %s48 = scalar_lea.vmem %s0, 7
  %s49 = smov 192
  %v50 = vld [vmem:[%s48] ss:$16 sm:%s49]
  %vm51 = vcmask 1047558
  %v52 = vsel %vm51, %v50, %v47
  %53 = vrot.lane.b32.xlu0 %v52, 112
  %v54 = vpop.permute.xlu0 %53
  %vm55 = vcmask 1048448
  %56 = vst.msk [vmem:[%s1] sm:$0xff] %vm55, %v54
  %s57 = scalar_lea.vmem %s0, 15
  %s58 = smov 3
  %v59 = vld [vmem:[%s57] ss:$16 sm:%s58]
  %s60 = scalar_lea.vmem %s0, 15
  %s61 = smov 12
  %v62 = vld [vmem:[%s60] ss:$16 sm:%s61]
  %vm63 = vcmask 1043458
  %v64 = vsel %vm63, %v62, %v59
  %s65 = scalar_lea.vmem %s0, 15
  %s66 = smov 48
  %v67 = vld [vmem:[%s65] ss:$16 sm:%s66]
  %vm68 = vcmask 1045508
  %v69 = vsel %vm68, %v67, %v64
  %s70 = scalar_lea.vmem %s0, 15
  %s71 = smov 192
  %v72 = vld [vmem:[%s70] ss:$16 sm:%s71]
  %vm73 = vcmask 1047558
  %v74 = vsel %vm73, %v72, %v69
  %75 = vrot.lane.b32.xlu0 %v74, 112
  %v76 = vpop.permute.xlu0 %75
  %vm77 = vcmask 1048448
  %s78 = scalar_lea.vmem %s1, 8
  %79 = vst.msk [vmem:[%s78] sm:$0xff] %vm77, %v76
  %s80 = scalar_lea.vmem %s0, 135
  %s81 = smov 3
  %v82 = vld [vmem:[%s80] ss:$8 sm:%s81]
  %83 = vrot.lane.b32.xlu0 %v82, 112
  %v84 = vpop.permute.xlu0 %83
  %vm85 = vcmask 1048448
  %s86 = scalar_lea.vmem %s1, 16
  %87 = vst.msk [vmem:[%s86] ss:$8 sm:$0x3] %vm85, %v84
  %s88 = scalar_lea.vmem %s0, 6
  %s89 = smov 3
  %v90 = vld [vmem:[%s88] ss:$16 sm:%s89]
  %s91 = scalar_lea.vmem %s0, 6
  %s92 = smov 12
  %v93 = vld [vmem:[%s91] ss:$16 sm:%s92]
  %vm94 = vcmask 1043458
  %v95 = vsel %vm94, %v93, %v90
  %s96 = scalar_lea.vmem %s0, 6
  %s97 = smov 48
  %v98 = vld [vmem:[%s96] ss:$16 sm:%s97]
  %vm99 = vcmask 1045508
  %v100 = vsel %vm99, %v98, %v95
  %s101 = scalar_lea.vmem %s0, 6
  %s102 = smov 192
  %v103 = vld [vmem:[%s101] ss:$16 sm:%s102]
  %vm104 = vcmask 1047558
  %v105 = vsel %vm104, %v103, %v100
  %106 = vrot.lane.b32.xlu0 %v105, 96
  %v107 = vpop.permute.xlu0 %106
  %vm108 = vcmask 917248
  %109 = vst.msk [vmem:[%s1] sm:$0xff] %vm108, %v107
  %s110 = scalar_lea.vmem %s0, 14
  %s111 = smov 3
  %v112 = vld [vmem:[%s110] ss:$16 sm:%s111]
  %s113 = scalar_lea.vmem %s0, 14
  %s114 = smov 12
  %v115 = vld [vmem:[%s113] ss:$16 sm:%s114]
  %vm116 = vcmask 1043458
  %v117 = vsel %vm116, %v115, %v112
  %s118 = scalar_lea.vmem %s0, 14
  %s119 = smov 48
  %v120 = vld [vmem:[%s118] ss:$16 sm:%s119]
  %vm121 = vcmask 1045508
  %v122 = vsel %vm121, %v120, %v117
  %s123 = scalar_lea.vmem %s0, 14
  %s124 = smov 192
  %v125 = vld [vmem:[%s123] ss:$16 sm:%s124]
  %vm126 = vcmask 1047558
  %v127 = vsel %vm126, %v125, %v122
  %128 = vrot.lane.b32.xlu0 %v127, 96
  %v129 = vpop.permute.xlu0 %128
  %vm130 = vcmask 917248
  %s131 = scalar_lea.vmem %s1, 8
  %132 = vst.msk [vmem:[%s131] sm:$0xff] %vm130, %v129
  %s133 = scalar_lea.vmem %s0, 134
  %s134 = smov 3
  %v135 = vld [vmem:[%s133] ss:$8 sm:%s134]
  %136 = vrot.lane.b32.xlu0 %v135, 96
  %v137 = vpop.permute.xlu0 %136
  %vm138 = vcmask 917248
  %s139 = scalar_lea.vmem %s1, 16
  %140 = vst.msk [vmem:[%s139] ss:$8 sm:$0x3] %vm138, %v137
  %s141 = scalar_lea.vmem %s0, 5
  %s142 = smov 3
  %v143 = vld [vmem:[%s141] ss:$16 sm:%s142]
  %s144 = scalar_lea.vmem %s0, 5
  %s145 = smov 12
  %v146 = vld [vmem:[%s144] ss:$16 sm:%s145]
  %vm147 = vcmask 1043458
  %v148 = vsel %vm147, %v146, %v143
  %s149 = scalar_lea.vmem %s0, 5
  %s150 = smov 48
  %v151 = vld [vmem:[%s149] ss:$16 sm:%s150]
  %vm152 = vcmask 1045508
  %v153 = vsel %vm152, %v151, %v148
  %s154 = scalar_lea.vmem %s0, 5
  %s155 = smov 192
  %v156 = vld [vmem:[%s154] ss:$16 sm:%s155]
  %vm157 = vcmask 1047558
  %v158 = vsel %vm157, %v156, %v153
  %159 = vrot.lane.b32.xlu0 %v158, 80
  %v160 = vpop.permute.xlu0 %159
  %vm161 = vcmask 786048
  %162 = vst.msk [vmem:[%s1] sm:$0xff] %vm161, %v160
  %s163 = scalar_lea.vmem %s0, 13
  %s164 = smov 3
  %v165 = vld [vmem:[%s163] ss:$16 sm:%s164]
  %s166 = scalar_lea.vmem %s0, 13
  %s167 = smov 12
  %v168 = vld [vmem:[%s166] ss:$16 sm:%s167]
  %vm169 = vcmask 1043458
  %v170 = vsel %vm169, %v168, %v165
  %s171 = scalar_lea.vmem %s0, 13
  %s172 = smov 48
  %v173 = vld [vmem:[%s171] ss:$16 sm:%s172]
  %vm174 = vcmask 1045508
  %v175 = vsel %vm174, %v173, %v170
  %s176 = scalar_lea.vmem %s0, 13
  %s177 = smov 192
  %v178 = vld [vmem:[%s176] ss:$16 sm:%s177]
  %vm179 = vcmask 1047558
  %v180 = vsel %vm179, %v178, %v175
  %181 = vrot.lane.b32.xlu0 %v180, 80
  %v182 = vpop.permute.xlu0 %181
  %vm183 = vcmask 786048
  %s184 = scalar_lea.vmem %s1, 8
  %185 = vst.msk [vmem:[%s184] sm:$0xff] %vm183, %v182
  %s186 = scalar_lea.vmem %s0, 133
  %s187 = smov 3
  %v188 = vld [vmem:[%s186] ss:$8 sm:%s187]
  %189 = vrot.lane.b32.xlu0 %v188, 80
  %v190 = vpop.permute.xlu0 %189
  %vm191 = vcmask 786048
  %s192 = scalar_lea.vmem %s1, 16
  %193 = vst.msk [vmem:[%s192] ss:$8 sm:$0x3] %vm191, %v190
  %s194 = scalar_lea.vmem %s0, 4
  %s195 = smov 3
  %v196 = vld [vmem:[%s194] ss:$16 sm:%s195]
  %s197 = scalar_lea.vmem %s0, 4
  %s198 = smov 12
  %v199 = vld [vmem:[%s197] ss:$16 sm:%s198]
  %vm200 = vcmask 1043458
  %v201 = vsel %vm200, %v199, %v196
  %s202 = scalar_lea.vmem %s0, 4
  %s203 = smov 48
  %v204 = vld [vmem:[%s202] ss:$16 sm:%s203]
  %vm205 = vcmask 1045508
  %v206 = vsel %vm205, %v204, %v201
  %s207 = scalar_lea.vmem %s0, 4
  %s208 = smov 192
  %v209 = vld [vmem:[%s207] ss:$16 sm:%s208]
  %vm210 = vcmask 1047558
  %v211 = vsel %vm210, %v209, %v206
  %212 = vrot.lane.b32.xlu0 %v211, 64
  %v213 = vpop.permute.xlu0 %212
  %vm214 = vcmask 654848
  %215 = vst.msk [vmem:[%s1] sm:$0xff] %vm214, %v213
  %s216 = scalar_lea.vmem %s0, 12
  %s217 = smov 3
  %v218 = vld [vmem:[%s216] ss:$16 sm:%s217]
  %s219 = scalar_lea.vmem %s0, 12
  %s220 = smov 12
  %v221 = vld [vmem:[%s219] ss:$16 sm:%s220]
  %vm222 = vcmask 1043458
  %v223 = vsel %vm222, %v221, %v218
  %s224 = scalar_lea.vmem %s0, 12
  %s225 = smov 48
  %v226 = vld [vmem:[%s224] ss:$16 sm:%s225]
  %vm227 = vcmask 1045508
  %v228 = vsel %vm227, %v226, %v223
  %s229 = scalar_lea.vmem %s0, 12
  %s230 = smov 192
  %v231 = vld [vmem:[%s229] ss:$16 sm:%s230]
  %vm232 = vcmask 1047558
  %v233 = vsel %vm232, %v231, %v228
  %234 = vrot.lane.b32.xlu0 %v233, 64
  %v235 = vpop.permute.xlu0 %234
  %vm236 = vcmask 654848
  %s237 = scalar_lea.vmem %s1, 8
  %238 = vst.msk [vmem:[%s237] sm:$0xff] %vm236, %v235
  %s239 = scalar_lea.vmem %s0, 132
  %s240 = smov 3
  %v241 = vld [vmem:[%s239] ss:$8 sm:%s240]
  %242 = vrot.lane.b32.xlu0 %v241, 64
  %v243 = vpop.permute.xlu0 %242
  %vm244 = vcmask 654848
  %s245 = scalar_lea.vmem %s1, 16
  %246 = vst.msk [vmem:[%s245] ss:$8 sm:$0x3] %vm244, %v243
  %s247 = scalar_lea.vmem %s0, 3
  %s248 = smov 3
  %v249 = vld [vmem:[%s247] ss:$16 sm:%s248]
  %s250 = scalar_lea.vmem %s0, 3
  %s251 = smov 12
  %v252 = vld [vmem:[%s250] ss:$16 sm:%s251]
  %vm253 = vcmask 1043458
  %v254 = vsel %vm253, %v252, %v249
  %s255 = scalar_lea.vmem %s0, 3
  %s256 = smov 48
  %v257 = vld [vmem:[%s255] ss:$16 sm:%s256]
  %vm258 = vcmask 1045508
  %v259 = vsel %vm258, %v257, %v254
  %s260 = scalar_lea.vmem %s0, 3
  %s261 = smov 192
  %v262 = vld [vmem:[%s260] ss:$16 sm:%s261]
  %vm263 = vcmask 1047558
  %v264 = vsel %vm263, %v262, %v259
  %265 = vrot.lane.b32.xlu0 %v264, 48
  %v266 = vpop.permute.xlu0 %265
  %vm267 = vcmask 523648
  %268 = vst.msk [vmem:[%s1] sm:$0xff] %vm267, %v266
  %s269 = scalar_lea.vmem %s0, 11
  %s270 = smov 3
  %v271 = vld [vmem:[%s269] ss:$16 sm:%s270]
  %s272 = scalar_lea.vmem %s0, 11
  %s273 = smov 12
  %v274 = vld [vmem:[%s272] ss:$16 sm:%s273]
  %vm275 = vcmask 1043458
  %v276 = vsel %vm275, %v274, %v271
  %s277 = scalar_lea.vmem %s0, 11
  %s278 = smov 48
  %v279 = vld [vmem:[%s277] ss:$16 sm:%s278]
  %vm280 = vcmask 1045508
  %v281 = vsel %vm280, %v279, %v276
  %s282 = scalar_lea.vmem %s0, 11
  %s283 = smov 192
  %v284 = vld [vmem:[%s282] ss:$16 sm:%s283]
  %vm285 = vcmask 1047558
  %v286 = vsel %vm285, %v284, %v281
  %287 = vrot.lane.b32.xlu0 %v286, 48
  %v288 = vpop.permute.xlu0 %287
  %vm289 = vcmask 523648
  %s290 = scalar_lea.vmem %s1, 8
  %291 = vst.msk [vmem:[%s290] sm:$0xff] %vm289, %v288
  %s292 = scalar_lea.vmem %s0, 131
  %s293 = smov 3
  %v294 = vld [vmem:[%s292] ss:$8 sm:%s293]
  %295 = vrot.lane.b32.xlu0 %v294, 48
  %v296 = vpop.permute.xlu0 %295
  %vm297 = vcmask 523648
  %s298 = scalar_lea.vmem %s1, 16
  %299 = vst.msk [vmem:[%s298] ss:$8 sm:$0x3] %vm297, %v296
  %s300 = scalar_lea.vmem %s0, 2
  %s301 = smov 3
  %v302 = vld [vmem:[%s300] ss:$16 sm:%s301]
  %s303 = scalar_lea.vmem %s0, 2
  %s304 = smov 12
  %v305 = vld [vmem:[%s303] ss:$16 sm:%s304]
  %vm306 = vcmask 1043458
  %v307 = vsel %vm306, %v305, %v302
  %s308 = scalar_lea.vmem %s0, 2
  %s309 = smov 48
  %v310 = vld [vmem:[%s308] ss:$16 sm:%s309]
  %vm311 = vcmask 1045508
  %v312 = vsel %vm311, %v310, %v307
  %s313 = scalar_lea.vmem %s0, 2
  %s314 = smov 192
  %v315 = vld [vmem:[%s313] ss:$16 sm:%s314]
  %vm316 = vcmask 1047558
  %v317 = vsel %vm316, %v315, %v312
  %318 = vrot.lane.b32.xlu0 %v317, 32
  %v319 = vpop.permute.xlu0 %318
  %vm320 = vcmask 392448
  %321 = vst.msk [vmem:[%s1] sm:$0xff] %vm320, %v319
  %s322 = scalar_lea.vmem %s0, 10
  %s323 = smov 3
  %v324 = vld [vmem:[%s322] ss:$16 sm:%s323]
  %s325 = scalar_lea.vmem %s0, 10
  %s326 = smov 12
  %v327 = vld [vmem:[%s325] ss:$16 sm:%s326]
  %vm328 = vcmask 1043458
  %v329 = vsel %vm328, %v327, %v324
  %s330 = scalar_lea.vmem %s0, 10
  %s331 = smov 48
  %v332 = vld [vmem:[%s330] ss:$16 sm:%s331]
  %vm333 = vcmask 1045508
  %v334 = vsel %vm333, %v332, %v329
  %s335 = scalar_lea.vmem %s0, 10
  %s336 = smov 192
  %v337 = vld [vmem:[%s335] ss:$16 sm:%s336]
  %vm338 = vcmask 1047558
  %v339 = vsel %vm338, %v337, %v334
  %340 = vrot.lane.b32.xlu0 %v339, 32
  %v341 = vpop.permute.xlu0 %340
  %vm342 = vcmask 392448
  %s343 = scalar_lea.vmem %s1, 8
  %344 = vst.msk [vmem:[%s343] sm:$0xff] %vm342, %v341
  %s345 = scalar_lea.vmem %s0, 130
  %s346 = smov 3
  %v347 = vld [vmem:[%s345] ss:$8 sm:%s346]
  %348 = vrot.lane.b32.xlu0 %v347, 32
  %v349 = vpop.permute.xlu0 %348
  %vm350 = vcmask 392448
  %s351 = scalar_lea.vmem %s1, 16
  %352 = vst.msk [vmem:[%s351] ss:$8 sm:$0x3] %vm350, %v349
  %s353 = scalar_lea.vmem %s0, 1
  %s354 = smov 3
  %v355 = vld [vmem:[%s353] ss:$16 sm:%s354]
  %s356 = scalar_lea.vmem %s0, 1
  %s357 = smov 12
  %v358 = vld [vmem:[%s356] ss:$16 sm:%s357]
  %vm359 = vcmask 1043458
  %v360 = vsel %vm359, %v358, %v355
  %s361 = scalar_lea.vmem %s0, 1
  %s362 = smov 48
  %v363 = vld [vmem:[%s361] ss:$16 sm:%s362]
  %vm364 = vcmask 1045508
  %v365 = vsel %vm364, %v363, %v360
  %s366 = scalar_lea.vmem %s0, 1
  %s367 = smov 192
  %v368 = vld [vmem:[%s366] ss:$16 sm:%s367]
  %vm369 = vcmask 1047558
  %v370 = vsel %vm369, %v368, %v365
  %371 = vrot.lane.b32.xlu0 %v370, 16
  %v372 = vpop.permute.xlu0 %371
  %vm373 = vcmask 261248
  %374 = vst.msk [vmem:[%s1] sm:$0xff] %vm373, %v372
  %s375 = scalar_lea.vmem %s0, 9
  %s376 = smov 3
  %v377 = vld [vmem:[%s375] ss:$16 sm:%s376]
  %s378 = scalar_lea.vmem %s0, 9
  %s379 = smov 12
  %v380 = vld [vmem:[%s378] ss:$16 sm:%s379]
  %vm381 = vcmask 1043458
  %v382 = vsel %vm381, %v380, %v377
  %s383 = scalar_lea.vmem %s0, 9
  %s384 = smov 48
  %v385 = vld [vmem:[%s383] ss:$16 sm:%s384]
  %vm386 = vcmask 1045508
  %v387 = vsel %vm386, %v385, %v382
  %s388 = scalar_lea.vmem %s0, 9
  %s389 = smov 192
  %v390 = vld [vmem:[%s388] ss:$16 sm:%s389]
  %vm391 = vcmask 1047558
  %v392 = vsel %vm391, %v390, %v387
  %393 = vrot.lane.b32.xlu0 %v392, 16
  %v394 = vpop.permute.xlu0 %393
  %vm395 = vcmask 261248
  %s396 = scalar_lea.vmem %s1, 8
  %397 = vst.msk [vmem:[%s396] sm:$0xff] %vm395, %v394
  %s398 = scalar_lea.vmem %s0, 129
  %s399 = smov 3
  %v400 = vld [vmem:[%s398] ss:$8 sm:%s399]
  %401 = vrot.lane.b32.xlu0 %v400, 16
  %v402 = vpop.permute.xlu0 %401
  %vm403 = vcmask 261248
  %s404 = scalar_lea.vmem %s1, 16
  %405 = vst.msk [vmem:[%s404] ss:$8 sm:$0x3] %vm403, %v402

// kernel: tile.43
$region0: #{tile.43}
  #allocation0 [shape = 's32[1]{0}', space=sflag, size = 0x4, scoped, tag = 'scoped memory for tile.43']
  %s0 = inlined_call_operand.vmem [shape: f32[16], index: 0, kind: input, shape index: {}]
  %s1 = inlined_call_operand.vmem [shape: f32[16,16], index: 1, kind: output, shape index: {}]
  // Predicated region
  $region2: #{tile.43} parent=0 // pred_check
    _
  $region3: #{tile.43} parent=0 // pred_check_branch
    %3 = sbr.rel (0) target = $region5
  $region4: #{tile.43} parent=0 // pred_region
    _
  $region5: #{tile.43} parent=0 // pred_fallthru
    _
  %v4 = vld [vmem:[%s0] ss:$0 sm:$0xff]
  %5 = vst [vmem:[%s1] sm:$0xff] %v4
  %s6 = scalar_lea.vmem %s1, 8
  %7 = vst [vmem:[%s6] sm:$0xff] %v4

// kernel: tile.44
$region0: #{tile.44}
  %s0 = inlined_call_operand.vmem [shape: f32[16,16], index: 0, kind: input, shape index: {}]
  %s1 = inlined_call_operand.vmem [shape: f32[1,256], index: 1, kind: output, shape index: {}]
  $region1: #{tile.44} parent=0
    #allocation0 [shape = 'u8[8192]{0}', space=vmem, size = 0x2000, scoped, tag = 'scoped mem for output reshape']
    %s2 = smov 3
    %v3 = vld [vmem:[%s0] ss:$8 sm:%s2]
    %vm4 = vcmask 130048
    %5 = vst.msk [vmem:[#allocation0] ss:$8 sm:$0x3] %vm4, %v3
    %s6 = scalar_lea.vmem %s0, 7
    %s7 = smov 3
    %v8 = vld [vmem:[%s6] ss:$8 sm:%s7]
    %9 = vrot.lane.b32.xlu0 %v8, 112
    %v10 = vpop.permute.xlu0 %9
    %vm11 = vcmask 1048448
    %12 = vst.msk [vmem:[#allocation0] ss:$8 sm:$0x3] %vm11, %v10
    %s13 = scalar_lea.vmem %s0, 6
    %s14 = smov 3
    %v15 = vld [vmem:[%s13] ss:$8 sm:%s14]
    %16 = vrot.lane.b32.xlu0 %v15, 96
    %v17 = vpop.permute.xlu0 %16
    %vm18 = vcmask 917248
    %19 = vst.msk [vmem:[#allocation0] ss:$8 sm:$0x3] %vm18, %v17
    %s20 = scalar_lea.vmem %s0, 5
    %s21 = smov 3
    %v22 = vld [vmem:[%s20] ss:$8 sm:%s21]
    %23 = vrot.lane.b32.xlu0 %v22, 80
    %v24 = vpop.permute.xlu0 %23
    %vm25 = vcmask 786048
    %26 = vst.msk [vmem:[#allocation0] ss:$8 sm:$0x3] %vm25, %v24
    %s27 = scalar_lea.vmem %s0, 4
    %s28 = smov 3
    %v29 = vld [vmem:[%s27] ss:$8 sm:%s28]
    %30 = vrot.lane.b32.xlu0 %v29, 64
    %v31 = vpop.permute.xlu0 %30
    %vm32 = vcmask 654848
    %33 = vst.msk [vmem:[#allocation0] ss:$8 sm:$0x3] %vm32, %v31
    %s34 = scalar_lea.vmem %s0, 3
    %s35 = smov 3
    %v36 = vld [vmem:[%s34] ss:$8 sm:%s35]
    %37 = vrot.lane.b32.xlu0 %v36, 48
    %v38 = vpop.permute.xlu0 %37
    %vm39 = vcmask 523648
    %40 = vst.msk [vmem:[#allocation0] ss:$8 sm:$0x3] %vm39, %v38
    %s41 = scalar_lea.vmem %s0, 2
    %s42 = smov 3
    %v43 = vld [vmem:[%s41] ss:$8 sm:%s42]
    %44 = vrot.lane.b32.xlu0 %v43, 32
    %v45 = vpop.permute.xlu0 %44
    %vm46 = vcmask 392448
    %47 = vst.msk [vmem:[#allocation0] ss:$8 sm:$0x3] %vm46, %v45
    %s48 = scalar_lea.vmem %s0, 1
    %s49 = smov 3
    %v50 = vld [vmem:[%s48] ss:$8 sm:%s49]
    %51 = vrot.lane.b32.xlu0 %v50, 16
    %v52 = vpop.permute.xlu0 %51
    %vm53 = vcmask 261248
    %54 = vst.msk [vmem:[#allocation0] ss:$8 sm:$0x3] %vm53, %v52
    %s56 = sshllo.u32 0, 1
    %v58 = vld [vmem:[#allocation0] sm:%s56]
    %s59 = sshllo.u32 0, 1
    %60 = vst [vmem:[%s1] sm:%s59] %v58
    %s61 = scalar_lea.vmem [#allocation0], 8
    %v62 = vld [vmem:[%s61] sm:%s56]
    %s63 = sshllo.u32 0, 1
    %s64 = scalar_lea.vmem %s1, 1
    %65 = vst [vmem:[%s64] sm:%s63] %v62

// kernel: r_efem_forward.1
$region0: #{r_efem_forward.1}
  #allocation0 [shape = 'u32[]', space=smem, size = 0x4, offset = 0x4, fixed_abs, tag = 'smem constant byte address 0x4 - core index']
  #allocation1 [shape = 'u32[144,128]{1,0:T(1,128)}', space=vmem, size = 0x12000, scoped, tag = 'internal scratch']
  #allocation2 [shape = 'f32[32,512]{1,0:T(8,128)}', space=vmem, size = 0x10000, scoped, tag = 'scratch operand']
  %s0 = inlined_call_operand.vmem [shape: f32[2,16,256], index: 0, kind: input, shape index: {}]
  %s1 = inlined_call_operand.vmem [shape: bf16[256,256], index: 1, kind: input, shape index: {}]
  %s2 = inlined_call_operand.vmem [shape: f32[1,256], index: 2, kind: input, shape index: {}]
  %s3 = inlined_call_operand.vmem [shape: f32[25,256], index: 3, kind: input, shape index: {}]
  %s4 = inlined_call_operand.vmem [shape: f32[1,256], index: 4, kind: input, shape index: {}]
  %s5 = inlined_call_operand.vmem [shape: f32[9,256], index: 5, kind: input, shape index: {}]
  %s6 = inlined_call_operand.vmem [shape: f32[1,256], index: 6, kind: input, shape index: {}]
  %s7 = inlined_call_operand.vmem [shape: bf16[256,256], index: 7, kind: input, shape index: {}]
  %s8 = inlined_call_operand.vmem [shape: f32[1,256], index: 8, kind: input, shape index: {}]
  %s9 = inlined_call_operand.vmem [shape: f32[2,16,256], index: 9, kind: output, shape index: {}]
  %s10 = sld [smem:[#allocation0]]
  $region69: #{r_efem_forward.1} parent=0
    _
  %s12 = ssub.s32 1, %s10
  %s13 = scalar_select 0, %s12, %s10
  loop: start=0, step=1, limit=4
  $region2: #{r_efem_forward.1} parent=0 // loop_pre_header
    _
  $region3: #{r_efem_forward.1} parent=0 // loop_header
    %s15 = sphi 0, %s19
    %p16 = scmp.ge.s32.totalorder %s15, 4
    %s25 = sphi 0, %s27
    %s28 = sphi 0, %s25
    %s29 = sphi 0, %s28
    %s45 = sphi 0, %s29
    %s49 = sphi 0, %s49
    %s51 = sphi 0, %s49
    %s52 = sphi 0, %s51
    %s66 = sphi 0, %s52
    %s70 = sphi 0, %s70
    %s72 = sphi 0, %s70
    %s73 = sphi 0, %s72
    %s87 = sphi 0, %s73
    %s91 = sphi 0, %s91
    %s93 = sphi 0, %s91
    %s94 = sphi 0, %s93
    %s108 = sphi 0, %s94
    %s112 = sphi 0, %s112
    %s114 = sphi 0, %s112
    %s115 = sphi 0, %s114
    %s129 = sphi 0, %s115
    %s133 = sphi 0, %s133
    %s135 = sphi 0, %s133
    %s136 = sphi 0, %s135
    %s150 = sphi 0, %s136
    %s154 = sphi 0, %s154
    %s156 = sphi 0, %s154
    %s157 = sphi 0, %s156
    %s171 = sphi 0, %s157
    %s175 = sphi 0, %s175
    %s177 = sphi 0, %s175
    %s178 = sphi 0, %s177
    %s192 = sphi 0, %s178
    %s196 = sphi 0, %s196
    %s198 = sphi 0, %s196
    %s199 = sphi 0, %s198
    %s213 = sphi 0, %s199
    %s219 = sphi 0, %s221
    %s222 = sphi 0, %s219
    %s223 = sphi 0, %s222
    %s239 = sphi 0, %s223
  $region4: #{r_efem_forward.1} parent=0 // loop_header_branch
    %18 = sbr.rel (%p16) target = $region8
  $region5: #{r_efem_forward.1} parent=0 // loop_body
    %s20 = ssub.s32 %s15, 1
    %s21 = ssub.s32 %s15, 2
    %s22 = sadd.s32 %s15, 1
    %s23 = ssub.s32 %s15, %s22
    %p24 = scmp.eq.s32.totalorder %s23, 0
    %s26 = sadd.s32 %s25, 1
    %s27 = scalar_select %p24, %s25, %s26
    %p30 = pneg %p24
    %p31 = scmp.eq.s32.totalorder %s15, 1
    %p32 = por %p30, %p31
    %p33 = scmp.ne.s32.totalorder %s25, %s28
    %p34 = scmp.eq.s32.totalorder %s15, 0
    %p35 = por %p33, %p34
    %p36 = scmp.ne.s32.totalorder %s25, %s28
    %p37 = scmp.eq.s32.totalorder %s20, 1
    %p38 = por %p36, %p37
    %p39 = scmp.ne.s32.totalorder %s28, %s29
    %p40 = scmp.eq.s32.totalorder %s20, 0
    %p41 = por %p39, %p40
    %p42 = scmp.ne.s32.totalorder %s28, %s29
    %p43 = scmp.eq.s32.totalorder %s21, 1
    %p44 = por %p42, %p43
    %p46 = scmp.ne.s32.totalorder %s29, %s45
    %p47 = scmp.eq.s32.totalorder %s21, 0
    %p48 = por %p46, %p47
    %s50 = sadd.s32 %s49, 1
    %p53 = scmp.eq.s32.totalorder %s15, 1
    %p54 = scmp.ne.s32.totalorder %s49, %s51
    %p55 = scmp.eq.s32.totalorder %s15, 0
    %p56 = por %p54, %p55
    %p57 = scmp.ne.s32.totalorder %s49, %s51
    %p58 = scmp.eq.s32.totalorder %s20, 1
    %p59 = por %p57, %p58
    %p60 = scmp.ne.s32.totalorder %s51, %s52
    %p61 = scmp.eq.s32.totalorder %s20, 0
    %p62 = por %p60, %p61
    %p63 = scmp.ne.s32.totalorder %s51, %s52
    %p64 = scmp.eq.s32.totalorder %s21, 1
    %p65 = por %p63, %p64
    %p67 = scmp.ne.s32.totalorder %s52, %s66
    %p68 = scmp.eq.s32.totalorder %s21, 0
    %p69 = por %p67, %p68
    %s71 = sadd.s32 %s70, 1
    %p74 = scmp.eq.s32.totalorder %s15, 1
    %p75 = scmp.ne.s32.totalorder %s70, %s72
    %p76 = scmp.eq.s32.totalorder %s15, 0
    %p77 = por %p75, %p76
    %p78 = scmp.ne.s32.totalorder %s70, %s72
    %p79 = scmp.eq.s32.totalorder %s20, 1
    %p80 = por %p78, %p79
    %p81 = scmp.ne.s32.totalorder %s72, %s73
    %p82 = scmp.eq.s32.totalorder %s20, 0
    %p83 = por %p81, %p82
    %p84 = scmp.ne.s32.totalorder %s72, %s73
    %p85 = scmp.eq.s32.totalorder %s21, 1
    %p86 = por %p84, %p85
    %p88 = scmp.ne.s32.totalorder %s73, %s87
    %p89 = scmp.eq.s32.totalorder %s21, 0
    %p90 = por %p88, %p89
    %s92 = sadd.s32 %s91, 1
    %p95 = scmp.eq.s32.totalorder %s15, 1
    %p96 = scmp.ne.s32.totalorder %s91, %s93
    %p97 = scmp.eq.s32.totalorder %s15, 0
    %p98 = por %p96, %p97
    %p99 = scmp.ne.s32.totalorder %s91, %s93
    %p100 = scmp.eq.s32.totalorder %s20, 1
    %p101 = por %p99, %p100
    %p102 = scmp.ne.s32.totalorder %s93, %s94
    %p103 = scmp.eq.s32.totalorder %s20, 0
    %p104 = por %p102, %p103
    %p105 = scmp.ne.s32.totalorder %s93, %s94
    %p106 = scmp.eq.s32.totalorder %s21, 1
    %p107 = por %p105, %p106
    %p109 = scmp.ne.s32.totalorder %s94, %s108
    %p110 = scmp.eq.s32.totalorder %s21, 0
    %p111 = por %p109, %p110
    %s113 = sadd.s32 %s112, 1
    %p116 = scmp.eq.s32.totalorder %s15, 1
    %p117 = scmp.ne.s32.totalorder %s112, %s114
    %p118 = scmp.eq.s32.totalorder %s15, 0
    %p119 = por %p117, %p118
    %p120 = scmp.ne.s32.totalorder %s112, %s114
    %p121 = scmp.eq.s32.totalorder %s20, 1
    %p122 = por %p120, %p121
    %p123 = scmp.ne.s32.totalorder %s114, %s115
    %p124 = scmp.eq.s32.totalorder %s20, 0
    %p125 = por %p123, %p124
    %p126 = scmp.ne.s32.totalorder %s114, %s115
    %p127 = scmp.eq.s32.totalorder %s21, 1
    %p128 = por %p126, %p127
    %p130 = scmp.ne.s32.totalorder %s115, %s129
    %p131 = scmp.eq.s32.totalorder %s21, 0
    %p132 = por %p130, %p131
    %s134 = sadd.s32 %s133, 1
    %p137 = scmp.eq.s32.totalorder %s15, 1
    %p138 = scmp.ne.s32.totalorder %s133, %s135
    %p139 = scmp.eq.s32.totalorder %s15, 0
    %p140 = por %p138, %p139
    %p141 = scmp.ne.s32.totalorder %s133, %s135
    %p142 = scmp.eq.s32.totalorder %s20, 1
    %p143 = por %p141, %p142
    %p144 = scmp.ne.s32.totalorder %s135, %s136
    %p145 = scmp.eq.s32.totalorder %s20, 0
    %p146 = por %p144, %p145
    %p147 = scmp.ne.s32.totalorder %s135, %s136
    %p148 = scmp.eq.s32.totalorder %s21, 1
    %p149 = por %p147, %p148
    %p151 = scmp.ne.s32.totalorder %s136, %s150
    %p152 = scmp.eq.s32.totalorder %s21, 0
    %p153 = por %p151, %p152
    %s155 = sadd.s32 %s154, 1
    %p158 = scmp.eq.s32.totalorder %s15, 1
    %p159 = scmp.ne.s32.totalorder %s154, %s156
    %p160 = scmp.eq.s32.totalorder %s15, 0
    %p161 = por %p159, %p160
    %p162 = scmp.ne.s32.totalorder %s154, %s156
    %p163 = scmp.eq.s32.totalorder %s20, 1
    %p164 = por %p162, %p163
    %p165 = scmp.ne.s32.totalorder %s156, %s157
    %p166 = scmp.eq.s32.totalorder %s20, 0
    %p167 = por %p165, %p166
    %p168 = scmp.ne.s32.totalorder %s156, %s157
    %p169 = scmp.eq.s32.totalorder %s21, 1
    %p170 = por %p168, %p169
    %p172 = scmp.ne.s32.totalorder %s157, %s171
    %p173 = scmp.eq.s32.totalorder %s21, 0
    %p174 = por %p172, %p173
    %s176 = sadd.s32 %s175, 1
    %p179 = scmp.eq.s32.totalorder %s15, 1
    %p180 = scmp.ne.s32.totalorder %s175, %s177
    %p181 = scmp.eq.s32.totalorder %s15, 0
    %p182 = por %p180, %p181
    %p183 = scmp.ne.s32.totalorder %s175, %s177
    %p184 = scmp.eq.s32.totalorder %s20, 1
    %p185 = por %p183, %p184
    %p186 = scmp.ne.s32.totalorder %s177, %s178
    %p187 = scmp.eq.s32.totalorder %s20, 0
    %p188 = por %p186, %p187
    %p189 = scmp.ne.s32.totalorder %s177, %s178
    %p190 = scmp.eq.s32.totalorder %s21, 1
    %p191 = por %p189, %p190
    %p193 = scmp.ne.s32.totalorder %s178, %s192
    %p194 = scmp.eq.s32.totalorder %s21, 0
    %p195 = por %p193, %p194
    %s197 = sadd.s32 %s196, 1
    %p200 = scmp.eq.s32.totalorder %s15, 1
    %p201 = scmp.ne.s32.totalorder %s196, %s198
    %p202 = scmp.eq.s32.totalorder %s15, 0
    %p203 = por %p201, %p202
    %p204 = scmp.ne.s32.totalorder %s196, %s198
    %p205 = scmp.eq.s32.totalorder %s20, 1
    %p206 = por %p204, %p205
    %p207 = scmp.ne.s32.totalorder %s198, %s199
    %p208 = scmp.eq.s32.totalorder %s20, 0
    %p209 = por %p207, %p208
    %p210 = scmp.ne.s32.totalorder %s198, %s199
    %p211 = scmp.eq.s32.totalorder %s21, 1
    %p212 = por %p210, %p211
    %p214 = scmp.ne.s32.totalorder %s199, %s213
    %p215 = scmp.eq.s32.totalorder %s21, 0
    %p216 = por %p214, %p215
    %s217 = ssub.s32 %s15, %s22
    %p218 = scmp.eq.s32.totalorder %s217, 0
    %s220 = sadd.s32 %s219, 1
    %s221 = scalar_select %p218, %s219, %s220
    %p224 = pneg %p218
    %p225 = scmp.eq.s32.totalorder %s15, 1
    %p226 = por %p224, %p225
    %p227 = scmp.ne.s32.totalorder %s219, %s222
    %p228 = scmp.eq.s32.totalorder %s15, 0
    %p229 = por %p227, %p228
    %p230 = scmp.ne.s32.totalorder %s219, %s222
    %p231 = scmp.eq.s32.totalorder %s20, 1
    %p232 = por %p230, %p231
    %p233 = scmp.ne.s32.totalorder %s222, %s223
    %p234 = scmp.eq.s32.totalorder %s20, 0
    %p235 = por %p233, %p234
    %p236 = scmp.ne.s32.totalorder %s222, %s223
    %p237 = scmp.eq.s32.totalorder %s21, 1
    %p238 = por %p236, %p237
    %p240 = scmp.ne.s32.totalorder %s223, %s239
    %p241 = scmp.eq.s32.totalorder %s21, 0
    %p242 = por %p240, %p241
    %p243 = scmp.le.s32.totalorder 1, %s15
    %p244 = scmp.lt.s32.totalorder %s15, 3
    %p245 = pnand %p243, %p244
    %p246 = pneg %p245
    // Predicated region
    $region9: #{r_efem_forward.1} parent=5 // pred_check
      _
    $region10: #{r_efem_forward.1} parent=5 // pred_check_branch
      %248 = sbr.rel (%p245) target = $region12
    $region11: #{r_efem_forward.1} parent=5 // pred_region
      %s249 = ssub.s32 %s15, 1
      // Predicated region
      $region13: #{r_efem_forward.1} parent=11 // pred_check
        %p250 = pneg %p62
      $region14: #{r_efem_forward.1} parent=11 // pred_check_branch
        %252 = sbr.rel (%p250) target = $region16
      $region15: #{r_efem_forward.1} parent=11 // pred_region
        _
      $region16: #{r_efem_forward.1} parent=11 // pred_fallthru
        _
      // Predicated region
      $region17: #{r_efem_forward.1} parent=11 // pred_check
        %p253 = pneg %p83
      $region18: #{r_efem_forward.1} parent=11 // pred_check_branch
        %255 = sbr.rel (%p253) target = $region20
      $region19: #{r_efem_forward.1} parent=11 // pred_region
        _
      $region20: #{r_efem_forward.1} parent=11 // pred_fallthru
        _
      // Predicated region
      $region21: #{r_efem_forward.1} parent=11 // pred_check
        %p256 = pneg %p104
      $region22: #{r_efem_forward.1} parent=11 // pred_check_branch
        %258 = sbr.rel (%p256) target = $region24
      $region23: #{r_efem_forward.1} parent=11 // pred_region
        _
      $region24: #{r_efem_forward.1} parent=11 // pred_fallthru
        _
      // Predicated region
      $region25: #{r_efem_forward.1} parent=11 // pred_check
        %p259 = pneg %p125
      $region26: #{r_efem_forward.1} parent=11 // pred_check_branch
        %261 = sbr.rel (%p259) target = $region28
      $region27: #{r_efem_forward.1} parent=11 // pred_region
        _
      $region28: #{r_efem_forward.1} parent=11 // pred_fallthru
        _
      // Predicated region
      $region29: #{r_efem_forward.1} parent=11 // pred_check
        %p262 = pneg %p146
      $region30: #{r_efem_forward.1} parent=11 // pred_check_branch
        %264 = sbr.rel (%p262) target = $region32
      $region31: #{r_efem_forward.1} parent=11 // pred_region
        _
      $region32: #{r_efem_forward.1} parent=11 // pred_fallthru
        _
      // Predicated region
      $region33: #{r_efem_forward.1} parent=11 // pred_check
        %p265 = pneg %p167
      $region34: #{r_efem_forward.1} parent=11 // pred_check_branch
        %267 = sbr.rel (%p265) target = $region36
      $region35: #{r_efem_forward.1} parent=11 // pred_region
        _
      $region36: #{r_efem_forward.1} parent=11 // pred_fallthru
        _
      // Predicated region
      $region37: #{r_efem_forward.1} parent=11 // pred_check
        %p268 = pneg %p188
      $region38: #{r_efem_forward.1} parent=11 // pred_check_branch
        %270 = sbr.rel (%p268) target = $region40
      $region39: #{r_efem_forward.1} parent=11 // pred_region
        _
      $region40: #{r_efem_forward.1} parent=11 // pred_fallthru
        _
      // Predicated region
      $region41: #{r_efem_forward.1} parent=11 // pred_check
        %p271 = pneg %p209
      $region42: #{r_efem_forward.1} parent=11 // pred_check_branch
        %273 = sbr.rel (%p271) target = $region44
      $region43: #{r_efem_forward.1} parent=11 // pred_region
        _
      $region44: #{r_efem_forward.1} parent=11 // pred_fallthru
        _
    $region12: #{r_efem_forward.1} parent=5 // pred_fallthru
      _
    %p274 = scmp.lt.s32.totalorder %s15, 2
    // Predicated region
    $region45: #{r_efem_forward.1} parent=5 // pred_check
      %p275 = pneg %p274
    $region46: #{r_efem_forward.1} parent=5 // pred_check_branch
      %277 = sbr.rel (%p275) target = $region48
    $region47: #{r_efem_forward.1} parent=5 // pred_region
      // Predicated region
      $region49: #{r_efem_forward.1} parent=47 // pred_check
        %p278 = pneg %p35
      $region50: #{r_efem_forward.1} parent=47 // pred_check_branch
        %280 = sbr.rel (%p278) target = $region52
      $region51: #{r_efem_forward.1} parent=47 // pred_region
        %p281 = scmp.lt.s32.totalorder %s15, 1
        %s282 = scalar_select %p281, %s15, 1
        %s283 = smul.addr %s282, 4
        %s284 = smul.addr %s283, 8
        %s285 = scalar_lea.vmem %s0, %s284
      $region52: #{r_efem_forward.1} parent=47 // pred_fallthru
        _
    $region48: #{r_efem_forward.1} parent=5 // pred_fallthru
      _
    %p286 = scmp.le.s32.totalorder 1, %s15
    %p287 = scmp.lt.s32.totalorder %s15, 3
    %p288 = pnand %p286, %p287
    %p289 = pneg %p288
    // Predicated region
    $region53: #{r_efem_forward.1} parent=5 // pred_check
      _
    $region54: #{r_efem_forward.1} parent=5 // pred_check_branch
      %291 = sbr.rel (%p288) target = $region56
    $region55: #{r_efem_forward.1} parent=5 // pred_region
      %s292 = ssub.s32 %s15, 1
      %p293 = scmp.lt.s32.totalorder %s20, 1
      %s294 = scalar_select %p293, %s20, 1
      %s295 = smul.addr %s294, 4
      %s296 = smul.addr %s295, 8
      %s297 = scalar_lea.vmem %s0, %s296
      %p298 = pneg %p41
      %p299 = pneg %p38
      %p300 = pneg %p62
      %p301 = pneg %p59
      %p302 = pneg %p83
      %p303 = pneg %p80
      %p304 = pneg %p104
      %p305 = pneg %p101
      %p306 = pneg %p125
      %p307 = pneg %p122
      %p308 = pneg %p146
      %p309 = pneg %p143
      %p310 = pneg %p167
      %p311 = pneg %p164
      %p312 = pneg %p188
      %p313 = pneg %p185
      %p314 = pneg %p209
      %p315 = pneg %p206
      %p316 = pneg %p235
      %p317 = pneg %p232
      %p318 = scmp.lt.s32.totalorder %s20, 1
      %s319 = scalar_select %p318, %s20, 1
      %s320 = smul.addr %s319, 4
      %s321 = smul.addr %s320, 8
      %s322 = scalar_lea.vmem %s9, %s321
      %p323 = scmp.lt.s32.totalorder %s20, 1
      %s324 = scalar_select %p323, %s20, 1
      %s325 = smul.addr %s324, 4
      %s326 = smul.addr %s325, 8
      %s327 = scalar_lea.vmem %s0, %s326
      %p328 = scmp.lt.s32.totalorder %s20, 1
      %s329 = scalar_select %p328, %s20, 1
      %s330 = smul.addr %s329, 4
      %s331 = smul.addr %s330, 8
      %s332 = scalar_lea.vmem %s9, %s331
      %v333 = vld [vmem:[%s327] sm:$0xff]
      %v334 = vld [vmem:[%s327 + $0x8] sm:$0xff]
      %v335 = vld [vmem:[%s327 + $0x10] sm:$0xff]
      %v336 = vld [vmem:[%s327 + $0x18] sm:$0xff]
      %vm337 = vcmask 1048326
      %338 = vst.msk [vmem:[#allocation2] sm:$0xc0] %vm337, 0.0
      %339 = vst [vmem:[#allocation2 + $0x8] sm:$0xc0] 0.0
      %340 = vst [vmem:[#allocation2 + $0x10] sm:$0xc0] 0.0
      %vm341 = vcmask 261126
      %342 = vst.msk [vmem:[#allocation2 + $0x18] sm:$0xc0] %vm341, 0.0
      %vm343 = vcmask 1042176
      %344 = vst.msk [vmem:[#allocation2 + $0x60] sm:$0x3] %vm343, 0.0
      %345 = vst [vmem:[#allocation2 + $0x68] sm:$0x3] 0.0
      %346 = vst [vmem:[#allocation2 + $0x70] sm:$0x3] 0.0
      %vm347 = vcmask 254976
      %348 = vst.msk [vmem:[#allocation2 + $0x78] sm:$0x3] %vm347, 0.0
      %vm349 = vcmask 1048320
      %350 = vst.msk [vmem:[#allocation2 + $0x20] sm:$0xff] %vm349, 0.0
      %351 = vst.msk [vmem:[#allocation2 + $0x40] sm:$0xff] %vm349, 0.0
      %vm352 = vcmask 261120
      %353 = vst.msk [vmem:[#allocation2 + $0x38] sm:$0xff] %vm352, 0.0
      %354 = vst.msk [vmem:[#allocation2 + $0x58] sm:$0xff] %vm352, 0.0
      %v355 = vpack.c.bf16 %v335, %v333
      %v356 = vpack.c.bf16 %v336, %v334
      %v357 = vld [vmem:[%s1] sm:$0xff]
      %v358 = vld [vmem:[%s1 + $0x8] sm:$0xff]
      %v359 = vld [vmem:[%s1 + $0x10] sm:$0xff]
      %v360 = vld [vmem:[%s1 + $0x18] sm:$0xff]
      %v361 = vld [vmem:[%s1 + $0x20] sm:$0xff]
      %v362 = vld [vmem:[%s1 + $0x28] sm:$0xff]
      %v363 = vld [vmem:[%s1 + $0x30] sm:$0xff]
      %v364 = vld [vmem:[%s1 + $0x38] sm:$0xff]
      %v365 = vld [vmem:[%s1 + $0x40] sm:$0xff]
      %v366 = vld [vmem:[%s1 + $0x48] sm:$0xff]
      %v367 = vld [vmem:[%s1 + $0x50] sm:$0xff]
      %v368 = vld [vmem:[%s1 + $0x58] sm:$0xff]
      %v369 = vld [vmem:[%s1 + $0x60] sm:$0xff]
      %v370 = vld [vmem:[%s1 + $0x68] sm:$0xff]
      %v371 = vld [vmem:[%s1 + $0x70] sm:$0xff]
      %v372 = vld [vmem:[%s1 + $0x78] sm:$0xff]
      %v373 = vld [vmem:[%s1 + $0x80] sm:$0xff]
      %v374 = vld [vmem:[%s1 + $0x88] sm:$0xff]
      %v375 = vld [vmem:[%s1 + $0x90] sm:$0xff]
      %v376 = vld [vmem:[%s1 + $0x98] sm:$0xff]
      %v377 = vld [vmem:[%s1 + $0xa0] sm:$0xff]
      %v378 = vld [vmem:[%s1 + $0xa8] sm:$0xff]
      %v379 = vld [vmem:[%s1 + $0xb0] sm:$0xff]
      %v380 = vld [vmem:[%s1 + $0xb8] sm:$0xff]
      %v381 = vld [vmem:[%s1 + $0xc0] sm:$0xff]
      %v382 = vld [vmem:[%s1 + $0xc8] sm:$0xff]
      %v383 = vld [vmem:[%s1 + $0xd0] sm:$0xff]
      %v384 = vld [vmem:[%s1 + $0xd8] sm:$0xff]
      %v385 = vld [vmem:[%s1 + $0xe0] sm:$0xff]
      %v386 = vld [vmem:[%s1 + $0xe8] sm:$0xff]
      %v387 = vld [vmem:[%s1 + $0xf0] sm:$0xff]
      %v388 = vld [vmem:[%s1 + $0xf8] sm:$0xff]
      %v389 = vld [vmem:[%s2] sm:$0x3]
      %v391 = vlaneseq
      %v392 = vshrl.u32 %v391, 7
      %v393 = vsub.s32 0, %v392
      %v394 = vrot.slane %v389, %v393
      %v395 = vlaneseq
      %v396 = vshrl.u32 %v395, 7
      %v397 = vsub.s32 1, %v396
      %v398 = vrot.slane %v389, %v397
      %v433 = vunpack.c.l.b16 %v357
      %v434 = vunpack.c.h.b16 %v357
      %v435 = vunpack.c.l.b16 %v358
      %v436 = vunpack.c.h.b16 %v358
      %v437 = vunpack.c.l.b16 %v359
      %v438 = vunpack.c.h.b16 %v359
      %v439 = vunpack.c.l.b16 %v360
      %v440 = vunpack.c.h.b16 %v360
      %v441 = vunpack.c.l.b16 %v361
      %v442 = vunpack.c.h.b16 %v361
      %v443 = vunpack.c.l.b16 %v362
      %v444 = vunpack.c.h.b16 %v362
      %v445 = vunpack.c.l.b16 %v363
      %v446 = vunpack.c.h.b16 %v363
      %v447 = vunpack.c.l.b16 %v364
      %v448 = vunpack.c.h.b16 %v364
      %v449 = vunpack.c.l.b16 %v365
      %v450 = vunpack.c.h.b16 %v365
      %v451 = vunpack.c.l.b16 %v366
      %v452 = vunpack.c.h.b16 %v366
      %v453 = vunpack.c.l.b16 %v367
      %v454 = vunpack.c.h.b16 %v367
      %v455 = vunpack.c.l.b16 %v368
      %v456 = vunpack.c.h.b16 %v368
      %v457 = vunpack.c.l.b16 %v369
      %v458 = vunpack.c.h.b16 %v369
      %v459 = vunpack.c.l.b16 %v370
      %v460 = vunpack.c.h.b16 %v370
      %v461 = vunpack.c.l.b16 %v371
      %v462 = vunpack.c.h.b16 %v371
      %v463 = vunpack.c.l.b16 %v372
      %v464 = vunpack.c.h.b16 %v372
      %v465 = vunpack.c.l.b16 %v373
      %v466 = vunpack.c.h.b16 %v373
      %v467 = vunpack.c.l.b16 %v374
      %v468 = vunpack.c.h.b16 %v374
      %v469 = vunpack.c.l.b16 %v375
      %v470 = vunpack.c.h.b16 %v375
      %v471 = vunpack.c.l.b16 %v376
      %v472 = vunpack.c.h.b16 %v376
      %v473 = vunpack.c.l.b16 %v377
      %v474 = vunpack.c.h.b16 %v377
      %v475 = vunpack.c.l.b16 %v378
      %v476 = vunpack.c.h.b16 %v378
      %v477 = vunpack.c.l.b16 %v379
      %v478 = vunpack.c.h.b16 %v379
      %v479 = vunpack.c.l.b16 %v380
      %v480 = vunpack.c.h.b16 %v380
      %v481 = vunpack.c.l.b16 %v381
      %v482 = vunpack.c.h.b16 %v381
      %v483 = vunpack.c.l.b16 %v382
      %v484 = vunpack.c.h.b16 %v382
      %v485 = vunpack.c.l.b16 %v383
      %v486 = vunpack.c.h.b16 %v383
      %v487 = vunpack.c.l.b16 %v384
      %v488 = vunpack.c.h.b16 %v384
      %v489 = vunpack.c.l.b16 %v385
      %v490 = vunpack.c.h.b16 %v385
      %v491 = vunpack.c.l.b16 %v386
      %v492 = vunpack.c.h.b16 %v386
      %v493 = vunpack.c.l.b16 %v387
      %v494 = vunpack.c.h.b16 %v387
      %v495 = vunpack.c.l.b16 %v388
      %v496 = vunpack.c.h.b16 %v388
      %v497 = vpack.c.b16 %v435, %v433
      %v498 = vpack.c.b16 %v436, %v434
      %v499 = vpack.c.b16 %v439, %v437
      %v500 = vpack.c.b16 %v440, %v438
      %v501 = vpack.c.b16 %v443, %v441
      %v502 = vpack.c.b16 %v444, %v442
      %v503 = vpack.c.b16 %v447, %v445
      %v504 = vpack.c.b16 %v448, %v446
      %v505 = vpack.c.b16 %v451, %v449
      %v506 = vpack.c.b16 %v452, %v450
      %v507 = vpack.c.b16 %v455, %v453
      %v508 = vpack.c.b16 %v456, %v454
      %v509 = vpack.c.b16 %v459, %v457
      %v510 = vpack.c.b16 %v460, %v458
      %v511 = vpack.c.b16 %v463, %v461
      %v512 = vpack.c.b16 %v464, %v462
      %v513 = vpack.c.b16 %v467, %v465
      %v514 = vpack.c.b16 %v468, %v466
      %v515 = vpack.c.b16 %v471, %v469
      %v516 = vpack.c.b16 %v472, %v470
      %v517 = vpack.c.b16 %v475, %v473
      %v518 = vpack.c.b16 %v476, %v474
      %v519 = vpack.c.b16 %v479, %v477
      %v520 = vpack.c.b16 %v480, %v478
      %v521 = vpack.c.b16 %v483, %v481
      %v522 = vpack.c.b16 %v484, %v482
      %v523 = vpack.c.b16 %v487, %v485
      %v524 = vpack.c.b16 %v488, %v486
      %v525 = vpack.c.b16 %v491, %v489
      %v526 = vpack.c.b16 %v492, %v490
      %v527 = vpack.c.b16 %v495, %v493
      %v528 = vpack.c.b16 %v496, %v494
      %561 = vmatprep.subr.bf16.mxu0 %v498
      %562 = vmatpush1.bf16.msra.mxu0 %v497
      %563 = vmatprep.subr.bf16.mxu0 %v500
      %564 = vmatpush1.bf16.msra.mxu0 %v499
      %565 = vmatprep.subr.bf16.mxu0 %v502
      %566 = vmatpush1.bf16.msra.mxu0 %v501
      %567 = vmatprep.subr.bf16.mxu0 %v504
      %568 = vmatpush1.bf16.msra.mxu0 %v503
      %569 = vmatprep.subr.bf16.mxu0 %v506
      %570 = vmatpush1.bf16.msra.mxu0 %v505
      %571 = vmatprep.subr.bf16.mxu0 %v508
      %572 = vmatpush1.bf16.msra.mxu0 %v507
      %573 = vmatprep.subr.bf16.mxu0 %v510
      %574 = vmatpush1.bf16.msra.mxu0 %v509
      %575 = vmatprep.subr.bf16.mxu0 %v512
      %576 = vmatpush1.bf16.msra.mxu0 %v511
      %577 = vmatprep.subr.bf16.mxu0 %v514
      %578 = vmatpush1.bf16.msra.mxu0 %v513
      %579 = vmatprep.subr.bf16.mxu0 %v516
      %580 = vmatpush1.bf16.msra.mxu0 %v515
      %581 = vmatprep.subr.bf16.mxu0 %v518
      %582 = vmatpush1.bf16.msra.mxu0 %v517
      %583 = vmatprep.subr.bf16.mxu0 %v520
      %584 = vmatpush1.bf16.msra.mxu0 %v519
      %585 = vmatprep.subr.bf16.mxu0 %v522
      %586 = vmatpush1.bf16.msra.mxu0 %v521
      %587 = vmatprep.subr.bf16.mxu0 %v524
      %588 = vmatpush1.bf16.msra.mxu0 %v523
      %589 = vmatprep.subr.bf16.mxu0 %v526
      %590 = vmatpush1.bf16.msra.mxu0 %v525
      %591 = vmatprep.subr.bf16.mxu0 %v528
      %592 = vmatpush1.bf16.msra.mxu0 %v527
      %593 = vmatprep.mubr.bf16.mxu0 %v356
      %594 = vmatmul.mubr.bf16.gmra.mrb[0].mxu0 %v355
      %v595 = vpop.f32.mrb[0].mxu0
      %v596 = vadd.f32 %v394, %v595
      %v597 = vpop.f32.mrb[0].mxu0
      %v598 = vadd.f32 %v398, %v597
      %v599 = vpop.f32.mrb[0].mxu0
      %v600 = vadd.f32 %v394, %v599
      %v601 = vpop.f32.mrb[0].mxu0
      %v602 = vadd.f32 %v398, %v601
      %603 = vdwg.mxu0
      %604 = vst [vmem:[#allocation2 + $0x28] sm:$0xff] %v596
      %605 = vst [vmem:[#allocation2 + $0x30] sm:$0xff] %v598
      %606 = vst [vmem:[#allocation2 + $0x48] sm:$0xff] %v600
      %607 = vst [vmem:[#allocation2 + $0x50] sm:$0xff] %v602
      %v608 = vld [vmem:[#allocation2] sm:$0xc0]
      %v609 = vld [vmem:[#allocation2 + $0x8] sm:$0xc0]
      %v610 = vld [vmem:[#allocation2 + $0x10] sm:$0xc0]
      %v611 = vld [vmem:[#allocation2 + $0x18] sm:$0xc0]
      %v612 = vld [vmem:[#allocation2 + $0x20] sm:$0xff]
      %v613 = vld [vmem:[#allocation2 + $0x28] sm:$0xff]
      %v614 = vld [vmem:[#allocation2 + $0x30] sm:$0xff]
      %v615 = vld [vmem:[#allocation2 + $0x38] sm:$0xff]
      %v616 = vld [vmem:[#allocation2 + $0x40] sm:$0x3f]
      %v617 = vld [vmem:[#allocation2 + $0x48] sm:$0x3f]
      %v618 = vld [vmem:[#allocation2 + $0x50] sm:$0x3f]
      %v619 = vld [vmem:[#allocation2 + $0x58] sm:$0x3f]
      %v620 = vld [vmem:[%s3] ss:$8 sm:$0x3]
      %v622 = vlaneseq
      %v623 = vshrl.u32 %v622, 7
      %v624 = vsub.s32 0, %v623
      %v625 = vrot.slane %v620, %v624
      %v626 = vlaneseq
      %v627 = vshrl.u32 %v626, 7
      %v628 = vsub.s32 1, %v627
      %v629 = vrot.slane %v620, %v628
      %630 = vrot.lane.b32.xlu0 %v625, 96
      %v631 = vpop.permute.xlu0 %630
      %632 = vrot.lane.b32.xlu0 %v629, 96
      %v633 = vpop.permute.xlu0 %632
      %vm634 = vcmask 785408
      %v635 = vsel %vm634, %v631, %v633
      %v639 = vmul.f32 %v608, %v631
      %v640 = vmul.f32 %v609, %v635
      %v641 = vmul.f32 %v610, %v633
      %v642 = vmul.f32 %v612, %v631
      %v643 = vmul.f32 %v613, %v635
      %v644 = vmul.f32 %v614, %v633
      %v645 = vmul.f32 %v616, %v631
      %v646 = vmul.f32 %v617, %v635
      %v647 = vmul.f32 %v618, %v633
      %v648 = vadd.f32 %v639, 0.0
      %v649 = vadd.f32 %v640, 0.0
      %v650 = vadd.f32 %v641, 0.0
      %v651 = vadd.f32 %v642, 0.0
      %v652 = vadd.f32 %v643, 0.0
      %v653 = vadd.f32 %v644, 0.0
      %v654 = vadd.f32 %v645, 0.0
      %v655 = vadd.f32 %v646, 0.0
      %v656 = vadd.f32 %v647, 0.0
      %s657 = scalar_lea.vmem %s3, 1
      %v658 = vld [vmem:[%s657] ss:$8 sm:$0x3]
      %v660 = vlaneseq
      %v661 = vshrl.u32 %v660, 7
      %v662 = vsub.s32 0, %v661
      %v663 = vrot.slane %v658, %v662
      %v664 = vlaneseq
      %v665 = vshrl.u32 %v664, 7
      %v666 = vsub.s32 1, %v665
      %v667 = vrot.slane %v658, %v666
      %668 = vrot.lane.b32.xlu0 %v663, 112
      %v669 = vpop.permute.xlu0 %668
      %670 = vrot.lane.b32.xlu0 %v667, 112
      %v671 = vpop.permute.xlu0 %670
      %vm672 = vcmask 916480
      %v673 = vsel %vm672, %v669, %v671
      %v677 = vmul.f32 %v608, %v669
      %v678 = vmul.f32 %v609, %v673
      %v679 = vmul.f32 %v610, %v671
      %v680 = vmul.f32 %v612, %v669
      %v681 = vmul.f32 %v613, %v673
      %v682 = vmul.f32 %v614, %v671
      %v683 = vmul.f32 %v616, %v669
      %v684 = vmul.f32 %v617, %v673
      %v685 = vmul.f32 %v618, %v671
      %695 = vrot.lane.b32.xlu0 %v677, 112
      %v696 = vpop.permute.xlu0 %695
      %697 = vrot.lane.b32.xlu0 %v678, 112
      %v698 = vpop.permute.xlu0 %697
      %699 = vrot.lane.b32.xlu0 %v679, 112
      %v700 = vpop.permute.xlu0 %699
      %701 = vrot.lane.b32.xlu0 %v680, 112
      %v702 = vpop.permute.xlu0 %701
      %703 = vrot.lane.b32.xlu0 %v681, 112
      %v704 = vpop.permute.xlu0 %703
      %705 = vrot.lane.b32.xlu0 %v682, 112
      %v706 = vpop.permute.xlu0 %705
      %707 = vrot.lane.b32.xlu0 %v683, 112
      %v708 = vpop.permute.xlu0 %707
      %709 = vrot.lane.b32.xlu0 %v684, 112
      %v710 = vpop.permute.xlu0 %709
      %711 = vrot.lane.b32.xlu0 %v685, 112
      %v712 = vpop.permute.xlu0 %711
      %v713 = vsel %vm672, %v696, %v698
      %v714 = vsel %vm672, %v698, %v700
      %v715 = vsel %vm672, %v702, %v704
      %v716 = vsel %vm672, %v704, %v706
      %v717 = vsel %vm672, %v708, %v710
      %v718 = vsel %vm672, %v710, %v712
      %v728 = vadd.f32 %v648, %v713
      %v729 = vadd.f32 %v649, %v714
      %v730 = vadd.f32 %v650, %v700
      %v731 = vadd.f32 %v651, %v715
      %v732 = vadd.f32 %v652, %v716
      %v733 = vadd.f32 %v653, %v706
      %v734 = vadd.f32 %v654, %v717
      %v735 = vadd.f32 %v655, %v718
      %v736 = vadd.f32 %v656, %v712
      %s737 = scalar_lea.vmem %s3, 2
      %v738 = vld [vmem:[%s737] ss:$8 sm:$0x3]
      %v740 = vlaneseq
      %v741 = vshrl.u32 %v740, 7
      %v742 = vsub.s32 0, %v741
      %v743 = vrot.slane %v738, %v742
      %v744 = vlaneseq
      %v745 = vshrl.u32 %v744, 7
      %v746 = vsub.s32 1, %v745
      %v747 = vrot.slane %v738, %v746
      %v750 = vmul.f32 %v609, %v743
      %v751 = vmul.f32 %v610, %v747
      %v752 = vmul.f32 %v613, %v743
      %v753 = vmul.f32 %v614, %v747
      %v754 = vmul.f32 %v617, %v743
      %v755 = vmul.f32 %v618, %v747
      %762 = vrot.lane.b32.xlu0 %v750, 96
      %v763 = vpop.permute.xlu0 %762
      %764 = vrot.lane.b32.xlu0 %v751, 96
      %v765 = vpop.permute.xlu0 %764
      %766 = vrot.lane.b32.xlu0 %v752, 96
      %v767 = vpop.permute.xlu0 %766
      %768 = vrot.lane.b32.xlu0 %v753, 96
      %v769 = vpop.permute.xlu0 %768
      %770 = vrot.lane.b32.xlu0 %v754, 96
      %v771 = vpop.permute.xlu0 %770
      %772 = vrot.lane.b32.xlu0 %v755, 96
      %v773 = vpop.permute.xlu0 %772
      %v774 = vsel %vm634, %v763, %v765
      %v775 = vsel %vm634, %v767, %v769
      %v776 = vsel %vm634, %v771, %v773
      %v786 = vadd.f32 %v728, %v763
      %v787 = vadd.f32 %v729, %v774
      %v788 = vadd.f32 %v730, %v765
      %v789 = vadd.f32 %v731, %v767
      %v790 = vadd.f32 %v732, %v775
      %v791 = vadd.f32 %v733, %v769
      %v792 = vadd.f32 %v734, %v771
      %v793 = vadd.f32 %v735, %v776
      %v794 = vadd.f32 %v736, %v773
      %s795 = scalar_lea.vmem %s3, 3
      %v796 = vld [vmem:[%s795] ss:$8 sm:$0x3]
      %v798 = vlaneseq
      %v799 = vshrl.u32 %v798, 7
      %v800 = vsub.s32 0, %v799
      %v801 = vrot.slane %v796, %v800
      %v802 = vlaneseq
      %v803 = vshrl.u32 %v802, 7
      %v804 = vsub.s32 1, %v803
      %v805 = vrot.slane %v796, %v804
      %806 = vrot.lane.b32.xlu0 %v801, 16
      %v807 = vpop.permute.xlu0 %806
      %808 = vrot.lane.b32.xlu0 %v805, 16
      %v809 = vpop.permute.xlu0 %808
      %vm810 = vcmask 130048
      %v811 = vsel %vm810, %v807, %v809
      %v815 = vmul.f32 %v609, %v807
      %v816 = vmul.f32 %v610, %v811
      %v817 = vmul.f32 %v611, %v809
      %v818 = vmul.f32 %v613, %v807
      %v819 = vmul.f32 %v614, %v811
      %v820 = vmul.f32 %v615, %v809
      %v821 = vmul.f32 %v617, %v807
      %v822 = vmul.f32 %v618, %v811
      %v823 = vmul.f32 %v619, %v809
      %833 = vrot.lane.b32.xlu0 %v815, 80
      %v834 = vpop.permute.xlu0 %833
      %835 = vrot.lane.b32.xlu0 %v816, 80
      %v836 = vpop.permute.xlu0 %835
      %837 = vrot.lane.b32.xlu0 %v817, 80
      %v838 = vpop.permute.xlu0 %837
      %839 = vrot.lane.b32.xlu0 %v818, 80
      %v840 = vpop.permute.xlu0 %839
      %841 = vrot.lane.b32.xlu0 %v819, 80
      %v842 = vpop.permute.xlu0 %841
      %843 = vrot.lane.b32.xlu0 %v820, 80
      %v844 = vpop.permute.xlu0 %843
      %845 = vrot.lane.b32.xlu0 %v821, 80
      %v846 = vpop.permute.xlu0 %845
      %847 = vrot.lane.b32.xlu0 %v822, 80
      %v848 = vpop.permute.xlu0 %847
      %849 = vrot.lane.b32.xlu0 %v823, 80
      %v850 = vpop.permute.xlu0 %849
      %vm851 = vcmask 654336
      %v852 = vsel %vm851, %v834, %v836
      %v853 = vsel %vm851, %v836, %v838
      %v854 = vsel %vm851, %v840, %v842
      %v855 = vsel %vm851, %v842, %v844
      %v856 = vsel %vm851, %v846, %v848
      %v857 = vsel %vm851, %v848, %v850
      %v867 = vadd.f32 %v786, %v834
      %v868 = vadd.f32 %v787, %v852
      %v869 = vadd.f32 %v788, %v853
      %v870 = vadd.f32 %v789, %v840
      %v871 = vadd.f32 %v790, %v854
      %v872 = vadd.f32 %v791, %v855
      %v873 = vadd.f32 %v792, %v846
      %v874 = vadd.f32 %v793, %v856
      %v875 = vadd.f32 %v794, %v857
      %s876 = scalar_lea.vmem %s3, 4
      %v877 = vld [vmem:[%s876] ss:$8 sm:$0x3]
      %v879 = vlaneseq
      %v880 = vshrl.u32 %v879, 7
      %v881 = vsub.s32 0, %v880
      %v882 = vrot.slane %v877, %v881
      %v883 = vlaneseq
      %v884 = vshrl.u32 %v883, 7
      %v885 = vsub.s32 1, %v884
      %v886 = vrot.slane %v877, %v885
      %887 = vrot.lane.b32.xlu0 %v882, 32
      %v888 = vpop.permute.xlu0 %887
      %889 = vrot.lane.b32.xlu0 %v886, 32
      %v890 = vpop.permute.xlu0 %889
      %v891 = vsel %vm352, %v888, %v890
      %v895 = vmul.f32 %v609, %v888
      %v896 = vmul.f32 %v610, %v891
      %v897 = vmul.f32 %v611, %v890
      %v898 = vmul.f32 %v613, %v888
      %v899 = vmul.f32 %v614, %v891
      %v900 = vmul.f32 %v615, %v890
      %v901 = vmul.f32 %v617, %v888
      %v902 = vmul.f32 %v618, %v891
      %v903 = vmul.f32 %v619, %v890
      %913 = vrot.lane.b32.xlu0 %v895, 64
      %v914 = vpop.permute.xlu0 %913
      %915 = vrot.lane.b32.xlu0 %v896, 64
      %v916 = vpop.permute.xlu0 %915
      %917 = vrot.lane.b32.xlu0 %v897, 64
      %v918 = vpop.permute.xlu0 %917
      %919 = vrot.lane.b32.xlu0 %v898, 64
      %v920 = vpop.permute.xlu0 %919
      %921 = vrot.lane.b32.xlu0 %v899, 64
      %v922 = vpop.permute.xlu0 %921
      %923 = vrot.lane.b32.xlu0 %v900, 64
      %v924 = vpop.permute.xlu0 %923
      %925 = vrot.lane.b32.xlu0 %v901, 64
      %v926 = vpop.permute.xlu0 %925
      %927 = vrot.lane.b32.xlu0 %v902, 64
      %v928 = vpop.permute.xlu0 %927
      %929 = vrot.lane.b32.xlu0 %v903, 64
      %v930 = vpop.permute.xlu0 %929
      %vm931 = vcmask 523264
      %v932 = vsel %vm931, %v914, %v916
      %v933 = vsel %vm931, %v916, %v918
      %v934 = vsel %vm931, %v920, %v922
      %v935 = vsel %vm931, %v922, %v924
      %v936 = vsel %vm931, %v926, %v928
      %v937 = vsel %vm931, %v928, %v930
      %v947 = vadd.f32 %v867, %v914
      %v948 = vadd.f32 %v868, %v932
      %v949 = vadd.f32 %v869, %v933
      %v950 = vadd.f32 %v870, %v920
      %v951 = vadd.f32 %v871, %v934
      %v952 = vadd.f32 %v872, %v935
      %v953 = vadd.f32 %v873, %v926
      %v954 = vadd.f32 %v874, %v936
      %v955 = vadd.f32 %v875, %v937
      %v956 = vld [vmem:[#allocation2] sm:$0x80]
      %v957 = vld [vmem:[#allocation2 + $0x8] sm:$0x80]
      %v958 = vld [vmem:[#allocation2 + $0x10] sm:$0x80]
      %v959 = vld [vmem:[#allocation2 + $0x18] sm:$0x80]
      %v960 = vld [vmem:[#allocation2 + $0x40] sm:$0x7f]
      %v961 = vld [vmem:[#allocation2 + $0x48] sm:$0x7f]
      %v962 = vld [vmem:[#allocation2 + $0x50] sm:$0x7f]
      %v963 = vld [vmem:[#allocation2 + $0x58] sm:$0x7f]
      %s964 = scalar_lea.vmem %s3, 5
      %v965 = vld [vmem:[%s964] ss:$8 sm:$0x3]
      %v967 = vlaneseq
      %v968 = vshrl.u32 %v967, 7
      %v969 = vsub.s32 0, %v968
      %v970 = vrot.slane %v965, %v969
      %v971 = vlaneseq
      %v972 = vshrl.u32 %v971, 7
      %v973 = vsub.s32 1, %v972
      %v974 = vrot.slane %v965, %v973
      %975 = vrot.lane.b32.xlu0 %v970, 96
      %v976 = vpop.permute.xlu0 %975
      %977 = vrot.lane.b32.xlu0 %v974, 96
      %v978 = vpop.permute.xlu0 %977
      %v979 = vsel %vm634, %v976, %v978
      %v983 = vmul.f32 %v956, %v976
      %v984 = vmul.f32 %v957, %v979
      %v985 = vmul.f32 %v958, %v978
      %v986 = vmul.f32 %v612, %v976
      %v987 = vmul.f32 %v613, %v979
      %v988 = vmul.f32 %v614, %v978
      %v989 = vmul.f32 %v960, %v976
      %v990 = vmul.f32 %v961, %v979
      %v991 = vmul.f32 %v962, %v978
      %vm1001 = vcmask 1046528
      %v1002 = vrot.slane %v983, 1
      %v1003 = vrot.slane %v986, 1
      %v1004 = vsel %vm1001, %v1002, %v1003
      %v1005 = vrot.slane %v984, 1
      %v1006 = vrot.slane %v987, 1
      %v1007 = vsel %vm1001, %v1005, %v1006
      %v1008 = vrot.slane %v985, 1
      %v1009 = vrot.slane %v988, 1
      %v1010 = vsel %vm1001, %v1008, %v1009
      %v1011 = vrot.slane %v989, 1
      %v1012 = vsel %vm1001, %v1003, %v1011
      %v1013 = vrot.slane %v990, 1
      %v1014 = vsel %vm1001, %v1006, %v1013
      %v1015 = vrot.slane %v991, 1
      %v1016 = vsel %vm1001, %v1009, %v1015
      %v1026 = vadd.f32 %v947, %v1004
      %v1027 = vadd.f32 %v948, %v1007
      %v1028 = vadd.f32 %v949, %v1010
      %v1029 = vadd.f32 %v950, %v1012
      %v1030 = vadd.f32 %v951, %v1014
      %v1031 = vadd.f32 %v952, %v1016
      %v1032 = vadd.f32 %v953, %v1011
      %v1033 = vadd.f32 %v954, %v1013
      %v1034 = vadd.f32 %v955, %v1015
      %s1035 = scalar_lea.vmem %s3, 6
      %v1036 = vld [vmem:[%s1035] ss:$8 sm:$0x3]
      %v1038 = vlaneseq
      %v1039 = vshrl.u32 %v1038, 7
      %v1040 = vsub.s32 0, %v1039
      %v1041 = vrot.slane %v1036, %v1040
      %v1042 = vlaneseq
      %v1043 = vshrl.u32 %v1042, 7
      %v1044 = vsub.s32 1, %v1043
      %v1045 = vrot.slane %v1036, %v1044
      %1046 = vrot.lane.b32.xlu0 %v1041, 112
      %v1047 = vpop.permute.xlu0 %1046
      %1048 = vrot.lane.b32.xlu0 %v1045, 112
      %v1049 = vpop.permute.xlu0 %1048
      %v1050 = vsel %vm672, %v1047, %v1049
      %v1054 = vmul.f32 %v956, %v1047
      %v1055 = vmul.f32 %v957, %v1050
      %v1056 = vmul.f32 %v958, %v1049
      %v1057 = vmul.f32 %v612, %v1047
      %v1058 = vmul.f32 %v613, %v1050
      %v1059 = vmul.f32 %v614, %v1049
      %v1060 = vmul.f32 %v960, %v1047
      %v1061 = vmul.f32 %v961, %v1050
      %v1062 = vmul.f32 %v962, %v1049
      %v1072 = vrot.slane %v1054, 1
      %v1073 = vrot.slane %v1057, 1
      %v1074 = vsel %vm1001, %v1072, %v1073
      %v1075 = vrot.slane %v1055, 1
      %v1076 = vrot.slane %v1058, 1
      %v1077 = vsel %vm1001, %v1075, %v1076
      %v1078 = vrot.slane %v1056, 1
      %v1079 = vrot.slane %v1059, 1
      %v1080 = vsel %vm1001, %v1078, %v1079
      %v1081 = vrot.slane %v1060, 1
      %v1082 = vsel %vm1001, %v1073, %v1081
      %v1083 = vrot.slane %v1061, 1
      %v1084 = vsel %vm1001, %v1076, %v1083
      %v1085 = vrot.slane %v1062, 1
      %v1086 = vsel %vm1001, %v1079, %v1085
      %1087 = vrot.lane.b32.xlu0 %v1074, 112
      %v1088 = vpop.permute.xlu0 %1087
      %1089 = vrot.lane.b32.xlu0 %v1077, 112
      %v1090 = vpop.permute.xlu0 %1089
      %1091 = vrot.lane.b32.xlu0 %v1080, 112
      %v1092 = vpop.permute.xlu0 %1091
      %1093 = vrot.lane.b32.xlu0 %v1082, 112
      %v1094 = vpop.permute.xlu0 %1093
      %1095 = vrot.lane.b32.xlu0 %v1084, 112
      %v1096 = vpop.permute.xlu0 %1095
      %1097 = vrot.lane.b32.xlu0 %v1086, 112
      %v1098 = vpop.permute.xlu0 %1097
      %1099 = vrot.lane.b32.xlu0 %v1081, 112
      %v1100 = vpop.permute.xlu0 %1099
      %1101 = vrot.lane.b32.xlu0 %v1083, 112
      %v1102 = vpop.permute.xlu0 %1101
      %1103 = vrot.lane.b32.xlu0 %v1085, 112
      %v1104 = vpop.permute.xlu0 %1103
      %v1105 = vsel %vm672, %v1088, %v1090
      %v1106 = vsel %vm672, %v1090, %v1092
      %v1107 = vsel %vm672, %v1094, %v1096
      %v1108 = vsel %vm672, %v1096, %v1098
      %v1109 = vsel %vm672, %v1100, %v1102
      %v1110 = vsel %vm672, %v1102, %v1104
      %v1120 = vadd.f32 %v1026, %v1105
      %v1121 = vadd.f32 %v1027, %v1106
      %v1122 = vadd.f32 %v1028, %v1092
      %v1123 = vadd.f32 %v1029, %v1107
      %v1124 = vadd.f32 %v1030, %v1108
      %v1125 = vadd.f32 %v1031, %v1098
      %v1126 = vadd.f32 %v1032, %v1109
      %v1127 = vadd.f32 %v1033, %v1110
      %v1128 = vadd.f32 %v1034, %v1104
      %s1129 = scalar_lea.vmem %s3, 7
      %v1130 = vld [vmem:[%s1129] ss:$8 sm:$0x3]
      %v1132 = vlaneseq
      %v1133 = vshrl.u32 %v1132, 7
      %v1134 = vsub.s32 0, %v1133
      %v1135 = vrot.slane %v1130, %v1134
      %v1136 = vlaneseq
      %v1137 = vshrl.u32 %v1136, 7
      %v1138 = vsub.s32 1, %v1137
      %v1139 = vrot.slane %v1130, %v1138
      %v1142 = vmul.f32 %v957, %v1135
      %v1143 = vmul.f32 %v958, %v1139
      %v1144 = vmul.f32 %v613, %v1135
      %v1145 = vmul.f32 %v614, %v1139
      %v1146 = vmul.f32 %v961, %v1135
      %v1147 = vmul.f32 %v962, %v1139
      %v1154 = vrot.slane %v1142, 1
      %v1155 = vrot.slane %v1144, 1
      %v1156 = vsel %vm1001, %v1154, %v1155
      %v1157 = vrot.slane %v1143, 1
      %v1158 = vrot.slane %v1145, 1
      %v1159 = vsel %vm1001, %v1157, %v1158
      %v1160 = vrot.slane %v1146, 1
      %v1161 = vsel %vm1001, %v1155, %v1160
      %v1162 = vrot.slane %v1147, 1
      %v1163 = vsel %vm1001, %v1158, %v1162
      %1164 = vrot.lane.b32.xlu0 %v1156, 96
      %v1165 = vpop.permute.xlu0 %1164
      %1166 = vrot.lane.b32.xlu0 %v1159, 96
      %v1167 = vpop.permute.xlu0 %1166
      %1168 = vrot.lane.b32.xlu0 %v1161, 96
      %v1169 = vpop.permute.xlu0 %1168
      %1170 = vrot.lane.b32.xlu0 %v1163, 96
      %v1171 = vpop.permute.xlu0 %1170
      %1172 = vrot.lane.b32.xlu0 %v1160, 96
      %v1173 = vpop.permute.xlu0 %1172
      %1174 = vrot.lane.b32.xlu0 %v1162, 96
      %v1175 = vpop.permute.xlu0 %1174
      %v1176 = vsel %vm634, %v1165, %v1167
      %v1177 = vsel %vm634, %v1169, %v1171
      %v1178 = vsel %vm634, %v1173, %v1175
      %v1188 = vadd.f32 %v1120, %v1165
      %v1189 = vadd.f32 %v1121, %v1176
      %v1190 = vadd.f32 %v1122, %v1167
      %v1191 = vadd.f32 %v1123, %v1169
      %v1192 = vadd.f32 %v1124, %v1177
      %v1193 = vadd.f32 %v1125, %v1171
      %v1194 = vadd.f32 %v1126, %v1173
      %v1195 = vadd.f32 %v1127, %v1178
      %v1196 = vadd.f32 %v1128, %v1175
      %s1197 = scalar_lea.vmem %s3, 16
      %v1198 = vld [vmem:[%s1197] ss:$8 sm:$0x3]
      %v1200 = vlaneseq
      %v1201 = vshrl.u32 %v1200, 7
      %v1202 = vsub.s32 0, %v1201
      %v1203 = vrot.slane %v1198, %v1202
      %v1204 = vlaneseq
      %v1205 = vshrl.u32 %v1204, 7
      %v1206 = vsub.s32 1, %v1205
      %v1207 = vrot.slane %v1198, %v1206
      %1208 = vrot.lane.b32.xlu0 %v1203, 16
      %v1209 = vpop.permute.xlu0 %1208
      %1210 = vrot.lane.b32.xlu0 %v1207, 16
      %v1211 = vpop.permute.xlu0 %1210
      %v1212 = vsel %vm810, %v1209, %v1211
      %v1216 = vmul.f32 %v957, %v1209
      %v1217 = vmul.f32 %v958, %v1212
      %v1218 = vmul.f32 %v959, %v1211
      %v1219 = vmul.f32 %v613, %v1209
      %v1220 = vmul.f32 %v614, %v1212
      %v1221 = vmul.f32 %v615, %v1211
      %v1222 = vmul.f32 %v961, %v1209
      %v1223 = vmul.f32 %v962, %v1212
      %v1224 = vmul.f32 %v963, %v1211
      %v1234 = vrot.slane %v1216, 1
      %v1235 = vrot.slane %v1219, 1
      %v1236 = vsel %vm1001, %v1234, %v1235
      %v1237 = vrot.slane %v1217, 1
      %v1238 = vrot.slane %v1220, 1
      %v1239 = vsel %vm1001, %v1237, %v1238
      %v1240 = vrot.slane %v1218, 1
      %v1241 = vrot.slane %v1221, 1
      %v1242 = vsel %vm1001, %v1240, %v1241
      %v1243 = vrot.slane %v1222, 1
      %v1244 = vsel %vm1001, %v1235, %v1243
      %v1245 = vrot.slane %v1223, 1
      %v1246 = vsel %vm1001, %v1238, %v1245
      %v1247 = vrot.slane %v1224, 1
      %v1248 = vsel %vm1001, %v1241, %v1247
      %1249 = vrot.lane.b32.xlu0 %v1236, 80
      %v1250 = vpop.permute.xlu0 %1249
      %1251 = vrot.lane.b32.xlu0 %v1239, 80
      %v1252 = vpop.permute.xlu0 %1251
      %1253 = vrot.lane.b32.xlu0 %v1242, 80
      %v1254 = vpop.permute.xlu0 %1253
      %1255 = vrot.lane.b32.xlu0 %v1244, 80
      %v1256 = vpop.permute.xlu0 %1255
      %1257 = vrot.lane.b32.xlu0 %v1246, 80
      %v1258 = vpop.permute.xlu0 %1257
      %1259 = vrot.lane.b32.xlu0 %v1248, 80
      %v1260 = vpop.permute.xlu0 %1259
      %1261 = vrot.lane.b32.xlu0 %v1243, 80
      %v1262 = vpop.permute.xlu0 %1261
      %1263 = vrot.lane.b32.xlu0 %v1245, 80
      %v1264 = vpop.permute.xlu0 %1263
      %1265 = vrot.lane.b32.xlu0 %v1247, 80
      %v1266 = vpop.permute.xlu0 %1265
      %v1267 = vsel %vm851, %v1250, %v1252
      %v1268 = vsel %vm851, %v1252, %v1254
      %v1269 = vsel %vm851, %v1256, %v1258
      %v1270 = vsel %vm851, %v1258, %v1260
      %v1271 = vsel %vm851, %v1262, %v1264
      %v1272 = vsel %vm851, %v1264, %v1266
      %v1282 = vadd.f32 %v1188, %v1250
      %v1283 = vadd.f32 %v1189, %v1267
      %v1284 = vadd.f32 %v1190, %v1268
      %v1285 = vadd.f32 %v1191, %v1256
      %v1286 = vadd.f32 %v1192, %v1269
      %v1287 = vadd.f32 %v1193, %v1270
      %v1288 = vadd.f32 %v1194, %v1262
      %v1289 = vadd.f32 %v1195, %v1271
      %v1290 = vadd.f32 %v1196, %v1272
      %s1291 = scalar_lea.vmem %s3, 17
      %v1292 = vld [vmem:[%s1291] ss:$8 sm:$0x3]
      %v1294 = vlaneseq
      %v1295 = vshrl.u32 %v1294, 7
      %v1296 = vsub.s32 0, %v1295
      %v1297 = vrot.slane %v1292, %v1296
      %v1298 = vlaneseq
      %v1299 = vshrl.u32 %v1298, 7
      %v1300 = vsub.s32 1, %v1299
      %v1301 = vrot.slane %v1292, %v1300
      %1302 = vrot.lane.b32.xlu0 %v1297, 32
      %v1303 = vpop.permute.xlu0 %1302
      %1304 = vrot.lane.b32.xlu0 %v1301, 32
      %v1305 = vpop.permute.xlu0 %1304
      %v1306 = vsel %vm352, %v1303, %v1305
      %v1310 = vmul.f32 %v957, %v1303
      %v1311 = vmul.f32 %v958, %v1306
      %v1312 = vmul.f32 %v959, %v1305
      %v1313 = vmul.f32 %v613, %v1303
      %v1314 = vmul.f32 %v614, %v1306
      %v1315 = vmul.f32 %v615, %v1305
      %v1316 = vmul.f32 %v961, %v1303
      %v1317 = vmul.f32 %v962, %v1306
      %v1318 = vmul.f32 %v963, %v1305
      %v1328 = vrot.slane %v1310, 1
      %v1329 = vrot.slane %v1313, 1
      %v1330 = vsel %vm1001, %v1328, %v1329
      %v1331 = vrot.slane %v1311, 1
      %v1332 = vrot.slane %v1314, 1
      %v1333 = vsel %vm1001, %v1331, %v1332
      %v1334 = vrot.slane %v1312, 1
      %v1335 = vrot.slane %v1315, 1
      %v1336 = vsel %vm1001, %v1334, %v1335
      %v1337 = vrot.slane %v1316, 1
      %v1338 = vsel %vm1001, %v1329, %v1337
      %v1339 = vrot.slane %v1317, 1
      %v1340 = vsel %vm1001, %v1332, %v1339
      %v1341 = vrot.slane %v1318, 1
      %v1342 = vsel %vm1001, %v1335, %v1341
      %1343 = vrot.lane.b32.xlu0 %v1330, 64
      %v1344 = vpop.permute.xlu0 %1343
      %1345 = vrot.lane.b32.xlu0 %v1333, 64
      %v1346 = vpop.permute.xlu0 %1345
      %1347 = vrot.lane.b32.xlu0 %v1336, 64
      %v1348 = vpop.permute.xlu0 %1347
      %1349 = vrot.lane.b32.xlu0 %v1338, 64
      %v1350 = vpop.permute.xlu0 %1349
      %1351 = vrot.lane.b32.xlu0 %v1340, 64
      %v1352 = vpop.permute.xlu0 %1351
      %1353 = vrot.lane.b32.xlu0 %v1342, 64
      %v1354 = vpop.permute.xlu0 %1353
      %1355 = vrot.lane.b32.xlu0 %v1337, 64
      %v1356 = vpop.permute.xlu0 %1355
      %1357 = vrot.lane.b32.xlu0 %v1339, 64
      %v1358 = vpop.permute.xlu0 %1357
      %1359 = vrot.lane.b32.xlu0 %v1341, 64
      %v1360 = vpop.permute.xlu0 %1359
      %v1361 = vsel %vm931, %v1344, %v1346
      %v1362 = vsel %vm931, %v1346, %v1348
      %v1363 = vsel %vm931, %v1350, %v1352
      %v1364 = vsel %vm931, %v1352, %v1354
      %v1365 = vsel %vm931, %v1356, %v1358
      %v1366 = vsel %vm931, %v1358, %v1360
      %v1376 = vadd.f32 %v1282, %v1344
      %v1377 = vadd.f32 %v1283, %v1361
      %v1378 = vadd.f32 %v1284, %v1362
      %v1379 = vadd.f32 %v1285, %v1350
      %v1380 = vadd.f32 %v1286, %v1363
      %v1381 = vadd.f32 %v1287, %v1364
      %v1382 = vadd.f32 %v1288, %v1356
      %v1383 = vadd.f32 %v1289, %v1365
      %v1384 = vadd.f32 %v1290, %v1366
      %v1385 = vld [vmem:[#allocation2 + $0x40] sm:$0xff]
      %v1386 = vld [vmem:[#allocation2 + $0x48] sm:$0xff]
      %v1387 = vld [vmem:[#allocation2 + $0x50] sm:$0xff]
      %v1388 = vld [vmem:[#allocation2 + $0x58] sm:$0xff]
      %s1389 = scalar_lea.vmem %s3, 18
      %v1390 = vld [vmem:[%s1389] ss:$8 sm:$0x3]
      %v1392 = vlaneseq
      %v1393 = vshrl.u32 %v1392, 7
      %v1394 = vsub.s32 0, %v1393
      %v1395 = vrot.slane %v1390, %v1394
      %v1396 = vlaneseq
      %v1397 = vshrl.u32 %v1396, 7
      %v1398 = vsub.s32 1, %v1397
      %v1399 = vrot.slane %v1390, %v1398
      %1400 = vrot.lane.b32.xlu0 %v1395, 96
      %v1401 = vpop.permute.xlu0 %1400
      %1402 = vrot.lane.b32.xlu0 %v1399, 96
      %v1403 = vpop.permute.xlu0 %1402
      %v1404 = vsel %vm634, %v1401, %v1403
      %v1408 = vmul.f32 %v612, %v1401
      %v1409 = vmul.f32 %v613, %v1404
      %v1410 = vmul.f32 %v614, %v1403
      %v1411 = vmul.f32 %v1385, %v1401
      %v1412 = vmul.f32 %v1386, %v1404
      %v1413 = vmul.f32 %v1387, %v1403
      %vm1420 = vcmask 1045504
      %v1421 = vrot.slane %v1408, 2
      %v1422 = vrot.slane %v1409, 2
      %v1423 = vrot.slane %v1410, 2
      %v1424 = vrot.slane %v1411, 2
      %v1425 = vsel %vm1420, %v1421, %v1424
      %v1426 = vrot.slane %v1412, 2
      %v1427 = vsel %vm1420, %v1422, %v1426
      %v1428 = vrot.slane %v1413, 2
      %v1429 = vsel %vm1420, %v1423, %v1428
      %v1439 = vadd.f32 %v1376, %v1421
      %v1440 = vadd.f32 %v1377, %v1422
      %v1441 = vadd.f32 %v1378, %v1423
      %v1442 = vadd.f32 %v1379, %v1425
      %v1443 = vadd.f32 %v1380, %v1427
      %v1444 = vadd.f32 %v1381, %v1429
      %v1445 = vadd.f32 %v1382, %v1424
      %v1446 = vadd.f32 %v1383, %v1426
      %v1447 = vadd.f32 %v1384, %v1428
      %s1448 = scalar_lea.vmem %s3, 19
      %v1449 = vld [vmem:[%s1448] ss:$8 sm:$0x3]
      %v1451 = vlaneseq
      %v1452 = vshrl.u32 %v1451, 7
      %v1453 = vsub.s32 0, %v1452
      %v1454 = vrot.slane %v1449, %v1453
      %v1455 = vlaneseq
      %v1456 = vshrl.u32 %v1455, 7
      %v1457 = vsub.s32 1, %v1456
      %v1458 = vrot.slane %v1449, %v1457
      %1459 = vrot.lane.b32.xlu0 %v1454, 112
      %v1460 = vpop.permute.xlu0 %1459
      %1461 = vrot.lane.b32.xlu0 %v1458, 112
      %v1462 = vpop.permute.xlu0 %1461
      %v1463 = vsel %vm672, %v1460, %v1462
      %v1467 = vmul.f32 %v612, %v1460
      %v1468 = vmul.f32 %v613, %v1463
      %v1469 = vmul.f32 %v614, %v1462
      %v1470 = vmul.f32 %v1385, %v1460
      %v1471 = vmul.f32 %v1386, %v1463
      %v1472 = vmul.f32 %v1387, %v1462
      %v1479 = vrot.slane %v1467, 2
      %v1480 = vrot.slane %v1468, 2
      %v1481 = vrot.slane %v1469, 2
      %v1482 = vrot.slane %v1470, 2
      %v1483 = vsel %vm1420, %v1479, %v1482
      %v1484 = vrot.slane %v1471, 2
      %v1485 = vsel %vm1420, %v1480, %v1484
      %v1486 = vrot.slane %v1472, 2
      %v1487 = vsel %vm1420, %v1481, %v1486
      %1488 = vrot.lane.b32.xlu0 %v1479, 112
      %v1489 = vpop.permute.xlu0 %1488
      %1490 = vrot.lane.b32.xlu0 %v1480, 112
      %v1491 = vpop.permute.xlu0 %1490
      %1492 = vrot.lane.b32.xlu0 %v1481, 112
      %v1493 = vpop.permute.xlu0 %1492
      %1494 = vrot.lane.b32.xlu0 %v1483, 112
      %v1495 = vpop.permute.xlu0 %1494
      %1496 = vrot.lane.b32.xlu0 %v1485, 112
      %v1497 = vpop.permute.xlu0 %1496
      %1498 = vrot.lane.b32.xlu0 %v1487, 112
      %v1499 = vpop.permute.xlu0 %1498
      %1500 = vrot.lane.b32.xlu0 %v1482, 112
      %v1501 = vpop.permute.xlu0 %1500
      %1502 = vrot.lane.b32.xlu0 %v1484, 112
      %v1503 = vpop.permute.xlu0 %1502
      %1504 = vrot.lane.b32.xlu0 %v1486, 112
      %v1505 = vpop.permute.xlu0 %1504
      %v1506 = vsel %vm672, %v1489, %v1491
      %v1507 = vsel %vm672, %v1491, %v1493
      %v1508 = vsel %vm672, %v1495, %v1497
      %v1509 = vsel %vm672, %v1497, %v1499
      %v1510 = vsel %vm672, %v1501, %v1503
      %v1511 = vsel %vm672, %v1503, %v1505
      %v1521 = vadd.f32 %v1439, %v1506
      %v1522 = vadd.f32 %v1440, %v1507
      %v1523 = vadd.f32 %v1441, %v1493
      %v1524 = vadd.f32 %v1442, %v1508
      %v1525 = vadd.f32 %v1443, %v1509
      %v1526 = vadd.f32 %v1444, %v1499
      %v1527 = vadd.f32 %v1445, %v1510
      %v1528 = vadd.f32 %v1446, %v1511
      %v1529 = vadd.f32 %v1447, %v1505
      %s1530 = scalar_lea.vmem %s3, 20
      %v1531 = vld [vmem:[%s1530] ss:$8 sm:$0x3]
      %v1533 = vlaneseq
      %v1534 = vshrl.u32 %v1533, 7
      %v1535 = vsub.s32 0, %v1534
      %v1536 = vrot.slane %v1531, %v1535
      %v1537 = vlaneseq
      %v1538 = vshrl.u32 %v1537, 7
      %v1539 = vsub.s32 1, %v1538
      %v1540 = vrot.slane %v1531, %v1539
      %v1543 = vmul.f32 %v613, %v1536
      %v1544 = vmul.f32 %v614, %v1540
      %v1545 = vmul.f32 %v1386, %v1536
      %v1546 = vmul.f32 %v1387, %v1540
      %v1551 = vrot.slane %v1543, 2
      %v1552 = vrot.slane %v1544, 2
      %v1553 = vrot.slane %v1545, 2
      %v1554 = vsel %vm1420, %v1551, %v1553
      %v1555 = vrot.slane %v1546, 2
      %v1556 = vsel %vm1420, %v1552, %v1555
      %1557 = vrot.lane.b32.xlu0 %v1551, 96
      %v1558 = vpop.permute.xlu0 %1557
      %1559 = vrot.lane.b32.xlu0 %v1552, 96
      %v1560 = vpop.permute.xlu0 %1559
      %1561 = vrot.lane.b32.xlu0 %v1554, 96
      %v1562 = vpop.permute.xlu0 %1561
      %1563 = vrot.lane.b32.xlu0 %v1556, 96
      %v1564 = vpop.permute.xlu0 %1563
      %1565 = vrot.lane.b32.xlu0 %v1553, 96
      %v1566 = vpop.permute.xlu0 %1565
      %1567 = vrot.lane.b32.xlu0 %v1555, 96
      %v1568 = vpop.permute.xlu0 %1567
      %v1569 = vsel %vm634, %v1558, %v1560
      %v1570 = vsel %vm634, %v1562, %v1564
      %v1571 = vsel %vm634, %v1566, %v1568
      %v1581 = vadd.f32 %v1521, %v1558
      %v1582 = vadd.f32 %v1522, %v1569
      %v1583 = vadd.f32 %v1523, %v1560
      %v1584 = vadd.f32 %v1524, %v1562
      %v1585 = vadd.f32 %v1525, %v1570
      %v1586 = vadd.f32 %v1526, %v1564
      %v1587 = vadd.f32 %v1527, %v1566
      %v1588 = vadd.f32 %v1528, %v1571
      %v1589 = vadd.f32 %v1529, %v1568
      %s1590 = scalar_lea.vmem %s3, 21
      %v1591 = vld [vmem:[%s1590] ss:$8 sm:$0x3]
      %v1593 = vlaneseq
      %v1594 = vshrl.u32 %v1593, 7
      %v1595 = vsub.s32 0, %v1594
      %v1596 = vrot.slane %v1591, %v1595
      %v1597 = vlaneseq
      %v1598 = vshrl.u32 %v1597, 7
      %v1599 = vsub.s32 1, %v1598
      %v1600 = vrot.slane %v1591, %v1599
      %1601 = vrot.lane.b32.xlu0 %v1596, 16
      %v1602 = vpop.permute.xlu0 %1601
      %1603 = vrot.lane.b32.xlu0 %v1600, 16
      %v1604 = vpop.permute.xlu0 %1603
      %v1605 = vsel %vm810, %v1602, %v1604
      %v1609 = vmul.f32 %v613, %v1602
      %v1610 = vmul.f32 %v614, %v1605
      %v1611 = vmul.f32 %v615, %v1604
      %v1612 = vmul.f32 %v1386, %v1602
      %v1613 = vmul.f32 %v1387, %v1605
      %v1614 = vmul.f32 %v1388, %v1604
      %v1621 = vrot.slane %v1609, 2
      %v1622 = vrot.slane %v1610, 2
      %v1623 = vrot.slane %v1611, 2
      %v1624 = vrot.slane %v1612, 2
      %v1625 = vsel %vm1420, %v1621, %v1624
      %v1626 = vrot.slane %v1613, 2
      %v1627 = vsel %vm1420, %v1622, %v1626
      %v1628 = vrot.slane %v1614, 2
      %v1629 = vsel %vm1420, %v1623, %v1628
      %1630 = vrot.lane.b32.xlu0 %v1621, 80
      %v1631 = vpop.permute.xlu0 %1630
      %1632 = vrot.lane.b32.xlu0 %v1622, 80
      %v1633 = vpop.permute.xlu0 %1632
      %1634 = vrot.lane.b32.xlu0 %v1623, 80
      %v1635 = vpop.permute.xlu0 %1634
      %1636 = vrot.lane.b32.xlu0 %v1625, 80
      %v1637 = vpop.permute.xlu0 %1636
      %1638 = vrot.lane.b32.xlu0 %v1627, 80
      %v1639 = vpop.permute.xlu0 %1638
      %1640 = vrot.lane.b32.xlu0 %v1629, 80
      %v1641 = vpop.permute.xlu0 %1640
      %1642 = vrot.lane.b32.xlu0 %v1624, 80
      %v1643 = vpop.permute.xlu0 %1642
      %1644 = vrot.lane.b32.xlu0 %v1626, 80
      %v1645 = vpop.permute.xlu0 %1644
      %1646 = vrot.lane.b32.xlu0 %v1628, 80
      %v1647 = vpop.permute.xlu0 %1646
      %v1648 = vsel %vm851, %v1631, %v1633
      %v1649 = vsel %vm851, %v1633, %v1635
      %v1650 = vsel %vm851, %v1637, %v1639
      %v1651 = vsel %vm851, %v1639, %v1641
      %v1652 = vsel %vm851, %v1643, %v1645
      %v1653 = vsel %vm851, %v1645, %v1647
      %v1663 = vadd.f32 %v1581, %v1631
      %v1664 = vadd.f32 %v1582, %v1648
      %v1665 = vadd.f32 %v1583, %v1649
      %v1666 = vadd.f32 %v1584, %v1637
      %v1667 = vadd.f32 %v1585, %v1650
      %v1668 = vadd.f32 %v1586, %v1651
      %v1669 = vadd.f32 %v1587, %v1643
      %v1670 = vadd.f32 %v1588, %v1652
      %v1671 = vadd.f32 %v1589, %v1653
      %s1672 = scalar_lea.vmem %s3, 22
      %v1673 = vld [vmem:[%s1672] ss:$8 sm:$0x3]
      %v1675 = vlaneseq
      %v1676 = vshrl.u32 %v1675, 7
      %v1677 = vsub.s32 0, %v1676
      %v1678 = vrot.slane %v1673, %v1677
      %v1679 = vlaneseq
      %v1680 = vshrl.u32 %v1679, 7
      %v1681 = vsub.s32 1, %v1680
      %v1682 = vrot.slane %v1673, %v1681
      %1683 = vrot.lane.b32.xlu0 %v1678, 32
      %v1684 = vpop.permute.xlu0 %1683
      %1685 = vrot.lane.b32.xlu0 %v1682, 32
      %v1686 = vpop.permute.xlu0 %1685
      %v1687 = vsel %vm352, %v1684, %v1686
      %v1691 = vmul.f32 %v613, %v1684
      %v1692 = vmul.f32 %v614, %v1687
      %v1693 = vmul.f32 %v615, %v1686
      %v1694 = vmul.f32 %v1386, %v1684
      %v1695 = vmul.f32 %v1387, %v1687
      %v1696 = vmul.f32 %v1388, %v1686
      %v1703 = vrot.slane %v1691, 2
      %v1704 = vrot.slane %v1692, 2
      %v1705 = vrot.slane %v1693, 2
      %v1706 = vrot.slane %v1694, 2
      %v1707 = vsel %vm1420, %v1703, %v1706
      %v1708 = vrot.slane %v1695, 2
      %v1709 = vsel %vm1420, %v1704, %v1708
      %v1710 = vrot.slane %v1696, 2
      %v1711 = vsel %vm1420, %v1705, %v1710
      %1712 = vrot.lane.b32.xlu0 %v1703, 64
      %v1713 = vpop.permute.xlu0 %1712
      %1714 = vrot.lane.b32.xlu0 %v1704, 64
      %v1715 = vpop.permute.xlu0 %1714
      %1716 = vrot.lane.b32.xlu0 %v1705, 64
      %v1717 = vpop.permute.xlu0 %1716
      %1718 = vrot.lane.b32.xlu0 %v1707, 64
      %v1719 = vpop.permute.xlu0 %1718
      %1720 = vrot.lane.b32.xlu0 %v1709, 64
      %v1721 = vpop.permute.xlu0 %1720
      %1722 = vrot.lane.b32.xlu0 %v1711, 64
      %v1723 = vpop.permute.xlu0 %1722
      %1724 = vrot.lane.b32.xlu0 %v1706, 64
      %v1725 = vpop.permute.xlu0 %1724
      %1726 = vrot.lane.b32.xlu0 %v1708, 64
      %v1727 = vpop.permute.xlu0 %1726
      %1728 = vrot.lane.b32.xlu0 %v1710, 64
      %v1729 = vpop.permute.xlu0 %1728
      %v1730 = vsel %vm931, %v1713, %v1715
      %v1731 = vsel %vm931, %v1715, %v1717
      %v1732 = vsel %vm931, %v1719, %v1721
      %v1733 = vsel %vm931, %v1721, %v1723
      %v1734 = vsel %vm931, %v1725, %v1727
      %v1735 = vsel %vm931, %v1727, %v1729
      %v1745 = vadd.f32 %v1663, %v1713
      %v1746 = vadd.f32 %v1664, %v1730
      %v1747 = vadd.f32 %v1665, %v1731
      %v1748 = vadd.f32 %v1666, %v1719
      %v1749 = vadd.f32 %v1667, %v1732
      %v1750 = vadd.f32 %v1668, %v1733
      %v1751 = vadd.f32 %v1669, %v1725
      %v1752 = vadd.f32 %v1670, %v1734
      %v1753 = vadd.f32 %v1671, %v1735
      %v1754 = vld [vmem:[#allocation2 + $0x20] sm:$0xfe]
      %v1755 = vld [vmem:[#allocation2 + $0x28] sm:$0xfe]
      %v1756 = vld [vmem:[#allocation2 + $0x30] sm:$0xfe]
      %v1757 = vld [vmem:[#allocation2 + $0x38] sm:$0xfe]
      %v1758 = vld [vmem:[#allocation2 + $0x40] sm:$0xff]
      %v1759 = vld [vmem:[#allocation2 + $0x48] sm:$0xff]
      %v1760 = vld [vmem:[#allocation2 + $0x50] sm:$0xff]
      %v1761 = vld [vmem:[#allocation2 + $0x58] sm:$0xff]
      %v1762 = vld [vmem:[#allocation2 + $0x60] sm:$0x1]
      %v1763 = vld [vmem:[#allocation2 + $0x68] sm:$0x1]
      %v1764 = vld [vmem:[#allocation2 + $0x70] sm:$0x1]
      %v1765 = vld [vmem:[#allocation2 + $0x78] sm:$0x1]
      %s1766 = scalar_lea.vmem %s3, 23
      %v1767 = vld [vmem:[%s1766] ss:$8 sm:$0x3]
      %v1769 = vlaneseq
      %v1770 = vshrl.u32 %v1769, 7
      %v1771 = vsub.s32 0, %v1770
      %v1772 = vrot.slane %v1767, %v1771
      %v1773 = vlaneseq
      %v1774 = vshrl.u32 %v1773, 7
      %v1775 = vsub.s32 1, %v1774
      %v1776 = vrot.slane %v1767, %v1775
      %1777 = vrot.lane.b32.xlu0 %v1772, 96
      %v1778 = vpop.permute.xlu0 %1777
      %1779 = vrot.lane.b32.xlu0 %v1776, 96
      %v1780 = vpop.permute.xlu0 %1779
      %v1781 = vsel %vm634, %v1778, %v1780
      %v1785 = vmul.f32 %v1754, %v1778
      %v1786 = vmul.f32 %v1755, %v1781
      %v1787 = vmul.f32 %v1756, %v1780
      %v1788 = vmul.f32 %v1758, %v1778
      %v1789 = vmul.f32 %v1759, %v1781
      %v1790 = vmul.f32 %v1760, %v1780
      %v1791 = vmul.f32 %v1762, %v1778
      %v1792 = vmul.f32 %v1763, %v1781
      %v1793 = vmul.f32 %v1764, %v1780
      %vm1803 = vcmask 1044480
      %v1804 = vrot.slane %v1785, 3
      %v1805 = vrot.slane %v1786, 3
      %v1806 = vrot.slane %v1787, 3
      %v1807 = vrot.slane %v1788, 3
      %v1808 = vsel %vm1803, %v1804, %v1807
      %v1809 = vrot.slane %v1789, 3
      %v1810 = vsel %vm1803, %v1805, %v1809
      %v1811 = vrot.slane %v1790, 3
      %v1812 = vsel %vm1803, %v1806, %v1811
      %v1813 = vrot.slane %v1791, 3
      %v1814 = vsel %vm1803, %v1807, %v1813
      %v1815 = vrot.slane %v1792, 3
      %v1816 = vsel %vm1803, %v1809, %v1815
      %v1817 = vrot.slane %v1793, 3
      %v1818 = vsel %vm1803, %v1811, %v1817
      %v1828 = vadd.f32 %v1745, %v1804
      %v1829 = vadd.f32 %v1746, %v1805
      %v1830 = vadd.f32 %v1747, %v1806
      %v1831 = vadd.f32 %v1748, %v1808
      %v1832 = vadd.f32 %v1749, %v1810
      %v1833 = vadd.f32 %v1750, %v1812
      %v1834 = vadd.f32 %v1751, %v1814
      %v1835 = vadd.f32 %v1752, %v1816
      %v1836 = vadd.f32 %v1753, %v1818
      %s1837 = scalar_lea.vmem %s3, 32
      %v1838 = vld [vmem:[%s1837] ss:$8 sm:$0x3]
      %v1840 = vlaneseq
      %v1841 = vshrl.u32 %v1840, 7
      %v1842 = vsub.s32 0, %v1841
      %v1843 = vrot.slane %v1838, %v1842
      %v1844 = vlaneseq
      %v1845 = vshrl.u32 %v1844, 7
      %v1846 = vsub.s32 1, %v1845
      %v1847 = vrot.slane %v1838, %v1846
      %1848 = vrot.lane.b32.xlu0 %v1843, 112
      %v1849 = vpop.permute.xlu0 %1848
      %1850 = vrot.lane.b32.xlu0 %v1847, 112
      %v1851 = vpop.permute.xlu0 %1850
      %v1852 = vsel %vm672, %v1849, %v1851
      %v1856 = vmul.f32 %v1754, %v1849
      %v1857 = vmul.f32 %v1755, %v1852
      %v1858 = vmul.f32 %v1756, %v1851
      %v1859 = vmul.f32 %v1758, %v1849
      %v1860 = vmul.f32 %v1759, %v1852
      %v1861 = vmul.f32 %v1760, %v1851
      %v1862 = vmul.f32 %v1762, %v1849
      %v1863 = vmul.f32 %v1763, %v1852
      %v1864 = vmul.f32 %v1764, %v1851
      %v1874 = vrot.slane %v1856, 3
      %v1875 = vrot.slane %v1857, 3
      %v1876 = vrot.slane %v1858, 3
      %v1877 = vrot.slane %v1859, 3
      %v1878 = vsel %vm1803, %v1874, %v1877
      %v1879 = vrot.slane %v1860, 3
      %v1880 = vsel %vm1803, %v1875, %v1879
      %v1881 = vrot.slane %v1861, 3
      %v1882 = vsel %vm1803, %v1876, %v1881
      %v1883 = vrot.slane %v1862, 3
      %v1884 = vsel %vm1803, %v1877, %v1883
      %v1885 = vrot.slane %v1863, 3
      %v1886 = vsel %vm1803, %v1879, %v1885
      %v1887 = vrot.slane %v1864, 3
      %v1888 = vsel %vm1803, %v1881, %v1887
      %1889 = vrot.lane.b32.xlu0 %v1874, 112
      %v1890 = vpop.permute.xlu0 %1889
      %1891 = vrot.lane.b32.xlu0 %v1875, 112
      %v1892 = vpop.permute.xlu0 %1891
      %1893 = vrot.lane.b32.xlu0 %v1876, 112
      %v1894 = vpop.permute.xlu0 %1893
      %1895 = vrot.lane.b32.xlu0 %v1878, 112
      %v1896 = vpop.permute.xlu0 %1895
      %1897 = vrot.lane.b32.xlu0 %v1880, 112
      %v1898 = vpop.permute.xlu0 %1897
      %1899 = vrot.lane.b32.xlu0 %v1882, 112
      %v1900 = vpop.permute.xlu0 %1899
      %1901 = vrot.lane.b32.xlu0 %v1884, 112
      %v1902 = vpop.permute.xlu0 %1901
      %1903 = vrot.lane.b32.xlu0 %v1886, 112
      %v1904 = vpop.permute.xlu0 %1903
      %1905 = vrot.lane.b32.xlu0 %v1888, 112
      %v1906 = vpop.permute.xlu0 %1905
      %v1907 = vsel %vm672, %v1890, %v1892
      %v1908 = vsel %vm672, %v1892, %v1894
      %v1909 = vsel %vm672, %v1896, %v1898
      %v1910 = vsel %vm672, %v1898, %v1900
      %v1911 = vsel %vm672, %v1902, %v1904
      %v1912 = vsel %vm672, %v1904, %v1906
      %v1922 = vadd.f32 %v1828, %v1907
      %v1923 = vadd.f32 %v1829, %v1908
      %v1924 = vadd.f32 %v1830, %v1894
      %v1925 = vadd.f32 %v1831, %v1909
      %v1926 = vadd.f32 %v1832, %v1910
      %v1927 = vadd.f32 %v1833, %v1900
      %v1928 = vadd.f32 %v1834, %v1911
      %v1929 = vadd.f32 %v1835, %v1912
      %v1930 = vadd.f32 %v1836, %v1906
      %s1931 = scalar_lea.vmem %s3, 33
      %v1932 = vld [vmem:[%s1931] ss:$8 sm:$0x3]
      %v1934 = vlaneseq
      %v1935 = vshrl.u32 %v1934, 7
      %v1936 = vsub.s32 0, %v1935
      %v1937 = vrot.slane %v1932, %v1936
      %v1938 = vlaneseq
      %v1939 = vshrl.u32 %v1938, 7
      %v1940 = vsub.s32 1, %v1939
      %v1941 = vrot.slane %v1932, %v1940
      %v1944 = vmul.f32 %v1755, %v1937
      %v1945 = vmul.f32 %v1756, %v1941
      %v1946 = vmul.f32 %v1759, %v1937
      %v1947 = vmul.f32 %v1760, %v1941
      %v1948 = vmul.f32 %v1763, %v1937
      %v1949 = vmul.f32 %v1764, %v1941
      %v1956 = vrot.slane %v1944, 3
      %v1957 = vrot.slane %v1945, 3
      %v1958 = vrot.slane %v1946, 3
      %v1959 = vsel %vm1803, %v1956, %v1958
      %v1960 = vrot.slane %v1947, 3
      %v1961 = vsel %vm1803, %v1957, %v1960
      %v1962 = vrot.slane %v1948, 3
      %v1963 = vsel %vm1803, %v1958, %v1962
      %v1964 = vrot.slane %v1949, 3
      %v1965 = vsel %vm1803, %v1960, %v1964
      %1966 = vrot.lane.b32.xlu0 %v1956, 96
      %v1967 = vpop.permute.xlu0 %1966
      %1968 = vrot.lane.b32.xlu0 %v1957, 96
      %v1969 = vpop.permute.xlu0 %1968
      %1970 = vrot.lane.b32.xlu0 %v1959, 96
      %v1971 = vpop.permute.xlu0 %1970
      %1972 = vrot.lane.b32.xlu0 %v1961, 96
      %v1973 = vpop.permute.xlu0 %1972
      %1974 = vrot.lane.b32.xlu0 %v1963, 96
      %v1975 = vpop.permute.xlu0 %1974
      %1976 = vrot.lane.b32.xlu0 %v1965, 96
      %v1977 = vpop.permute.xlu0 %1976
      %v1978 = vsel %vm634, %v1967, %v1969
      %v1979 = vsel %vm634, %v1971, %v1973
      %v1980 = vsel %vm634, %v1975, %v1977
      %v1990 = vadd.f32 %v1922, %v1967
      %v1991 = vadd.f32 %v1923, %v1978
      %v1992 = vadd.f32 %v1924, %v1969
      %v1993 = vadd.f32 %v1925, %v1971
      %v1994 = vadd.f32 %v1926, %v1979
      %v1995 = vadd.f32 %v1927, %v1973
      %v1996 = vadd.f32 %v1928, %v1975
      %v1997 = vadd.f32 %v1929, %v1980
      %v1998 = vadd.f32 %v1930, %v1977
      %s1999 = scalar_lea.vmem %s3, 34
      %v2000 = vld [vmem:[%s1999] ss:$8 sm:$0x3]
      %v2002 = vlaneseq
      %v2003 = vshrl.u32 %v2002, 7
      %v2004 = vsub.s32 0, %v2003
      %v2005 = vrot.slane %v2000, %v2004
      %v2006 = vlaneseq
      %v2007 = vshrl.u32 %v2006, 7
      %v2008 = vsub.s32 1, %v2007
      %v2009 = vrot.slane %v2000, %v2008
      %2010 = vrot.lane.b32.xlu0 %v2005, 16
      %v2011 = vpop.permute.xlu0 %2010
      %2012 = vrot.lane.b32.xlu0 %v2009, 16
      %v2013 = vpop.permute.xlu0 %2012
      %v2014 = vsel %vm810, %v2011, %v2013
      %v2018 = vmul.f32 %v1755, %v2011
      %v2019 = vmul.f32 %v1756, %v2014
      %v2020 = vmul.f32 %v1757, %v2013
      %v2021 = vmul.f32 %v1759, %v2011
      %v2022 = vmul.f32 %v1760, %v2014
      %v2023 = vmul.f32 %v1761, %v2013
      %v2024 = vmul.f32 %v1763, %v2011
      %v2025 = vmul.f32 %v1764, %v2014
      %v2026 = vmul.f32 %v1765, %v2013
      %v2036 = vrot.slane %v2018, 3
      %v2037 = vrot.slane %v2019, 3
      %v2038 = vrot.slane %v2020, 3
      %v2039 = vrot.slane %v2021, 3
      %v2040 = vsel %vm1803, %v2036, %v2039
      %v2041 = vrot.slane %v2022, 3
      %v2042 = vsel %vm1803, %v2037, %v2041
      %v2043 = vrot.slane %v2023, 3
      %v2044 = vsel %vm1803, %v2038, %v2043
      %v2045 = vrot.slane %v2024, 3
      %v2046 = vsel %vm1803, %v2039, %v2045
      %v2047 = vrot.slane %v2025, 3
      %v2048 = vsel %vm1803, %v2041, %v2047
      %v2049 = vrot.slane %v2026, 3
      %v2050 = vsel %vm1803, %v2043, %v2049
      %2051 = vrot.lane.b32.xlu0 %v2036, 80
      %v2052 = vpop.permute.xlu0 %2051
      %2053 = vrot.lane.b32.xlu0 %v2037, 80
      %v2054 = vpop.permute.xlu0 %2053
      %2055 = vrot.lane.b32.xlu0 %v2038, 80
      %v2056 = vpop.permute.xlu0 %2055
      %2057 = vrot.lane.b32.xlu0 %v2040, 80
      %v2058 = vpop.permute.xlu0 %2057
      %2059 = vrot.lane.b32.xlu0 %v2042, 80
      %v2060 = vpop.permute.xlu0 %2059
      %2061 = vrot.lane.b32.xlu0 %v2044, 80
      %v2062 = vpop.permute.xlu0 %2061
      %2063 = vrot.lane.b32.xlu0 %v2046, 80
      %v2064 = vpop.permute.xlu0 %2063
      %2065 = vrot.lane.b32.xlu0 %v2048, 80
      %v2066 = vpop.permute.xlu0 %2065
      %2067 = vrot.lane.b32.xlu0 %v2050, 80
      %v2068 = vpop.permute.xlu0 %2067
      %v2069 = vsel %vm851, %v2052, %v2054
      %v2070 = vsel %vm851, %v2054, %v2056
      %v2071 = vsel %vm851, %v2058, %v2060
      %v2072 = vsel %vm851, %v2060, %v2062
      %v2073 = vsel %vm851, %v2064, %v2066
      %v2074 = vsel %vm851, %v2066, %v2068
      %v2084 = vadd.f32 %v1990, %v2052
      %v2085 = vadd.f32 %v1991, %v2069
      %v2086 = vadd.f32 %v1992, %v2070
      %v2087 = vadd.f32 %v1993, %v2058
      %v2088 = vadd.f32 %v1994, %v2071
      %v2089 = vadd.f32 %v1995, %v2072
      %v2090 = vadd.f32 %v1996, %v2064
      %v2091 = vadd.f32 %v1997, %v2073
      %v2092 = vadd.f32 %v1998, %v2074
      %s2093 = scalar_lea.vmem %s3, 35
      %v2094 = vld [vmem:[%s2093] ss:$8 sm:$0x3]
      %v2096 = vlaneseq
      %v2097 = vshrl.u32 %v2096, 7
      %v2098 = vsub.s32 0, %v2097
      %v2099 = vrot.slane %v2094, %v2098
      %v2100 = vlaneseq
      %v2101 = vshrl.u32 %v2100, 7
      %v2102 = vsub.s32 1, %v2101
      %v2103 = vrot.slane %v2094, %v2102
      %2104 = vrot.lane.b32.xlu0 %v2099, 32
      %v2105 = vpop.permute.xlu0 %2104
      %2106 = vrot.lane.b32.xlu0 %v2103, 32
      %v2107 = vpop.permute.xlu0 %2106
      %v2108 = vsel %vm352, %v2105, %v2107
      %v2112 = vmul.f32 %v1755, %v2105
      %v2113 = vmul.f32 %v1756, %v2108
      %v2114 = vmul.f32 %v1757, %v2107
      %v2115 = vmul.f32 %v1759, %v2105
      %v2116 = vmul.f32 %v1760, %v2108
      %v2117 = vmul.f32 %v1761, %v2107
      %v2118 = vmul.f32 %v1763, %v2105
      %v2119 = vmul.f32 %v1764, %v2108
      %v2120 = vmul.f32 %v1765, %v2107
      %v2130 = vrot.slane %v2112, 3
      %v2131 = vrot.slane %v2113, 3
      %v2132 = vrot.slane %v2114, 3
      %v2133 = vrot.slane %v2115, 3
      %v2134 = vsel %vm1803, %v2130, %v2133
      %v2135 = vrot.slane %v2116, 3
      %v2136 = vsel %vm1803, %v2131, %v2135
      %v2137 = vrot.slane %v2117, 3
      %v2138 = vsel %vm1803, %v2132, %v2137
      %v2139 = vrot.slane %v2118, 3
      %v2140 = vsel %vm1803, %v2133, %v2139
      %v2141 = vrot.slane %v2119, 3
      %v2142 = vsel %vm1803, %v2135, %v2141
      %v2143 = vrot.slane %v2120, 3
      %v2144 = vsel %vm1803, %v2137, %v2143
      %2145 = vrot.lane.b32.xlu0 %v2130, 64
      %v2146 = vpop.permute.xlu0 %2145
      %2147 = vrot.lane.b32.xlu0 %v2131, 64
      %v2148 = vpop.permute.xlu0 %2147
      %2149 = vrot.lane.b32.xlu0 %v2132, 64
      %v2150 = vpop.permute.xlu0 %2149
      %2151 = vrot.lane.b32.xlu0 %v2134, 64
      %v2152 = vpop.permute.xlu0 %2151
      %2153 = vrot.lane.b32.xlu0 %v2136, 64
      %v2154 = vpop.permute.xlu0 %2153
      %2155 = vrot.lane.b32.xlu0 %v2138, 64
      %v2156 = vpop.permute.xlu0 %2155
      %2157 = vrot.lane.b32.xlu0 %v2140, 64
      %v2158 = vpop.permute.xlu0 %2157
      %2159 = vrot.lane.b32.xlu0 %v2142, 64
      %v2160 = vpop.permute.xlu0 %2159
      %2161 = vrot.lane.b32.xlu0 %v2144, 64
      %v2162 = vpop.permute.xlu0 %2161
      %v2163 = vsel %vm931, %v2146, %v2148
      %v2164 = vsel %vm931, %v2148, %v2150
      %v2165 = vsel %vm931, %v2152, %v2154
      %v2166 = vsel %vm931, %v2154, %v2156
      %v2167 = vsel %vm931, %v2158, %v2160
      %v2168 = vsel %vm931, %v2160, %v2162
      %v2178 = vadd.f32 %v2084, %v2146
      %v2179 = vadd.f32 %v2085, %v2163
      %v2180 = vadd.f32 %v2086, %v2164
      %v2181 = vadd.f32 %v2087, %v2152
      %v2182 = vadd.f32 %v2088, %v2165
      %v2183 = vadd.f32 %v2089, %v2166
      %v2184 = vadd.f32 %v2090, %v2158
      %v2185 = vadd.f32 %v2091, %v2167
      %v2186 = vadd.f32 %v2092, %v2168
      %v2187 = vld [vmem:[#allocation2 + $0x20] sm:$0xfc]
      %v2188 = vld [vmem:[#allocation2 + $0x28] sm:$0xfc]
      %v2189 = vld [vmem:[#allocation2 + $0x30] sm:$0xfc]
      %v2190 = vld [vmem:[#allocation2 + $0x38] sm:$0xfc]
      %v2191 = vld [vmem:[#allocation2 + $0x60] sm:$0x3]
      %v2192 = vld [vmem:[#allocation2 + $0x68] sm:$0x3]
      %v2193 = vld [vmem:[#allocation2 + $0x70] sm:$0x3]
      %v2194 = vld [vmem:[#allocation2 + $0x78] sm:$0x3]
      %s2195 = scalar_lea.vmem %s3, 36
      %v2196 = vld [vmem:[%s2195] ss:$8 sm:$0x3]
      %v2198 = vlaneseq
      %v2199 = vshrl.u32 %v2198, 7
      %v2200 = vsub.s32 0, %v2199
      %v2201 = vrot.slane %v2196, %v2200
      %v2202 = vlaneseq
      %v2203 = vshrl.u32 %v2202, 7
      %v2204 = vsub.s32 1, %v2203
      %v2205 = vrot.slane %v2196, %v2204
      %2206 = vrot.lane.b32.xlu0 %v2201, 96
      %v2207 = vpop.permute.xlu0 %2206
      %2208 = vrot.lane.b32.xlu0 %v2205, 96
      %v2209 = vpop.permute.xlu0 %2208
      %v2210 = vsel %vm634, %v2207, %v2209
      %v2214 = vmul.f32 %v2187, %v2207
      %v2215 = vmul.f32 %v2188, %v2210
      %v2216 = vmul.f32 %v2189, %v2209
      %v2217 = vmul.f32 %v1758, %v2207
      %v2218 = vmul.f32 %v1759, %v2210
      %v2219 = vmul.f32 %v1760, %v2209
      %v2220 = vmul.f32 %v2191, %v2207
      %v2221 = vmul.f32 %v2192, %v2210
      %v2222 = vmul.f32 %v2193, %v2209
      %vm2232 = vcmask 1043456
      %v2233 = vrot.slane %v2214, 4
      %v2234 = vrot.slane %v2215, 4
      %v2235 = vrot.slane %v2216, 4
      %v2236 = vrot.slane %v2217, 4
      %v2237 = vsel %vm2232, %v2233, %v2236
      %v2238 = vrot.slane %v2218, 4
      %v2239 = vsel %vm2232, %v2234, %v2238
      %v2240 = vrot.slane %v2219, 4
      %v2241 = vsel %vm2232, %v2235, %v2240
      %v2242 = vrot.slane %v2220, 4
      %v2243 = vsel %vm2232, %v2236, %v2242
      %v2244 = vrot.slane %v2221, 4
      %v2245 = vsel %vm2232, %v2238, %v2244
      %v2246 = vrot.slane %v2222, 4
      %v2247 = vsel %vm2232, %v2240, %v2246
      %v2257 = vadd.f32 %v2178, %v2233
      %v2258 = vadd.f32 %v2179, %v2234
      %v2259 = vadd.f32 %v2180, %v2235
      %v2260 = vadd.f32 %v2181, %v2237
      %v2261 = vadd.f32 %v2182, %v2239
      %v2262 = vadd.f32 %v2183, %v2241
      %v2263 = vadd.f32 %v2184, %v2243
      %v2264 = vadd.f32 %v2185, %v2245
      %v2265 = vadd.f32 %v2186, %v2247
      %s2266 = scalar_lea.vmem %s3, 37
      %v2267 = vld [vmem:[%s2266] ss:$8 sm:$0x3]
      %v2269 = vlaneseq
      %v2270 = vshrl.u32 %v2269, 7
      %v2271 = vsub.s32 0, %v2270
      %v2272 = vrot.slane %v2267, %v2271
      %v2273 = vlaneseq
      %v2274 = vshrl.u32 %v2273, 7
      %v2275 = vsub.s32 1, %v2274
      %v2276 = vrot.slane %v2267, %v2275
      %2277 = vrot.lane.b32.xlu0 %v2272, 112
      %v2278 = vpop.permute.xlu0 %2277
      %2279 = vrot.lane.b32.xlu0 %v2276, 112
      %v2280 = vpop.permute.xlu0 %2279
      %v2281 = vsel %vm672, %v2278, %v2280
      %v2285 = vmul.f32 %v2187, %v2278
      %v2286 = vmul.f32 %v2188, %v2281
      %v2287 = vmul.f32 %v2189, %v2280
      %v2288 = vmul.f32 %v1758, %v2278
      %v2289 = vmul.f32 %v1759, %v2281
      %v2290 = vmul.f32 %v1760, %v2280
      %v2291 = vmul.f32 %v2191, %v2278
      %v2292 = vmul.f32 %v2192, %v2281
      %v2293 = vmul.f32 %v2193, %v2280
      %v2303 = vrot.slane %v2285, 4
      %v2304 = vrot.slane %v2286, 4
      %v2305 = vrot.slane %v2287, 4
      %v2306 = vrot.slane %v2288, 4
      %v2307 = vsel %vm2232, %v2303, %v2306
      %v2308 = vrot.slane %v2289, 4
      %v2309 = vsel %vm2232, %v2304, %v2308
      %v2310 = vrot.slane %v2290, 4
      %v2311 = vsel %vm2232, %v2305, %v2310
      %v2312 = vrot.slane %v2291, 4
      %v2313 = vsel %vm2232, %v2306, %v2312
      %v2314 = vrot.slane %v2292, 4
      %v2315 = vsel %vm2232, %v2308, %v2314
      %v2316 = vrot.slane %v2293, 4
      %v2317 = vsel %vm2232, %v2310, %v2316
      %2318 = vrot.lane.b32.xlu0 %v2303, 112
      %v2319 = vpop.permute.xlu0 %2318
      %2320 = vrot.lane.b32.xlu0 %v2304, 112
      %v2321 = vpop.permute.xlu0 %2320
      %2322 = vrot.lane.b32.xlu0 %v2305, 112
      %v2323 = vpop.permute.xlu0 %2322
      %2324 = vrot.lane.b32.xlu0 %v2307, 112
      %v2325 = vpop.permute.xlu0 %2324
      %2326 = vrot.lane.b32.xlu0 %v2309, 112
      %v2327 = vpop.permute.xlu0 %2326
      %2328 = vrot.lane.b32.xlu0 %v2311, 112
      %v2329 = vpop.permute.xlu0 %2328
      %2330 = vrot.lane.b32.xlu0 %v2313, 112
      %v2331 = vpop.permute.xlu0 %2330
      %2332 = vrot.lane.b32.xlu0 %v2315, 112
      %v2333 = vpop.permute.xlu0 %2332
      %2334 = vrot.lane.b32.xlu0 %v2317, 112
      %v2335 = vpop.permute.xlu0 %2334
      %v2336 = vsel %vm672, %v2319, %v2321
      %v2337 = vsel %vm672, %v2321, %v2323
      %v2338 = vsel %vm672, %v2325, %v2327
      %v2339 = vsel %vm672, %v2327, %v2329
      %v2340 = vsel %vm672, %v2331, %v2333
      %v2341 = vsel %vm672, %v2333, %v2335
      %v2351 = vadd.f32 %v2257, %v2336
      %v2352 = vadd.f32 %v2258, %v2337
      %v2353 = vadd.f32 %v2259, %v2323
      %v2354 = vadd.f32 %v2260, %v2338
      %v2355 = vadd.f32 %v2261, %v2339
      %v2356 = vadd.f32 %v2262, %v2329
      %v2357 = vadd.f32 %v2263, %v2340
      %v2358 = vadd.f32 %v2264, %v2341
      %v2359 = vadd.f32 %v2265, %v2335
      %s2360 = scalar_lea.vmem %s3, 38
      %v2361 = vld [vmem:[%s2360] ss:$8 sm:$0x3]
      %v2363 = vlaneseq
      %v2364 = vshrl.u32 %v2363, 7
      %v2365 = vsub.s32 0, %v2364
      %v2366 = vrot.slane %v2361, %v2365
      %v2367 = vlaneseq
      %v2368 = vshrl.u32 %v2367, 7
      %v2369 = vsub.s32 1, %v2368
      %v2370 = vrot.slane %v2361, %v2369
      %v2373 = vmul.f32 %v2188, %v2366
      %v2374 = vmul.f32 %v2189, %v2370
      %v2375 = vmul.f32 %v1759, %v2366
      %v2376 = vmul.f32 %v1760, %v2370
      %v2377 = vmul.f32 %v2192, %v2366
      %v2378 = vmul.f32 %v2193, %v2370
      %v2385 = vrot.slane %v2373, 4
      %v2386 = vrot.slane %v2374, 4
      %v2387 = vrot.slane %v2375, 4
      %v2388 = vsel %vm2232, %v2385, %v2387
      %v2389 = vrot.slane %v2376, 4
      %v2390 = vsel %vm2232, %v2386, %v2389
      %v2391 = vrot.slane %v2377, 4
      %v2392 = vsel %vm2232, %v2387, %v2391
      %v2393 = vrot.slane %v2378, 4
      %v2394 = vsel %vm2232, %v2389, %v2393
      %2395 = vrot.lane.b32.xlu0 %v2385, 96
      %v2396 = vpop.permute.xlu0 %2395
      %2397 = vrot.lane.b32.xlu0 %v2386, 96
      %v2398 = vpop.permute.xlu0 %2397
      %2399 = vrot.lane.b32.xlu0 %v2388, 96
      %v2400 = vpop.permute.xlu0 %2399
      %2401 = vrot.lane.b32.xlu0 %v2390, 96
      %v2402 = vpop.permute.xlu0 %2401
      %2403 = vrot.lane.b32.xlu0 %v2392, 96
      %v2404 = vpop.permute.xlu0 %2403
      %2405 = vrot.lane.b32.xlu0 %v2394, 96
      %v2406 = vpop.permute.xlu0 %2405
      %v2407 = vsel %vm634, %v2396, %v2398
      %v2408 = vsel %vm634, %v2400, %v2402
      %v2409 = vsel %vm634, %v2404, %v2406
      %v2419 = vadd.f32 %v2351, %v2396
      %v2420 = vadd.f32 %v2352, %v2407
      %v2421 = vadd.f32 %v2353, %v2398
      %v2422 = vadd.f32 %v2354, %v2400
      %v2423 = vadd.f32 %v2355, %v2408
      %v2424 = vadd.f32 %v2356, %v2402
      %v2425 = vadd.f32 %v2357, %v2404
      %v2426 = vadd.f32 %v2358, %v2409
      %v2427 = vadd.f32 %v2359, %v2406
      %s2428 = scalar_lea.vmem %s3, 39
      %v2429 = vld [vmem:[%s2428] ss:$8 sm:$0x3]
      %v2431 = vlaneseq
      %v2432 = vshrl.u32 %v2431, 7
      %v2433 = vsub.s32 0, %v2432
      %v2434 = vrot.slane %v2429, %v2433
      %v2435 = vlaneseq
      %v2436 = vshrl.u32 %v2435, 7
      %v2437 = vsub.s32 1, %v2436
      %v2438 = vrot.slane %v2429, %v2437
      %2439 = vrot.lane.b32.xlu0 %v2434, 16
      %v2440 = vpop.permute.xlu0 %2439
      %2441 = vrot.lane.b32.xlu0 %v2438, 16
      %v2442 = vpop.permute.xlu0 %2441
      %v2443 = vsel %vm810, %v2440, %v2442
      %v2447 = vmul.f32 %v2188, %v2440
      %v2448 = vmul.f32 %v2189, %v2443
      %v2449 = vmul.f32 %v2190, %v2442
      %v2450 = vmul.f32 %v1759, %v2440
      %v2451 = vmul.f32 %v1760, %v2443
      %v2452 = vmul.f32 %v1761, %v2442
      %v2453 = vmul.f32 %v2192, %v2440
      %v2454 = vmul.f32 %v2193, %v2443
      %v2455 = vmul.f32 %v2194, %v2442
      %v2465 = vrot.slane %v2447, 4
      %v2466 = vrot.slane %v2448, 4
      %v2467 = vrot.slane %v2449, 4
      %v2468 = vrot.slane %v2450, 4
      %v2469 = vsel %vm2232, %v2465, %v2468
      %v2470 = vrot.slane %v2451, 4
      %v2471 = vsel %vm2232, %v2466, %v2470
      %v2472 = vrot.slane %v2452, 4
      %v2473 = vsel %vm2232, %v2467, %v2472
      %v2474 = vrot.slane %v2453, 4
      %v2475 = vsel %vm2232, %v2468, %v2474
      %v2476 = vrot.slane %v2454, 4
      %v2477 = vsel %vm2232, %v2470, %v2476
      %v2478 = vrot.slane %v2455, 4
      %v2479 = vsel %vm2232, %v2472, %v2478
      %2480 = vrot.lane.b32.xlu0 %v2465, 80
      %v2481 = vpop.permute.xlu0 %2480
      %2482 = vrot.lane.b32.xlu0 %v2466, 80
      %v2483 = vpop.permute.xlu0 %2482
      %2484 = vrot.lane.b32.xlu0 %v2467, 80
      %v2485 = vpop.permute.xlu0 %2484
      %2486 = vrot.lane.b32.xlu0 %v2469, 80
      %v2487 = vpop.permute.xlu0 %2486
      %2488 = vrot.lane.b32.xlu0 %v2471, 80
      %v2489 = vpop.permute.xlu0 %2488
      %2490 = vrot.lane.b32.xlu0 %v2473, 80
      %v2491 = vpop.permute.xlu0 %2490
      %2492 = vrot.lane.b32.xlu0 %v2475, 80
      %v2493 = vpop.permute.xlu0 %2492
      %2494 = vrot.lane.b32.xlu0 %v2477, 80
      %v2495 = vpop.permute.xlu0 %2494
      %2496 = vrot.lane.b32.xlu0 %v2479, 80
      %v2497 = vpop.permute.xlu0 %2496
      %v2498 = vsel %vm851, %v2481, %v2483
      %v2499 = vsel %vm851, %v2483, %v2485
      %v2500 = vsel %vm851, %v2487, %v2489
      %v2501 = vsel %vm851, %v2489, %v2491
      %v2502 = vsel %vm851, %v2493, %v2495
      %v2503 = vsel %vm851, %v2495, %v2497
      %v2513 = vadd.f32 %v2419, %v2481
      %v2514 = vadd.f32 %v2420, %v2498
      %v2515 = vadd.f32 %v2421, %v2499
      %v2516 = vadd.f32 %v2422, %v2487
      %v2517 = vadd.f32 %v2423, %v2500
      %v2518 = vadd.f32 %v2424, %v2501
      %v2519 = vadd.f32 %v2425, %v2493
      %v2520 = vadd.f32 %v2426, %v2502
      %v2521 = vadd.f32 %v2427, %v2503
      %s2522 = scalar_lea.vmem %s3, 48
      %v2523 = vld [vmem:[%s2522] ss:$8 sm:$0x3]
      %v2525 = vlaneseq
      %v2526 = vshrl.u32 %v2525, 7
      %v2527 = vsub.s32 0, %v2526
      %v2528 = vrot.slane %v2523, %v2527
      %v2529 = vlaneseq
      %v2530 = vshrl.u32 %v2529, 7
      %v2531 = vsub.s32 1, %v2530
      %v2532 = vrot.slane %v2523, %v2531
      %2533 = vrot.lane.b32.xlu0 %v2528, 32
      %v2534 = vpop.permute.xlu0 %2533
      %2535 = vrot.lane.b32.xlu0 %v2532, 32
      %v2536 = vpop.permute.xlu0 %2535
      %v2537 = vsel %vm352, %v2534, %v2536
      %v2541 = vmul.f32 %v2188, %v2534
      %v2542 = vmul.f32 %v2189, %v2537
      %v2543 = vmul.f32 %v2190, %v2536
      %v2544 = vmul.f32 %v1759, %v2534
      %v2545 = vmul.f32 %v1760, %v2537
      %v2546 = vmul.f32 %v1761, %v2536
      %v2547 = vmul.f32 %v2192, %v2534
      %v2548 = vmul.f32 %v2193, %v2537
      %v2549 = vmul.f32 %v2194, %v2536
      %v2559 = vrot.slane %v2541, 4
      %v2560 = vrot.slane %v2542, 4
      %v2561 = vrot.slane %v2543, 4
      %v2562 = vrot.slane %v2544, 4
      %v2563 = vsel %vm2232, %v2559, %v2562
      %v2564 = vrot.slane %v2545, 4
      %v2565 = vsel %vm2232, %v2560, %v2564
      %v2566 = vrot.slane %v2546, 4
      %v2567 = vsel %vm2232, %v2561, %v2566
      %v2568 = vrot.slane %v2547, 4
      %v2569 = vsel %vm2232, %v2562, %v2568
      %v2570 = vrot.slane %v2548, 4
      %v2571 = vsel %vm2232, %v2564, %v2570
      %v2572 = vrot.slane %v2549, 4
      %v2573 = vsel %vm2232, %v2566, %v2572
      %2574 = vrot.lane.b32.xlu0 %v2559, 64
      %v2575 = vpop.permute.xlu0 %2574
      %2576 = vrot.lane.b32.xlu0 %v2560, 64
      %v2577 = vpop.permute.xlu0 %2576
      %2578 = vrot.lane.b32.xlu0 %v2561, 64
      %v2579 = vpop.permute.xlu0 %2578
      %2580 = vrot.lane.b32.xlu0 %v2563, 64
      %v2581 = vpop.permute.xlu0 %2580
      %2582 = vrot.lane.b32.xlu0 %v2565, 64
      %v2583 = vpop.permute.xlu0 %2582
      %2584 = vrot.lane.b32.xlu0 %v2567, 64
      %v2585 = vpop.permute.xlu0 %2584
      %2586 = vrot.lane.b32.xlu0 %v2569, 64
      %v2587 = vpop.permute.xlu0 %2586
      %2588 = vrot.lane.b32.xlu0 %v2571, 64
      %v2589 = vpop.permute.xlu0 %2588
      %2590 = vrot.lane.b32.xlu0 %v2573, 64
      %v2591 = vpop.permute.xlu0 %2590
      %v2592 = vsel %vm931, %v2575, %v2577
      %v2593 = vsel %vm931, %v2577, %v2579
      %v2594 = vsel %vm931, %v2581, %v2583
      %v2595 = vsel %vm931, %v2583, %v2585
      %v2596 = vsel %vm931, %v2587, %v2589
      %v2597 = vsel %vm931, %v2589, %v2591
      %v2607 = vadd.f32 %v2513, %v2575
      %v2608 = vadd.f32 %v2514, %v2592
      %v2609 = vadd.f32 %v2515, %v2593
      %v2610 = vadd.f32 %v2516, %v2581
      %v2611 = vadd.f32 %v2517, %v2594
      %v2612 = vadd.f32 %v2518, %v2595
      %v2613 = vadd.f32 %v2519, %v2587
      %v2614 = vadd.f32 %v2520, %v2596
      %v2615 = vadd.f32 %v2521, %v2597
      %v2616 = vld [vmem:[%s4] sm:$0x3]
      %v2618 = vlaneseq
      %v2619 = vshrl.u32 %v2618, 7
      %v2620 = vsub.s32 0, %v2619
      %v2621 = vrot.slane %v2616, %v2620
      %v2622 = vlaneseq
      %v2623 = vshrl.u32 %v2622, 7
      %v2624 = vsub.s32 1, %v2623
      %v2625 = vrot.slane %v2616, %v2624
      %2626 = vrot.lane.b32.xlu0 %v2621, 96
      %v2627 = vpop.permute.xlu0 %2626
      %2628 = vrot.lane.b32.xlu0 %v2625, 96
      %v2629 = vpop.permute.xlu0 %2628
      %v2630 = vsel %vm634, %v2627, %v2629
      %v2634 = vadd.f32 %v2607, %v2627
      %v2635 = vadd.f32 %v2608, %v2630
      %v2636 = vadd.f32 %v2609, %v2629
      %v2637 = vadd.f32 %v2610, %v2627
      %v2638 = vadd.f32 %v2611, %v2630
      %v2639 = vadd.f32 %v2612, %v2629
      %v2640 = vadd.f32 %v2613, %v2627
      %v2641 = vadd.f32 %v2614, %v2630
      %v2642 = vadd.f32 %v2615, %v2629
      %vm2652 = vcmask 1041408
      %v2653 = vrot.slane %v2634, 6
      %v2654 = vrot.slane %v2637, 6
      %v2655 = vsel %vm2652, %v2653, %v2654
      %v2656 = vrot.slane %v2635, 6
      %v2657 = vrot.slane %v2638, 6
      %v2658 = vsel %vm2652, %v2656, %v2657
      %v2659 = vrot.slane %v2636, 6
      %v2660 = vrot.slane %v2639, 6
      %v2661 = vsel %vm2652, %v2659, %v2660
      %v2662 = vrot.slane %v2640, 6
      %v2663 = vsel %vm2652, %v2654, %v2662
      %v2664 = vrot.slane %v2641, 6
      %v2665 = vsel %vm2652, %v2657, %v2664
      %v2666 = vrot.slane %v2642, 6
      %v2667 = vsel %vm2652, %v2660, %v2666
      %2668 = vrot.lane.b32.xlu0 %v2655, 32
      %v2669 = vpop.permute.xlu0 %2668
      %2670 = vrot.lane.b32.xlu0 %v2658, 32
      %v2671 = vpop.permute.xlu0 %2670
      %2672 = vrot.lane.b32.xlu0 %v2661, 32
      %v2673 = vpop.permute.xlu0 %2672
      %2674 = vrot.lane.b32.xlu0 %v2663, 32
      %v2675 = vpop.permute.xlu0 %2674
      %2676 = vrot.lane.b32.xlu0 %v2665, 32
      %v2677 = vpop.permute.xlu0 %2676
      %2678 = vrot.lane.b32.xlu0 %v2667, 32
      %v2679 = vpop.permute.xlu0 %2678
      %v2680 = vsel %vm352, %v2669, %v2671
      %v2681 = vsel %vm352, %v2671, %v2673
      %v2682 = vsel %vm352, %v2675, %v2677
      %v2683 = vsel %vm352, %v2677, %v2679
      %2688 = vst [vmem:[#allocation2 + $0x28] sm:$0xff] %v2680
      %2689 = vst [vmem:[#allocation2 + $0x30] sm:$0xff] %v2681
      %2690 = vst [vmem:[#allocation2 + $0x48] sm:$0xff] %v2682
      %2691 = vst [vmem:[#allocation2 + $0x50] sm:$0xff] %v2683
      %v2692 = vld [vmem:[#allocation2] sm:$0x80]
      %v2693 = vld [vmem:[#allocation2 + $0x8] sm:$0x80]
      %v2694 = vld [vmem:[#allocation2 + $0x10] sm:$0x80]
      %v2695 = vld [vmem:[#allocation2 + $0x18] sm:$0x80]
      %v2696 = vld [vmem:[#allocation2 + $0x20] sm:$0xff]
      %v2697 = vld [vmem:[#allocation2 + $0x28] sm:$0xff]
      %v2698 = vld [vmem:[#allocation2 + $0x30] sm:$0xff]
      %v2699 = vld [vmem:[#allocation2 + $0x38] sm:$0xff]
      %v2700 = vld [vmem:[#allocation2 + $0x40] sm:$0x7f]
      %v2701 = vld [vmem:[#allocation2 + $0x48] sm:$0x7f]
      %v2702 = vld [vmem:[#allocation2 + $0x50] sm:$0x7f]
      %v2703 = vld [vmem:[#allocation2 + $0x58] sm:$0x7f]
      %v2704 = vld [vmem:[%s5] ss:$8 sm:$0x3]
      %v2706 = vlaneseq
      %v2707 = vshrl.u32 %v2706, 7
      %v2708 = vsub.s32 0, %v2707
      %v2709 = vrot.slane %v2704, %v2708
      %v2710 = vlaneseq
      %v2711 = vshrl.u32 %v2710, 7
      %v2712 = vsub.s32 1, %v2711
      %v2713 = vrot.slane %v2704, %v2712
      %2714 = vrot.lane.b32.xlu0 %v2709, 112
      %v2715 = vpop.permute.xlu0 %2714
      %2716 = vrot.lane.b32.xlu0 %v2713, 112
      %v2717 = vpop.permute.xlu0 %2716
      %v2718 = vsel %vm672, %v2715, %v2717
      %v2722 = vmul.f32 %v2692, %v2715
      %v2723 = vmul.f32 %v2693, %v2718
      %v2724 = vmul.f32 %v2694, %v2717
      %v2725 = vmul.f32 %v2696, %v2715
      %v2726 = vmul.f32 %v2697, %v2718
      %v2727 = vmul.f32 %v2698, %v2717
      %v2728 = vmul.f32 %v2700, %v2715
      %v2729 = vmul.f32 %v2701, %v2718
      %v2730 = vmul.f32 %v2702, %v2717
      %v2731 = vadd.f32 %v2722, 0.0
      %v2732 = vadd.f32 %v2723, 0.0
      %v2733 = vadd.f32 %v2724, 0.0
      %v2734 = vadd.f32 %v2725, 0.0
      %v2735 = vadd.f32 %v2726, 0.0
      %v2736 = vadd.f32 %v2727, 0.0
      %v2737 = vadd.f32 %v2728, 0.0
      %v2738 = vadd.f32 %v2729, 0.0
      %v2739 = vadd.f32 %v2730, 0.0
      %s2740 = scalar_lea.vmem %s5, 1
      %v2741 = vld [vmem:[%s2740] ss:$8 sm:$0x3]
      %v2743 = vlaneseq
      %v2744 = vshrl.u32 %v2743, 7
      %v2745 = vsub.s32 0, %v2744
      %v2746 = vrot.slane %v2741, %v2745
      %v2747 = vlaneseq
      %v2748 = vshrl.u32 %v2747, 7
      %v2749 = vsub.s32 1, %v2748
      %v2750 = vrot.slane %v2741, %v2749
      %v2753 = vmul.f32 %v2693, %v2746
      %v2754 = vmul.f32 %v2694, %v2750
      %v2755 = vmul.f32 %v2697, %v2746
      %v2756 = vmul.f32 %v2698, %v2750
      %v2757 = vmul.f32 %v2701, %v2746
      %v2758 = vmul.f32 %v2702, %v2750
      %2765 = vrot.lane.b32.xlu0 %v2753, 112
      %v2766 = vpop.permute.xlu0 %2765
      %2767 = vrot.lane.b32.xlu0 %v2754, 112
      %v2768 = vpop.permute.xlu0 %2767
      %2769 = vrot.lane.b32.xlu0 %v2755, 112
      %v2770 = vpop.permute.xlu0 %2769
      %2771 = vrot.lane.b32.xlu0 %v2756, 112
      %v2772 = vpop.permute.xlu0 %2771
      %2773 = vrot.lane.b32.xlu0 %v2757, 112
      %v2774 = vpop.permute.xlu0 %2773
      %2775 = vrot.lane.b32.xlu0 %v2758, 112
      %v2776 = vpop.permute.xlu0 %2775
      %v2777 = vsel %vm672, %v2766, %v2768
      %v2778 = vsel %vm672, %v2770, %v2772
      %v2779 = vsel %vm672, %v2774, %v2776
      %v2789 = vadd.f32 %v2731, %v2766
      %v2790 = vadd.f32 %v2732, %v2777
      %v2791 = vadd.f32 %v2733, %v2768
      %v2792 = vadd.f32 %v2734, %v2770
      %v2793 = vadd.f32 %v2735, %v2778
      %v2794 = vadd.f32 %v2736, %v2772
      %v2795 = vadd.f32 %v2737, %v2774
      %v2796 = vadd.f32 %v2738, %v2779
      %v2797 = vadd.f32 %v2739, %v2776
      %s2798 = scalar_lea.vmem %s5, 2
      %v2799 = vld [vmem:[%s2798] ss:$8 sm:$0x3]
      %v2801 = vlaneseq
      %v2802 = vshrl.u32 %v2801, 7
      %v2803 = vsub.s32 0, %v2802
      %v2804 = vrot.slane %v2799, %v2803
      %v2805 = vlaneseq
      %v2806 = vshrl.u32 %v2805, 7
      %v2807 = vsub.s32 1, %v2806
      %v2808 = vrot.slane %v2799, %v2807
      %2809 = vrot.lane.b32.xlu0 %v2804, 16
      %v2810 = vpop.permute.xlu0 %2809
      %2811 = vrot.lane.b32.xlu0 %v2808, 16
      %v2812 = vpop.permute.xlu0 %2811
      %v2813 = vsel %vm810, %v2810, %v2812
      %v2817 = vmul.f32 %v2693, %v2810
      %v2818 = vmul.f32 %v2694, %v2813
      %v2819 = vmul.f32 %v2695, %v2812
      %v2820 = vmul.f32 %v2697, %v2810
      %v2821 = vmul.f32 %v2698, %v2813
      %v2822 = vmul.f32 %v2699, %v2812
      %v2823 = vmul.f32 %v2701, %v2810
      %v2824 = vmul.f32 %v2702, %v2813
      %v2825 = vmul.f32 %v2703, %v2812
      %2835 = vrot.lane.b32.xlu0 %v2817, 96
      %v2836 = vpop.permute.xlu0 %2835
      %2837 = vrot.lane.b32.xlu0 %v2818, 96
      %v2838 = vpop.permute.xlu0 %2837
      %2839 = vrot.lane.b32.xlu0 %v2819, 96
      %v2840 = vpop.permute.xlu0 %2839
      %2841 = vrot.lane.b32.xlu0 %v2820, 96
      %v2842 = vpop.permute.xlu0 %2841
      %2843 = vrot.lane.b32.xlu0 %v2821, 96
      %v2844 = vpop.permute.xlu0 %2843
      %2845 = vrot.lane.b32.xlu0 %v2822, 96
      %v2846 = vpop.permute.xlu0 %2845
      %2847 = vrot.lane.b32.xlu0 %v2823, 96
      %v2848 = vpop.permute.xlu0 %2847
      %2849 = vrot.lane.b32.xlu0 %v2824, 96
      %v2850 = vpop.permute.xlu0 %2849
      %2851 = vrot.lane.b32.xlu0 %v2825, 96
      %v2852 = vpop.permute.xlu0 %2851
      %v2853 = vsel %vm634, %v2836, %v2838
      %v2854 = vsel %vm634, %v2838, %v2840
      %v2855 = vsel %vm634, %v2842, %v2844
      %v2856 = vsel %vm634, %v2844, %v2846
      %v2857 = vsel %vm634, %v2848, %v2850
      %v2858 = vsel %vm634, %v2850, %v2852
      %v2868 = vadd.f32 %v2789, %v2836
      %v2869 = vadd.f32 %v2790, %v2853
      %v2870 = vadd.f32 %v2791, %v2854
      %v2871 = vadd.f32 %v2792, %v2842
      %v2872 = vadd.f32 %v2793, %v2855
      %v2873 = vadd.f32 %v2794, %v2856
      %v2874 = vadd.f32 %v2795, %v2848
      %v2875 = vadd.f32 %v2796, %v2857
      %v2876 = vadd.f32 %v2797, %v2858
      %v2877 = vld [vmem:[#allocation2 + $0x40] sm:$0xff]
      %v2878 = vld [vmem:[#allocation2 + $0x48] sm:$0xff]
      %v2879 = vld [vmem:[#allocation2 + $0x50] sm:$0xff]
      %v2880 = vld [vmem:[#allocation2 + $0x58] sm:$0xff]
      %s2881 = scalar_lea.vmem %s5, 3
      %v2882 = vld [vmem:[%s2881] ss:$8 sm:$0x3]
      %v2884 = vlaneseq
      %v2885 = vshrl.u32 %v2884, 7
      %v2886 = vsub.s32 0, %v2885
      %v2887 = vrot.slane %v2882, %v2886
      %v2888 = vlaneseq
      %v2889 = vshrl.u32 %v2888, 7
      %v2890 = vsub.s32 1, %v2889
      %v2891 = vrot.slane %v2882, %v2890
      %2892 = vrot.lane.b32.xlu0 %v2887, 112
      %v2893 = vpop.permute.xlu0 %2892
      %2894 = vrot.lane.b32.xlu0 %v2891, 112
      %v2895 = vpop.permute.xlu0 %2894
      %v2896 = vsel %vm672, %v2893, %v2895
      %v2900 = vmul.f32 %v2696, %v2893
      %v2901 = vmul.f32 %v2697, %v2896
      %v2902 = vmul.f32 %v2698, %v2895
      %v2903 = vmul.f32 %v2877, %v2893
      %v2904 = vmul.f32 %v2878, %v2896
      %v2905 = vmul.f32 %v2879, %v2895
      %v2912 = vrot.slane %v2900, 1
      %v2913 = vrot.slane %v2901, 1
      %v2914 = vrot.slane %v2902, 1
      %v2915 = vrot.slane %v2903, 1
      %v2916 = vsel %vm1001, %v2912, %v2915
      %v2917 = vrot.slane %v2904, 1
      %v2918 = vsel %vm1001, %v2913, %v2917
      %v2919 = vrot.slane %v2905, 1
      %v2920 = vsel %vm1001, %v2914, %v2919
      %v2930 = vadd.f32 %v2868, %v2912
      %v2931 = vadd.f32 %v2869, %v2913
      %v2932 = vadd.f32 %v2870, %v2914
      %v2933 = vadd.f32 %v2871, %v2916
      %v2934 = vadd.f32 %v2872, %v2918
      %v2935 = vadd.f32 %v2873, %v2920
      %v2936 = vadd.f32 %v2874, %v2915
      %v2937 = vadd.f32 %v2875, %v2917
      %v2938 = vadd.f32 %v2876, %v2919
      %s2939 = scalar_lea.vmem %s5, 4
      %v2940 = vld [vmem:[%s2939] ss:$8 sm:$0x3]
      %v2942 = vlaneseq
      %v2943 = vshrl.u32 %v2942, 7
      %v2944 = vsub.s32 0, %v2943
      %v2945 = vrot.slane %v2940, %v2944
      %v2946 = vlaneseq
      %v2947 = vshrl.u32 %v2946, 7
      %v2948 = vsub.s32 1, %v2947
      %v2949 = vrot.slane %v2940, %v2948
      %v2952 = vmul.f32 %v2697, %v2945
      %v2953 = vmul.f32 %v2698, %v2949
      %v2954 = vmul.f32 %v2878, %v2945
      %v2955 = vmul.f32 %v2879, %v2949
      %v2960 = vrot.slane %v2952, 1
      %v2961 = vrot.slane %v2953, 1
      %v2962 = vrot.slane %v2954, 1
      %v2963 = vsel %vm1001, %v2960, %v2962
      %v2964 = vrot.slane %v2955, 1
      %v2965 = vsel %vm1001, %v2961, %v2964
      %2966 = vrot.lane.b32.xlu0 %v2960, 112
      %v2967 = vpop.permute.xlu0 %2966
      %2968 = vrot.lane.b32.xlu0 %v2961, 112
      %v2969 = vpop.permute.xlu0 %2968
      %2970 = vrot.lane.b32.xlu0 %v2963, 112
      %v2971 = vpop.permute.xlu0 %2970
      %2972 = vrot.lane.b32.xlu0 %v2965, 112
      %v2973 = vpop.permute.xlu0 %2972
      %2974 = vrot.lane.b32.xlu0 %v2962, 112
      %v2975 = vpop.permute.xlu0 %2974
      %2976 = vrot.lane.b32.xlu0 %v2964, 112
      %v2977 = vpop.permute.xlu0 %2976
      %v2978 = vsel %vm672, %v2967, %v2969
      %v2979 = vsel %vm672, %v2971, %v2973
      %v2980 = vsel %vm672, %v2975, %v2977
      %v2990 = vadd.f32 %v2930, %v2967
      %v2991 = vadd.f32 %v2931, %v2978
      %v2992 = vadd.f32 %v2932, %v2969
      %v2993 = vadd.f32 %v2933, %v2971
      %v2994 = vadd.f32 %v2934, %v2979
      %v2995 = vadd.f32 %v2935, %v2973
      %v2996 = vadd.f32 %v2936, %v2975
      %v2997 = vadd.f32 %v2937, %v2980
      %v2998 = vadd.f32 %v2938, %v2977
      %s2999 = scalar_lea.vmem %s5, 5
      %v3000 = vld [vmem:[%s2999] ss:$8 sm:$0x3]
      %v3002 = vlaneseq
      %v3003 = vshrl.u32 %v3002, 7
      %v3004 = vsub.s32 0, %v3003
      %v3005 = vrot.slane %v3000, %v3004
      %v3006 = vlaneseq
      %v3007 = vshrl.u32 %v3006, 7
      %v3008 = vsub.s32 1, %v3007
      %v3009 = vrot.slane %v3000, %v3008
      %3010 = vrot.lane.b32.xlu0 %v3005, 16
      %v3011 = vpop.permute.xlu0 %3010
      %3012 = vrot.lane.b32.xlu0 %v3009, 16
      %v3013 = vpop.permute.xlu0 %3012
      %v3014 = vsel %vm810, %v3011, %v3013
      %v3018 = vmul.f32 %v2697, %v3011
      %v3019 = vmul.f32 %v2698, %v3014
      %v3020 = vmul.f32 %v2699, %v3013
      %v3021 = vmul.f32 %v2878, %v3011
      %v3022 = vmul.f32 %v2879, %v3014
      %v3023 = vmul.f32 %v2880, %v3013
      %v3030 = vrot.slane %v3018, 1
      %v3031 = vrot.slane %v3019, 1
      %v3032 = vrot.slane %v3020, 1
      %v3033 = vrot.slane %v3021, 1
      %v3034 = vsel %vm1001, %v3030, %v3033
      %v3035 = vrot.slane %v3022, 1
      %v3036 = vsel %vm1001, %v3031, %v3035
      %v3037 = vrot.slane %v3023, 1
      %v3038 = vsel %vm1001, %v3032, %v3037
      %3039 = vrot.lane.b32.xlu0 %v3030, 96
      %v3040 = vpop.permute.xlu0 %3039
      %3041 = vrot.lane.b32.xlu0 %v3031, 96
      %v3042 = vpop.permute.xlu0 %3041
      %3043 = vrot.lane.b32.xlu0 %v3032, 96
      %v3044 = vpop.permute.xlu0 %3043
      %3045 = vrot.lane.b32.xlu0 %v3034, 96
      %v3046 = vpop.permute.xlu0 %3045
      %3047 = vrot.lane.b32.xlu0 %v3036, 96
      %v3048 = vpop.permute.xlu0 %3047
      %3049 = vrot.lane.b32.xlu0 %v3038, 96
      %v3050 = vpop.permute.xlu0 %3049
      %3051 = vrot.lane.b32.xlu0 %v3033, 96
      %v3052 = vpop.permute.xlu0 %3051
      %3053 = vrot.lane.b32.xlu0 %v3035, 96
      %v3054 = vpop.permute.xlu0 %3053
      %3055 = vrot.lane.b32.xlu0 %v3037, 96
      %v3056 = vpop.permute.xlu0 %3055
      %v3057 = vsel %vm634, %v3040, %v3042
      %v3058 = vsel %vm634, %v3042, %v3044
      %v3059 = vsel %vm634, %v3046, %v3048
      %v3060 = vsel %vm634, %v3048, %v3050
      %v3061 = vsel %vm634, %v3052, %v3054
      %v3062 = vsel %vm634, %v3054, %v3056
      %v3072 = vadd.f32 %v2990, %v3040
      %v3073 = vadd.f32 %v2991, %v3057
      %v3074 = vadd.f32 %v2992, %v3058
      %v3075 = vadd.f32 %v2993, %v3046
      %v3076 = vadd.f32 %v2994, %v3059
      %v3077 = vadd.f32 %v2995, %v3060
      %v3078 = vadd.f32 %v2996, %v3052
      %v3079 = vadd.f32 %v2997, %v3061
      %v3080 = vadd.f32 %v2998, %v3062
      %v3081 = vld [vmem:[#allocation2 + $0x20] sm:$0xfe]
      %v3082 = vld [vmem:[#allocation2 + $0x28] sm:$0xfe]
      %v3083 = vld [vmem:[#allocation2 + $0x30] sm:$0xfe]
      %v3084 = vld [vmem:[#allocation2 + $0x38] sm:$0xfe]
      %v3085 = vld [vmem:[#allocation2 + $0x40] sm:$0xff]
      %v3086 = vld [vmem:[#allocation2 + $0x48] sm:$0xff]
      %v3087 = vld [vmem:[#allocation2 + $0x50] sm:$0xff]
      %v3088 = vld [vmem:[#allocation2 + $0x58] sm:$0xff]
      %v3089 = vld [vmem:[#allocation2 + $0x60] sm:$0x1]
      %v3090 = vld [vmem:[#allocation2 + $0x68] sm:$0x1]
      %v3091 = vld [vmem:[#allocation2 + $0x70] sm:$0x1]
      %v3092 = vld [vmem:[#allocation2 + $0x78] sm:$0x1]
      %s3093 = scalar_lea.vmem %s5, 6
      %v3094 = vld [vmem:[%s3093] ss:$8 sm:$0x3]
      %v3096 = vlaneseq
      %v3097 = vshrl.u32 %v3096, 7
      %v3098 = vsub.s32 0, %v3097
      %v3099 = vrot.slane %v3094, %v3098
      %v3100 = vlaneseq
      %v3101 = vshrl.u32 %v3100, 7
      %v3102 = vsub.s32 1, %v3101
      %v3103 = vrot.slane %v3094, %v3102
      %3104 = vrot.lane.b32.xlu0 %v3099, 112
      %v3105 = vpop.permute.xlu0 %3104
      %3106 = vrot.lane.b32.xlu0 %v3103, 112
      %v3107 = vpop.permute.xlu0 %3106
      %v3108 = vsel %vm672, %v3105, %v3107
      %v3112 = vmul.f32 %v3081, %v3105
      %v3113 = vmul.f32 %v3082, %v3108
      %v3114 = vmul.f32 %v3083, %v3107
      %v3115 = vmul.f32 %v3085, %v3105
      %v3116 = vmul.f32 %v3086, %v3108
      %v3117 = vmul.f32 %v3087, %v3107
      %v3118 = vmul.f32 %v3089, %v3105
      %v3119 = vmul.f32 %v3090, %v3108
      %v3120 = vmul.f32 %v3091, %v3107
      %v3130 = vrot.slane %v3112, 2
      %v3131 = vrot.slane %v3113, 2
      %v3132 = vrot.slane %v3114, 2
      %v3133 = vrot.slane %v3115, 2
      %v3134 = vsel %vm1420, %v3130, %v3133
      %v3135 = vrot.slane %v3116, 2
      %v3136 = vsel %vm1420, %v3131, %v3135
      %v3137 = vrot.slane %v3117, 2
      %v3138 = vsel %vm1420, %v3132, %v3137
      %v3139 = vrot.slane %v3118, 2
      %v3140 = vsel %vm1420, %v3133, %v3139
      %v3141 = vrot.slane %v3119, 2
      %v3142 = vsel %vm1420, %v3135, %v3141
      %v3143 = vrot.slane %v3120, 2
      %v3144 = vsel %vm1420, %v3137, %v3143
      %v3154 = vadd.f32 %v3072, %v3130
      %v3155 = vadd.f32 %v3073, %v3131
      %v3156 = vadd.f32 %v3074, %v3132
      %v3157 = vadd.f32 %v3075, %v3134
      %v3158 = vadd.f32 %v3076, %v3136
      %v3159 = vadd.f32 %v3077, %v3138
      %v3160 = vadd.f32 %v3078, %v3140
      %v3161 = vadd.f32 %v3079, %v3142
      %v3162 = vadd.f32 %v3080, %v3144
      %s3163 = scalar_lea.vmem %s5, 7
      %v3164 = vld [vmem:[%s3163] ss:$8 sm:$0x3]
      %v3166 = vlaneseq
      %v3167 = vshrl.u32 %v3166, 7
      %v3168 = vsub.s32 0, %v3167
      %v3169 = vrot.slane %v3164, %v3168
      %v3170 = vlaneseq
      %v3171 = vshrl.u32 %v3170, 7
      %v3172 = vsub.s32 1, %v3171
      %v3173 = vrot.slane %v3164, %v3172
      %v3176 = vmul.f32 %v3082, %v3169
      %v3177 = vmul.f32 %v3083, %v3173
      %v3178 = vmul.f32 %v3086, %v3169
      %v3179 = vmul.f32 %v3087, %v3173
      %v3180 = vmul.f32 %v3090, %v3169
      %v3181 = vmul.f32 %v3091, %v3173
      %v3188 = vrot.slane %v3176, 2
      %v3189 = vrot.slane %v3177, 2
      %v3190 = vrot.slane %v3178, 2
      %v3191 = vsel %vm1420, %v3188, %v3190
      %v3192 = vrot.slane %v3179, 2
      %v3193 = vsel %vm1420, %v3189, %v3192
      %v3194 = vrot.slane %v3180, 2
      %v3195 = vsel %vm1420, %v3190, %v3194
      %v3196 = vrot.slane %v3181, 2
      %v3197 = vsel %vm1420, %v3192, %v3196
      %3198 = vrot.lane.b32.xlu0 %v3188, 112
      %v3199 = vpop.permute.xlu0 %3198
      %3200 = vrot.lane.b32.xlu0 %v3189, 112
      %v3201 = vpop.permute.xlu0 %3200
      %3202 = vrot.lane.b32.xlu0 %v3191, 112
      %v3203 = vpop.permute.xlu0 %3202
      %3204 = vrot.lane.b32.xlu0 %v3193, 112
      %v3205 = vpop.permute.xlu0 %3204
      %3206 = vrot.lane.b32.xlu0 %v3195, 112
      %v3207 = vpop.permute.xlu0 %3206
      %3208 = vrot.lane.b32.xlu0 %v3197, 112
      %v3209 = vpop.permute.xlu0 %3208
      %v3210 = vsel %vm672, %v3199, %v3201
      %v3211 = vsel %vm672, %v3203, %v3205
      %v3212 = vsel %vm672, %v3207, %v3209
      %v3222 = vadd.f32 %v3154, %v3199
      %v3223 = vadd.f32 %v3155, %v3210
      %v3224 = vadd.f32 %v3156, %v3201
      %v3225 = vadd.f32 %v3157, %v3203
      %v3226 = vadd.f32 %v3158, %v3211
      %v3227 = vadd.f32 %v3159, %v3205
      %v3228 = vadd.f32 %v3160, %v3207
      %v3229 = vadd.f32 %v3161, %v3212
      %v3230 = vadd.f32 %v3162, %v3209
      %s3231 = scalar_lea.vmem %s5, 16
      %v3232 = vld [vmem:[%s3231] ss:$8 sm:$0x3]
      %v3234 = vlaneseq
      %v3235 = vshrl.u32 %v3234, 7
      %v3236 = vsub.s32 0, %v3235
      %v3237 = vrot.slane %v3232, %v3236
      %v3238 = vlaneseq
      %v3239 = vshrl.u32 %v3238, 7
      %v3240 = vsub.s32 1, %v3239
      %v3241 = vrot.slane %v3232, %v3240
      %3242 = vrot.lane.b32.xlu0 %v3237, 16
      %v3243 = vpop.permute.xlu0 %3242
      %3244 = vrot.lane.b32.xlu0 %v3241, 16
      %v3245 = vpop.permute.xlu0 %3244
      %v3246 = vsel %vm810, %v3243, %v3245
      %v3250 = vmul.f32 %v3082, %v3243
      %v3251 = vmul.f32 %v3083, %v3246
      %v3252 = vmul.f32 %v3084, %v3245
      %v3253 = vmul.f32 %v3086, %v3243
      %v3254 = vmul.f32 %v3087, %v3246
      %v3255 = vmul.f32 %v3088, %v3245
      %v3256 = vmul.f32 %v3090, %v3243
      %v3257 = vmul.f32 %v3091, %v3246
      %v3258 = vmul.f32 %v3092, %v3245
      %v3268 = vrot.slane %v3250, 2
      %v3269 = vrot.slane %v3251, 2
      %v3270 = vrot.slane %v3252, 2
      %v3271 = vrot.slane %v3253, 2
      %v3272 = vsel %vm1420, %v3268, %v3271
      %v3273 = vrot.slane %v3254, 2
      %v3274 = vsel %vm1420, %v3269, %v3273
      %v3275 = vrot.slane %v3255, 2
      %v3276 = vsel %vm1420, %v3270, %v3275
      %v3277 = vrot.slane %v3256, 2
      %v3278 = vsel %vm1420, %v3271, %v3277
      %v3279 = vrot.slane %v3257, 2
      %v3280 = vsel %vm1420, %v3273, %v3279
      %v3281 = vrot.slane %v3258, 2
      %v3282 = vsel %vm1420, %v3275, %v3281
      %3283 = vrot.lane.b32.xlu0 %v3268, 96
      %v3284 = vpop.permute.xlu0 %3283
      %3285 = vrot.lane.b32.xlu0 %v3269, 96
      %v3286 = vpop.permute.xlu0 %3285
      %3287 = vrot.lane.b32.xlu0 %v3270, 96
      %v3288 = vpop.permute.xlu0 %3287
      %3289 = vrot.lane.b32.xlu0 %v3272, 96
      %v3290 = vpop.permute.xlu0 %3289
      %3291 = vrot.lane.b32.xlu0 %v3274, 96
      %v3292 = vpop.permute.xlu0 %3291
      %3293 = vrot.lane.b32.xlu0 %v3276, 96
      %v3294 = vpop.permute.xlu0 %3293
      %3295 = vrot.lane.b32.xlu0 %v3278, 96
      %v3296 = vpop.permute.xlu0 %3295
      %3297 = vrot.lane.b32.xlu0 %v3280, 96
      %v3298 = vpop.permute.xlu0 %3297
      %3299 = vrot.lane.b32.xlu0 %v3282, 96
      %v3300 = vpop.permute.xlu0 %3299
      %v3301 = vsel %vm634, %v3284, %v3286
      %v3302 = vsel %vm634, %v3286, %v3288
      %v3303 = vsel %vm634, %v3290, %v3292
      %v3304 = vsel %vm634, %v3292, %v3294
      %v3305 = vsel %vm634, %v3296, %v3298
      %v3306 = vsel %vm634, %v3298, %v3300
      %v3316 = vadd.f32 %v3222, %v3284
      %v3317 = vadd.f32 %v3223, %v3301
      %v3318 = vadd.f32 %v3224, %v3302
      %v3319 = vadd.f32 %v3225, %v3290
      %v3320 = vadd.f32 %v3226, %v3303
      %v3321 = vadd.f32 %v3227, %v3304
      %v3322 = vadd.f32 %v3228, %v3296
      %v3323 = vadd.f32 %v3229, %v3305
      %v3324 = vadd.f32 %v3230, %v3306
      %v3325 = vld [vmem:[%s6] sm:$0x3]
      %v3327 = vlaneseq
      %v3328 = vshrl.u32 %v3327, 7
      %v3329 = vsub.s32 0, %v3328
      %v3330 = vrot.slane %v3325, %v3329
      %v3331 = vlaneseq
      %v3332 = vshrl.u32 %v3331, 7
      %v3333 = vsub.s32 1, %v3332
      %v3334 = vrot.slane %v3325, %v3333
      %3335 = vrot.lane.b32.xlu0 %v3330, 112
      %v3336 = vpop.permute.xlu0 %3335
      %3337 = vrot.lane.b32.xlu0 %v3334, 112
      %v3338 = vpop.permute.xlu0 %3337
      %v3339 = vsel %vm672, %v3336, %v3338
      %v3343 = vadd.f32 %v3316, %v3336
      %v3344 = vadd.f32 %v3317, %v3339
      %v3345 = vadd.f32 %v3318, %v3338
      %v3346 = vadd.f32 %v3319, %v3336
      %v3347 = vadd.f32 %v3320, %v3339
      %v3348 = vadd.f32 %v3321, %v3338
      %v3349 = vadd.f32 %v3322, %v3336
      %v3350 = vadd.f32 %v3323, %v3339
      %v3351 = vadd.f32 %v3324, %v3338
      %v3352 = vmul.f32 %v3343, 0.70710677
      %v3353 = vmul.f32 %v3344, 0.70710677
      %v3354 = vmul.f32 %v3345, 0.70710677
      %v3355 = vmul.f32 %v3346, 0.70710677
      %v3356 = vmul.f32 %v3347, 0.70710677
      %v3357 = vmul.f32 %v3348, 0.70710677
      %v3358 = vmul.f32 %v3349, 0.70710677
      %v3359 = vmul.f32 %v3350, 0.70710677
      %v3360 = vmul.f32 %v3351, 0.70710677
      %v3361 = vand.u32 2147483647, %v3352
      %v3362 = vand.u32 2147483647, %v3353
      %v3363 = vand.u32 2147483647, %v3354
      %v3364 = vand.u32 2147483647, %v3355
      %v3365 = vand.u32 2147483647, %v3356
      %v3366 = vand.u32 2147483647, %v3357
      %v3367 = vand.u32 2147483647, %v3358
      %v3368 = vand.u32 2147483647, %v3359
      %v3369 = vand.u32 2147483647, %v3360
      %v3370 = vmul.f32 %v3361, 0.3275911
      %v3371 = vmul.f32 %v3362, 0.3275911
      %v3372 = vmul.f32 %v3363, 0.3275911
      %v3373 = vmul.f32 %v3364, 0.3275911
      %v3374 = vmul.f32 %v3365, 0.3275911
      %v3375 = vmul.f32 %v3366, 0.3275911
      %v3376 = vmul.f32 %v3367, 0.3275911
      %v3377 = vmul.f32 %v3368, 0.3275911
      %v3378 = vmul.f32 %v3369, 0.3275911
      %v3379 = vadd.f32 %v3370, 1.0
      %v3380 = vadd.f32 %v3371, 1.0
      %v3381 = vadd.f32 %v3372, 1.0
      %v3382 = vadd.f32 %v3373, 1.0
      %v3383 = vadd.f32 %v3374, 1.0
      %v3384 = vadd.f32 %v3375, 1.0
      %v3385 = vadd.f32 %v3376, 1.0
      %v3386 = vadd.f32 %v3377, 1.0
      %v3387 = vadd.f32 %v3378, 1.0
      %v3388 = vrcp.pop %v3379
      %v3389 = vrcp.pop %v3380
      %v3390 = vrcp.pop %v3381
      %v3391 = vrcp.pop %v3382
      %v3392 = vrcp.pop %v3383
      %v3393 = vrcp.pop %v3384
      %v3394 = vrcp.pop %v3385
      %v3395 = vrcp.pop %v3386
      %v3396 = vrcp.pop %v3387
      %v3397 = vmul.f32 %v3388, 1.0614054
      %v3398 = vmul.f32 %v3389, 1.0614054
      %v3399 = vmul.f32 %v3390, 1.0614054
      %v3400 = vmul.f32 %v3391, 1.0614054
      %v3401 = vmul.f32 %v3392, 1.0614054
      %v3402 = vmul.f32 %v3393, 1.0614054
      %v3403 = vmul.f32 %v3394, 1.0614054
      %v3404 = vmul.f32 %v3395, 1.0614054
      %v3405 = vmul.f32 %v3396, 1.0614054
      %v3406 = vadd.f32 %v3397, -1.4531521
      %v3407 = vadd.f32 %v3398, -1.4531521
      %v3408 = vadd.f32 %v3399, -1.4531521
      %v3409 = vadd.f32 %v3400, -1.4531521
      %v3410 = vadd.f32 %v3401, -1.4531521
      %v3411 = vadd.f32 %v3402, -1.4531521
      %v3412 = vadd.f32 %v3403, -1.4531521
      %v3413 = vadd.f32 %v3404, -1.4531521
      %v3414 = vadd.f32 %v3405, -1.4531521
      %v3415 = vmul.f32 %v3388, %v3406
      %v3416 = vmul.f32 %v3389, %v3407
      %v3417 = vmul.f32 %v3390, %v3408
      %v3418 = vmul.f32 %v3391, %v3409
      %v3419 = vmul.f32 %v3392, %v3410
      %v3420 = vmul.f32 %v3393, %v3411
      %v3421 = vmul.f32 %v3394, %v3412
      %v3422 = vmul.f32 %v3395, %v3413
      %v3423 = vmul.f32 %v3396, %v3414
      %v3424 = vadd.f32 %v3415, 1.4214138
      %v3425 = vadd.f32 %v3416, 1.4214138
      %v3426 = vadd.f32 %v3417, 1.4214138
      %v3427 = vadd.f32 %v3418, 1.4214138
      %v3428 = vadd.f32 %v3419, 1.4214138
      %v3429 = vadd.f32 %v3420, 1.4214138
      %v3430 = vadd.f32 %v3421, 1.4214138
      %v3431 = vadd.f32 %v3422, 1.4214138
      %v3432 = vadd.f32 %v3423, 1.4214138
      %v3433 = vmul.f32 %v3388, %v3424
      %v3434 = vmul.f32 %v3389, %v3425
      %v3435 = vmul.f32 %v3390, %v3426
      %v3436 = vmul.f32 %v3391, %v3427
      %v3437 = vmul.f32 %v3392, %v3428
      %v3438 = vmul.f32 %v3393, %v3429
      %v3439 = vmul.f32 %v3394, %v3430
      %v3440 = vmul.f32 %v3395, %v3431
      %v3441 = vmul.f32 %v3396, %v3432
      %v3442 = vadd.f32 %v3433, -0.28449672
      %v3443 = vadd.f32 %v3434, -0.28449672
      %v3444 = vadd.f32 %v3435, -0.28449672
      %v3445 = vadd.f32 %v3436, -0.28449672
      %v3446 = vadd.f32 %v3437, -0.28449672
      %v3447 = vadd.f32 %v3438, -0.28449672
      %v3448 = vadd.f32 %v3439, -0.28449672
      %v3449 = vadd.f32 %v3440, -0.28449672
      %v3450 = vadd.f32 %v3441, -0.28449672
      %v3451 = vmul.f32 %v3388, %v3442
      %v3452 = vmul.f32 %v3389, %v3443
      %v3453 = vmul.f32 %v3390, %v3444
      %v3454 = vmul.f32 %v3391, %v3445
      %v3455 = vmul.f32 %v3392, %v3446
      %v3456 = vmul.f32 %v3393, %v3447
      %v3457 = vmul.f32 %v3394, %v3448
      %v3458 = vmul.f32 %v3395, %v3449
      %v3459 = vmul.f32 %v3396, %v3450
      %v3460 = vadd.f32 %v3451, 0.2548296
      %v3461 = vadd.f32 %v3452, 0.2548296
      %v3462 = vadd.f32 %v3453, 0.2548296
      %v3463 = vadd.f32 %v3454, 0.2548296
      %v3464 = vadd.f32 %v3455, 0.2548296
      %v3465 = vadd.f32 %v3456, 0.2548296
      %v3466 = vadd.f32 %v3457, 0.2548296
      %v3467 = vadd.f32 %v3458, 0.2548296
      %v3468 = vadd.f32 %v3459, 0.2548296
      %v3469 = vmul.f32 %v3388, %v3460
      %v3470 = vmul.f32 %v3389, %v3461
      %v3471 = vmul.f32 %v3390, %v3462
      %v3472 = vmul.f32 %v3391, %v3463
      %v3473 = vmul.f32 %v3392, %v3464
      %v3474 = vmul.f32 %v3393, %v3465
      %v3475 = vmul.f32 %v3394, %v3466
      %v3476 = vmul.f32 %v3395, %v3467
      %v3477 = vmul.f32 %v3396, %v3468
      %v3478 = vsub.f32 0.0, %v3361
      %v3479 = vsub.f32 0.0, %v3362
      %v3480 = vsub.f32 0.0, %v3363
      %v3481 = vsub.f32 0.0, %v3364
      %v3482 = vsub.f32 0.0, %v3365
      %v3483 = vsub.f32 0.0, %v3366
      %v3484 = vsub.f32 0.0, %v3367
      %v3485 = vsub.f32 0.0, %v3368
      %v3486 = vsub.f32 0.0, %v3369
      %v3487 = vmul.f32 %v3478, %v3361
      %v3488 = vmul.f32 %v3479, %v3362
      %v3489 = vmul.f32 %v3480, %v3363
      %v3490 = vmul.f32 %v3481, %v3364
      %v3491 = vmul.f32 %v3482, %v3365
      %v3492 = vmul.f32 %v3483, %v3366
      %v3493 = vmul.f32 %v3484, %v3367
      %v3494 = vmul.f32 %v3485, %v3368
      %v3495 = vmul.f32 %v3486, %v3369
      %v3496 = vmul.f32 %v3487, 1.442695
      %v3497 = vpow.pop %v3496
      %v3498 = vmul.f32 %v3488, 1.442695
      %v3499 = vpow.pop %v3498
      %v3500 = vmul.f32 %v3489, 1.442695
      %v3501 = vpow.pop %v3500
      %v3502 = vmul.f32 %v3490, 1.442695
      %v3503 = vpow.pop %v3502
      %v3504 = vmul.f32 %v3491, 1.442695
      %v3505 = vpow.pop %v3504
      %v3506 = vmul.f32 %v3492, 1.442695
      %v3507 = vpow.pop %v3506
      %v3508 = vmul.f32 %v3493, 1.442695
      %v3509 = vpow.pop %v3508
      %v3510 = vmul.f32 %v3494, 1.442695
      %v3511 = vpow.pop %v3510
      %v3512 = vmul.f32 %v3495, 1.442695
      %v3513 = vpow.pop %v3512
      %v3514 = vmul.f32 %v3469, %v3497
      %v3515 = vmul.f32 %v3470, %v3499
      %v3516 = vmul.f32 %v3471, %v3501
      %v3517 = vmul.f32 %v3472, %v3503
      %v3518 = vmul.f32 %v3473, %v3505
      %v3519 = vmul.f32 %v3474, %v3507
      %v3520 = vmul.f32 %v3475, %v3509
      %v3521 = vmul.f32 %v3476, %v3511
      %v3522 = vmul.f32 %v3477, %v3513
      %v3523 = vsub.f32 1.0, %v3514
      %v3524 = vsub.f32 1.0, %v3515
      %v3525 = vsub.f32 1.0, %v3516
      %v3526 = vsub.f32 1.0, %v3517
      %v3527 = vsub.f32 1.0, %v3518
      %v3528 = vsub.f32 1.0, %v3519
      %v3529 = vsub.f32 1.0, %v3520
      %v3530 = vsub.f32 1.0, %v3521
      %v3531 = vsub.f32 1.0, %v3522
      %vm3532 = vcmp.ge.f32.partialorder %v3352, 0.0
      %vm3533 = vcmp.ge.f32.partialorder %v3353, 0.0
      %vm3534 = vcmp.ge.f32.partialorder %v3354, 0.0
      %vm3535 = vcmp.ge.f32.partialorder %v3355, 0.0
      %vm3536 = vcmp.ge.f32.partialorder %v3356, 0.0
      %vm3537 = vcmp.ge.f32.partialorder %v3357, 0.0
      %vm3538 = vcmp.ge.f32.partialorder %v3358, 0.0
      %vm3539 = vcmp.ge.f32.partialorder %v3359, 0.0
      %vm3540 = vcmp.ge.f32.partialorder %v3360, 0.0
      %v3541 = vsub.f32 0.0, %v3523
      %v3542 = vsub.f32 0.0, %v3524
      %v3543 = vsub.f32 0.0, %v3525
      %v3544 = vsub.f32 0.0, %v3526
      %v3545 = vsub.f32 0.0, %v3527
      %v3546 = vsub.f32 0.0, %v3528
      %v3547 = vsub.f32 0.0, %v3529
      %v3548 = vsub.f32 0.0, %v3530
      %v3549 = vsub.f32 0.0, %v3531
      %v3550 = vsel %vm3532, %v3523, %v3541
      %v3551 = vsel %vm3533, %v3524, %v3542
      %v3552 = vsel %vm3534, %v3525, %v3543
      %v3553 = vsel %vm3535, %v3526, %v3544
      %v3554 = vsel %vm3536, %v3527, %v3545
      %v3555 = vsel %vm3537, %v3528, %v3546
      %v3556 = vsel %vm3538, %v3529, %v3547
      %v3557 = vsel %vm3539, %v3530, %v3548
      %v3558 = vsel %vm3540, %v3531, %v3549
      %v3559 = vmul.f32 %v3343, 0.5
      %v3560 = vmul.f32 %v3344, 0.5
      %v3561 = vmul.f32 %v3345, 0.5
      %v3562 = vmul.f32 %v3346, 0.5
      %v3563 = vmul.f32 %v3347, 0.5
      %v3564 = vmul.f32 %v3348, 0.5
      %v3565 = vmul.f32 %v3349, 0.5
      %v3566 = vmul.f32 %v3350, 0.5
      %v3567 = vmul.f32 %v3351, 0.5
      %v3568 = vadd.f32 %v3550, 1.0
      %v3569 = vadd.f32 %v3551, 1.0
      %v3570 = vadd.f32 %v3552, 1.0
      %v3571 = vadd.f32 %v3553, 1.0
      %v3572 = vadd.f32 %v3554, 1.0
      %v3573 = vadd.f32 %v3555, 1.0
      %v3574 = vadd.f32 %v3556, 1.0
      %v3575 = vadd.f32 %v3557, 1.0
      %v3576 = vadd.f32 %v3558, 1.0
      %v3577 = vmul.f32 %v3559, %v3568
      %v3578 = vmul.f32 %v3560, %v3569
      %v3579 = vmul.f32 %v3561, %v3570
      %v3580 = vmul.f32 %v3562, %v3571
      %v3581 = vmul.f32 %v3563, %v3572
      %v3582 = vmul.f32 %v3564, %v3573
      %v3583 = vmul.f32 %v3565, %v3574
      %v3584 = vmul.f32 %v3566, %v3575
      %v3585 = vmul.f32 %v3567, %v3576
      %v3586 = vpack.c.bf16 %v3580, %v3577
      %v3587 = vpack.c.bf16 %v3581, %v3578
      %v3588 = vpack.c.bf16 %v3582, %v3579
      %v3589 = vpack.c.bf16 %v3583, %v3583
      %v3590 = vpack.c.bf16 %v3584, %v3584
      %v3591 = vpack.c.bf16 %v3585, %v3585
      %v3592 = vld [vmem:[%s7] sm:$0xff]
      %v3593 = vld [vmem:[%s7 + $0x8] sm:$0xff]
      %v3594 = vld [vmem:[%s7 + $0x10] sm:$0xff]
      %v3595 = vld [vmem:[%s7 + $0x18] sm:$0xff]
      %v3596 = vld [vmem:[%s7 + $0x20] sm:$0xff]
      %v3597 = vld [vmem:[%s7 + $0x28] sm:$0xff]
      %v3598 = vld [vmem:[%s7 + $0x30] sm:$0xff]
      %v3599 = vld [vmem:[%s7 + $0x38] sm:$0xff]
      %v3600 = vld [vmem:[%s7 + $0x40] sm:$0xff]
      %v3601 = vld [vmem:[%s7 + $0x48] sm:$0xff]
      %v3602 = vld [vmem:[%s7 + $0x50] sm:$0xff]
      %v3603 = vld [vmem:[%s7 + $0x58] sm:$0xff]
      %v3604 = vld [vmem:[%s7 + $0x60] sm:$0xff]
      %v3605 = vld [vmem:[%s7 + $0x68] sm:$0xff]
      %v3606 = vld [vmem:[%s7 + $0x70] sm:$0xff]
      %v3607 = vld [vmem:[%s7 + $0x78] sm:$0xff]
      %v3608 = vld [vmem:[%s7 + $0x80] sm:$0xff]
      %v3609 = vld [vmem:[%s7 + $0x88] sm:$0xff]
      %v3610 = vld [vmem:[%s7 + $0x90] sm:$0xff]
      %v3611 = vld [vmem:[%s7 + $0x98] sm:$0xff]
      %v3612 = vld [vmem:[%s7 + $0xa0] sm:$0xff]
      %v3613 = vld [vmem:[%s7 + $0xa8] sm:$0xff]
      %v3614 = vld [vmem:[%s7 + $0xb0] sm:$0xff]
      %v3615 = vld [vmem:[%s7 + $0xb8] sm:$0xff]
      %v3616 = vld [vmem:[%s7 + $0xc0] sm:$0xff]
      %v3617 = vld [vmem:[%s7 + $0xc8] sm:$0xff]
      %v3618 = vld [vmem:[%s7 + $0xd0] sm:$0xff]
      %v3619 = vld [vmem:[%s7 + $0xd8] sm:$0xff]
      %v3620 = vld [vmem:[%s7 + $0xe0] sm:$0xff]
      %v3621 = vld [vmem:[%s7 + $0xe8] sm:$0xff]
      %v3622 = vld [vmem:[%s7 + $0xf0] sm:$0xff]
      %v3623 = vld [vmem:[%s7 + $0xf8] sm:$0xff]
      %v3624 = vld [vmem:[%s8] sm:$0x3]
      %v3626 = vlaneseq
      %v3627 = vshrl.u32 %v3626, 7
      %v3628 = vsub.s32 0, %v3627
      %v3629 = vrot.slane %v3624, %v3628
      %v3630 = vlaneseq
      %v3631 = vshrl.u32 %v3630, 7
      %v3632 = vsub.s32 1, %v3631
      %v3633 = vrot.slane %v3624, %v3632
      %vm3636 = vsmask.f32 4352
      %v3638 = vshrl.u32 %v3586, 16
      %v3640 = vrot.slane %v3638, 3
      %v3641 = vshll.u32 %v3586, 16
      %v3643 = vrot.slane %v3641, 4
      %v3644 = vor.u32 %v3640, %v3643
      %v3646 = vshrl.u32 %v3589, 16
      %v3648 = vrot.slane %v3646, 3
      %v3649 = vshll.u32 %v3589, 16
      %v3651 = vrot.slane %v3649, 4
      %v3652 = vor.u32 %v3648, %v3651
      %v3653 = vsel %vm3636, %v3644, %v3652
      %v3655 = vshrl.u32 %v3587, 16
      %v3657 = vrot.slane %v3655, 3
      %v3658 = vshll.u32 %v3587, 16
      %v3660 = vrot.slane %v3658, 4
      %v3661 = vor.u32 %v3657, %v3660
      %v3663 = vshrl.u32 %v3590, 16
      %v3665 = vrot.slane %v3663, 3
      %v3666 = vshll.u32 %v3590, 16
      %v3668 = vrot.slane %v3666, 4
      %v3669 = vor.u32 %v3665, %v3668
      %v3670 = vsel %vm3636, %v3661, %v3669
      %v3672 = vshrl.u32 %v3588, 16
      %v3674 = vrot.slane %v3672, 3
      %v3675 = vshll.u32 %v3588, 16
      %v3677 = vrot.slane %v3675, 4
      %v3678 = vor.u32 %v3674, %v3677
      %v3680 = vshrl.u32 %v3591, 16
      %v3682 = vrot.slane %v3680, 3
      %v3683 = vshll.u32 %v3591, 16
      %v3685 = vrot.slane %v3683, 4
      %v3686 = vor.u32 %v3682, %v3685
      %v3687 = vsel %vm3636, %v3678, %v3686
      %3688 = vrot.lane.b32.xlu0 %v3653, 16
      %v3689 = vpop.permute.xlu0 %3688
      %3690 = vrot.lane.b32.xlu0 %v3670, 16
      %v3691 = vpop.permute.xlu0 %3690
      %3692 = vrot.lane.b32.xlu0 %v3687, 16
      %v3693 = vpop.permute.xlu0 %3692
      %vm3694 = vcmask 130048
      %v3695 = vsel %vm3694, %v3689, %v3691
      %v3696 = vsel %vm3694, %v3691, %v3693
      %v3731 = vunpack.c.l.b16 %v3592
      %v3732 = vunpack.c.h.b16 %v3592
      %v3733 = vunpack.c.l.b16 %v3593
      %v3734 = vunpack.c.h.b16 %v3593
      %v3735 = vunpack.c.l.b16 %v3594
      %v3736 = vunpack.c.h.b16 %v3594
      %v3737 = vunpack.c.l.b16 %v3595
      %v3738 = vunpack.c.h.b16 %v3595
      %v3739 = vunpack.c.l.b16 %v3596
      %v3740 = vunpack.c.h.b16 %v3596
      %v3741 = vunpack.c.l.b16 %v3597
      %v3742 = vunpack.c.h.b16 %v3597
      %v3743 = vunpack.c.l.b16 %v3598
      %v3744 = vunpack.c.h.b16 %v3598
      %v3745 = vunpack.c.l.b16 %v3599
      %v3746 = vunpack.c.h.b16 %v3599
      %v3747 = vunpack.c.l.b16 %v3600
      %v3748 = vunpack.c.h.b16 %v3600
      %v3749 = vunpack.c.l.b16 %v3601
      %v3750 = vunpack.c.h.b16 %v3601
      %v3751 = vunpack.c.l.b16 %v3602
      %v3752 = vunpack.c.h.b16 %v3602
      %v3753 = vunpack.c.l.b16 %v3603
      %v3754 = vunpack.c.h.b16 %v3603
      %v3755 = vunpack.c.l.b16 %v3604
      %v3756 = vunpack.c.h.b16 %v3604
      %v3757 = vunpack.c.l.b16 %v3605
      %v3758 = vunpack.c.h.b16 %v3605
      %v3759 = vunpack.c.l.b16 %v3606
      %v3760 = vunpack.c.h.b16 %v3606
      %v3761 = vunpack.c.l.b16 %v3607
      %v3762 = vunpack.c.h.b16 %v3607
      %v3763 = vunpack.c.l.b16 %v3608
      %v3764 = vunpack.c.h.b16 %v3608
      %v3765 = vunpack.c.l.b16 %v3609
      %v3766 = vunpack.c.h.b16 %v3609
      %v3767 = vunpack.c.l.b16 %v3610
      %v3768 = vunpack.c.h.b16 %v3610
      %v3769 = vunpack.c.l.b16 %v3611
      %v3770 = vunpack.c.h.b16 %v3611
      %v3771 = vunpack.c.l.b16 %v3612
      %v3772 = vunpack.c.h.b16 %v3612
      %v3773 = vunpack.c.l.b16 %v3613
      %v3774 = vunpack.c.h.b16 %v3613
      %v3775 = vunpack.c.l.b16 %v3614
      %v3776 = vunpack.c.h.b16 %v3614
      %v3777 = vunpack.c.l.b16 %v3615
      %v3778 = vunpack.c.h.b16 %v3615
      %v3779 = vunpack.c.l.b16 %v3616
      %v3780 = vunpack.c.h.b16 %v3616
      %v3781 = vunpack.c.l.b16 %v3617
      %v3782 = vunpack.c.h.b16 %v3617
      %v3783 = vunpack.c.l.b16 %v3618
      %v3784 = vunpack.c.h.b16 %v3618
      %v3785 = vunpack.c.l.b16 %v3619
      %v3786 = vunpack.c.h.b16 %v3619
      %v3787 = vunpack.c.l.b16 %v3620
      %v3788 = vunpack.c.h.b16 %v3620
      %v3789 = vunpack.c.l.b16 %v3621
      %v3790 = vunpack.c.h.b16 %v3621
      %v3791 = vunpack.c.l.b16 %v3622
      %v3792 = vunpack.c.h.b16 %v3622
      %v3793 = vunpack.c.l.b16 %v3623
      %v3794 = vunpack.c.h.b16 %v3623
      %v3795 = vpack.c.b16 %v3733, %v3731
      %v3796 = vpack.c.b16 %v3734, %v3732
      %v3797 = vpack.c.b16 %v3737, %v3735
      %v3798 = vpack.c.b16 %v3738, %v3736
      %v3799 = vpack.c.b16 %v3741, %v3739
      %v3800 = vpack.c.b16 %v3742, %v3740
      %v3801 = vpack.c.b16 %v3745, %v3743
      %v3802 = vpack.c.b16 %v3746, %v3744
      %v3803 = vpack.c.b16 %v3749, %v3747
      %v3804 = vpack.c.b16 %v3750, %v3748
      %v3805 = vpack.c.b16 %v3753, %v3751
      %v3806 = vpack.c.b16 %v3754, %v3752
      %v3807 = vpack.c.b16 %v3757, %v3755
      %v3808 = vpack.c.b16 %v3758, %v3756
      %v3809 = vpack.c.b16 %v3761, %v3759
      %v3810 = vpack.c.b16 %v3762, %v3760
      %v3811 = vpack.c.b16 %v3765, %v3763
      %v3812 = vpack.c.b16 %v3766, %v3764
      %v3813 = vpack.c.b16 %v3769, %v3767
      %v3814 = vpack.c.b16 %v3770, %v3768
      %v3815 = vpack.c.b16 %v3773, %v3771
      %v3816 = vpack.c.b16 %v3774, %v3772
      %v3817 = vpack.c.b16 %v3777, %v3775
      %v3818 = vpack.c.b16 %v3778, %v3776
      %v3819 = vpack.c.b16 %v3781, %v3779
      %v3820 = vpack.c.b16 %v3782, %v3780
      %v3821 = vpack.c.b16 %v3785, %v3783
      %v3822 = vpack.c.b16 %v3786, %v3784
      %v3823 = vpack.c.b16 %v3789, %v3787
      %v3824 = vpack.c.b16 %v3790, %v3788
      %v3825 = vpack.c.b16 %v3793, %v3791
      %v3826 = vpack.c.b16 %v3794, %v3792
      %3859 = vmatprep.subr.bf16.mxu0 %v3796
      %3860 = vmatpush1.bf16.msra.mxu0 %v3795
      %3861 = vmatprep.subr.bf16.mxu0 %v3798
      %3862 = vmatpush1.bf16.msra.mxu0 %v3797
      %3863 = vmatprep.subr.bf16.mxu0 %v3800
      %3864 = vmatpush1.bf16.msra.mxu0 %v3799
      %3865 = vmatprep.subr.bf16.mxu0 %v3802
      %3866 = vmatpush1.bf16.msra.mxu0 %v3801
      %3867 = vmatprep.subr.bf16.mxu0 %v3804
      %3868 = vmatpush1.bf16.msra.mxu0 %v3803
      %3869 = vmatprep.subr.bf16.mxu0 %v3806
      %3870 = vmatpush1.bf16.msra.mxu0 %v3805
      %3871 = vmatprep.subr.bf16.mxu0 %v3808
      %3872 = vmatpush1.bf16.msra.mxu0 %v3807
      %3873 = vmatprep.subr.bf16.mxu0 %v3810
      %3874 = vmatpush1.bf16.msra.mxu0 %v3809
      %3875 = vmatprep.subr.bf16.mxu0 %v3812
      %3876 = vmatpush1.bf16.msra.mxu0 %v3811
      %3877 = vmatprep.subr.bf16.mxu0 %v3814
      %3878 = vmatpush1.bf16.msra.mxu0 %v3813
      %3879 = vmatprep.subr.bf16.mxu0 %v3816
      %3880 = vmatpush1.bf16.msra.mxu0 %v3815
      %3881 = vmatprep.subr.bf16.mxu0 %v3818
      %3882 = vmatpush1.bf16.msra.mxu0 %v3817
      %3883 = vmatprep.subr.bf16.mxu0 %v3820
      %3884 = vmatpush1.bf16.msra.mxu0 %v3819
      %3885 = vmatprep.subr.bf16.mxu0 %v3822
      %3886 = vmatpush1.bf16.msra.mxu0 %v3821
      %3887 = vmatprep.subr.bf16.mxu0 %v3824
      %3888 = vmatpush1.bf16.msra.mxu0 %v3823
      %3889 = vmatprep.subr.bf16.mxu0 %v3826
      %3890 = vmatpush1.bf16.msra.mxu0 %v3825
      %3891 = vmatprep.mubr.bf16.mxu0 %v3696
      %3892 = vmatmul.mubr.bf16.gmra.mrb[0].mxu0 %v3695
      %v3893 = vpop.f32.mrb[0].mxu0
      %v3894 = vadd.f32 %v3629, %v3893
      %v3895 = vpop.f32.mrb[0].mxu0
      %v3896 = vadd.f32 %v3633, %v3895
      %v3897 = vpop.f32.mrb[0].mxu0
      %v3898 = vadd.f32 %v3629, %v3897
      %v3899 = vpop.f32.mrb[0].mxu0
      %v3900 = vadd.f32 %v3633, %v3899
      %3901 = vdwg.mxu0
      %v3902 = vadd.f32 %v3894, %v333
      %v3903 = vadd.f32 %v3896, %v334
      %v3904 = vadd.f32 %v3898, %v335
      %v3905 = vadd.f32 %v3900, %v336
      %3906 = vst [vmem:[%s332] sm:$0xff] %v3902
      %3907 = vst [vmem:[%s332 + $0x8] sm:$0xff] %v3903
      %3908 = vst [vmem:[%s332 + $0x10] sm:$0xff] %v3904
      %3909 = vst [vmem:[%s332 + $0x18] sm:$0xff] %v3905
      %p3910 = scmp.lt.s32.totalorder %s20, 1
      %s3911 = scalar_select %p3910, %s20, 1
      %s3912 = smul.addr %s3911, 4
      %s3913 = smul.addr %s3912, 8
      %s3914 = scalar_lea.vmem %s9, %s3913
      // Predicated region
      $region57: #{r_efem_forward.1} parent=55 // pred_check
        %p3915 = pneg %p232
      $region58: #{r_efem_forward.1} parent=55 // pred_check_branch
        %3917 = sbr.rel (%p3915) target = $region60
      $region59: #{r_efem_forward.1} parent=55 // pred_region
        _
      $region60: #{r_efem_forward.1} parent=55 // pred_fallthru
        _
    $region56: #{r_efem_forward.1} parent=5 // pred_fallthru
      _
    %p3918 = scmp.le.s32.totalorder 2, %s15
    // Predicated region
    $region61: #{r_efem_forward.1} parent=5 // pred_check
      %p3919 = pneg %p3918
    $region62: #{r_efem_forward.1} parent=5 // pred_check_branch
      %3921 = sbr.rel (%p3919) target = $region64
    $region63: #{r_efem_forward.1} parent=5 // pred_region
      %s3922 = ssub.s32 %s15, 2
      // Predicated region
      $region65: #{r_efem_forward.1} parent=63 // pred_check
        %p3923 = pneg %p238
      $region66: #{r_efem_forward.1} parent=63 // pred_check_branch
        %3925 = sbr.rel (%p3923) target = $region68
      $region67: #{r_efem_forward.1} parent=63 // pred_region
        %p3926 = scmp.lt.s32.totalorder %s21, 1
        %s3927 = scalar_select %p3926, %s21, 1
        %s3928 = smul.addr %s3927, 4
        %s3929 = smul.addr %s3928, 8
        %s3930 = scalar_lea.vmem %s9, %s3929
      $region68: #{r_efem_forward.1} parent=63 // pred_fallthru
        _
    $region64: #{r_efem_forward.1} parent=5 // pred_fallthru
      _
  $region6: #{r_efem_forward.1} parent=0 // loop_footer
    %s19 = sadd.s32 1, %s15
  $region7: #{r_efem_forward.1} parent=0 // loop_footer_branch
    %14 = sbr.rel target = $region3
  $region8: #{r_efem_forward.1} parent=0 // loop_exit
    _

</llo_original>
